<compile_context>
chip_gen: v7x
topology: tpu7x:2x2x1
jax: 0.10.0
libtpu: 0.0.40
codegen_flags: <defaults>
</compile_context>

<pallas_src>
import functools

import jax
import jax.numpy as jnp
from jax.experimental import pallas as pl
from jax.experimental.pallas import tpu as pltpu


# ----------------------------------------------------------------------------
# Fused Pallas kernel: encoder stack + decoder stack, everything VMEM-resident.
# ----------------------------------------------------------------------------
def _fused_rvc_kernel(x_ref, h0_ref, c0_ref, wih_ref, whh_ref, b_ref,
                      y_ref, hT_ref, cT_ref, y_scr,
                      *, T, B, H, num_layers):
    """Fused RVCModel forward.

    x_ref   : (T*B, D)     time-major flattened input mel sequence
    h0/c0   : (L, B, H)    encoder initial hidden / cell state
    wih_ref : (2L, D, 4H)  stacked W_ih^T  [enc L0..L{n-1}, dec L0..L{n-1}]
    whh_ref : (2L, H, 4H)  stacked W_hh^T
    b_ref   : (2L, 1, 4H)  stacked (b_ih + b_hh)
    y_ref   : (T*B, H)     decoder output (time-major flattened)
    hT/cT   : (L, B, H)    encoder final state (= `hidden` returned by forward)
    y_scr   : (T*B, H)     VMEM staging slab for intermediate layer outputs
    """

    def run_layer(k, x_seq, h, c, out_ref):
        # Hoisted input projection: ONE (T*B, D) @ (D, 4H) matmul per layer,
        # bias added once (not once per timestep).
        gates_x = (jnp.dot(x_seq, wih_ref[k],
                           preferred_element_type=jnp.float32) + b_ref[k])
        whh = whh_ref[k]
        # Serial recurrence over T (static unroll; T is small). Only the
        # h @ W_hh^T matmul + gate nonlinearities are on the serial path.
        for t in range(T):
            g = gates_x[t * B:(t + 1) * B, :] + jnp.dot(
                h, whh, preferred_element_type=jnp.float32)
            # PyTorch gate order: input, forget, cell (g), output.
            i_g = jax.nn.sigmoid(g[:, 0 * H:1 * H])
            f_g = jax.nn.sigmoid(g[:, 1 * H:2 * H])
            g_g = jnp.tanh(g[:, 2 * H:3 * H])
            o_g = jax.nn.sigmoid(g[:, 3 * H:4 * H])
            c = f_g * c + i_g * g_g
            h = o_g * jnp.tanh(c)
            out_ref[t * B:(t + 1) * B, :] = h      # stage into VMEM slab
        return h, c

    seq = x_ref[...]                               # (T*B, D)

    # --- encoder stack ---
    enc_h, enc_c = [], []
    for l in range(num_layers):
        h_f, c_f = run_layer(l, seq, h0_ref[l], c0_ref[l], y_scr)
        enc_h.append(h_f)
        enc_c.append(c_f)
        seq = y_scr[...]                           # layer output -> next input

    # --- decoder stack: initial state = encoder final hidden (PyTorch forward) ---
    for l in range(num_layers):
        k = num_layers + l
        last = (l == num_layers - 1)
        run_layer(k, seq, enc_h[l], enc_c[l], y_ref if last else y_scr)
        if not last:
            seq = y_scr[...]

    # Emit encoder final (h, c) stacks.
    for l in range(num_layers):
        hT_ref[l] = enc_h[l]
        cT_ref[l] = enc_c[l]


# ----------------------------------------------------------------------------
# Wrapper: one pallas_call for the full forward.
# ----------------------------------------------------------------------------
@jax.jit
def rvc_forward(mel_spec, h0, c0, wih_all, whh_all, bias_all):
    """mel_spec: (B, T, n_mels) batch-first; h0/c0: (L, B, hidden).

    Returns (mel_output (B, T, n_mels), (h_T, c_T)) like RVCModel.forward.
    """
    B, T, D = mel_spec.shape
    L, _, H = h0.shape

    # Single time-major transpose + flatten for the whole fused model.
    x_flat = jnp.transpose(mel_spec, (1, 0, 2)).reshape(T * B, D)

    kernel = functools.partial(_fused_rvc_kernel, T=T, B=B, H=H, num_layers=L)

    def vmem_spec():
        return pl.BlockSpec(memory_space=pltpu.MemorySpace.VMEM)

    y_flat, h_T, c_T = pl.pallas_call(
        kernel,
        out_shape=(jax.ShapeDtypeStruct((T * B, H), jnp.float32),
                   jax.ShapeDtypeStruct((L, B, H), jnp.float32),
                   jax.ShapeDtypeStruct((L, B, H), jnp.float32)),
        in_specs=[vmem_spec() for _ in range(6)],
        out_specs=(vmem_spec(), vmem_spec(), vmem_spec()),
        scratch_shapes=[pltpu.VMEM((T * B, H), jnp.float32)],
    )(x_flat, h0, c0, wih_all, whh_all, bias_all)

    mel_out = jnp.transpose(y_flat.reshape(T, B, H), (1, 0, 2))
    return mel_out, (h_T, c_T)


# ----------------------------------------------------------------------------
# Parameter init (synthetic, nn.LSTM layout but transposed for x @ W^T).
# ----------------------------------------------------------------------------
def init_lstm_params(key, input_size, hidden_size, num_layers):
    params = []
    scale = 1.0 / jnp.sqrt(jnp.float32(hidden_size))
    for layer in range(num_layers):
        d_in = input_size if layer == 0 else hidden_size
        key, k1, k2, k3, k4 = jax.random.split(key, 5)
        wih_t = jax.random.uniform(k1, (d_in, 4 * hidden_size),
                                   jnp.float32, -scale, scale)
        whh_t = jax.random.uniform(k2, (hidden_size, 4 * hidden_size),
                                   jnp.float32, -scale, scale)
        b_ih = jax.random.uniform(k3, (4 * hidden_size,),
                                  jnp.float32, -scale, scale)
        b_hh = jax.random.uniform(k4, (4 * hidden_size,),
                                  jnp.float32, -scale, scale)
        bias = (b_ih + b_hh).reshape(1, 4 * hidden_size)
        params.append((wih_t, whh_t, bias))
    return params, key


# ----------------------------------------------------------------------------
# Pure-JAX reference for correctness checking.
# ----------------------------------------------------------------------------
def _ref_lstm_layer(x, h0, c0, wih_t, whh_t, bias):
    B, T, D = x.shape
    H = h0.shape[-1]
    h, c = h0, c0
    ys = []
    for t in range(T):
        gates = x[:, t, :] @ wih_t + h @ whh_t + bias
        i_g = jax.nn.sigmoid(gates[:, 0 * H:1 * H])
        f_g = jax.nn.sigmoid(gates[:, 1 * H:2 * H])
        g_g = jnp.tanh(gates[:, 2 * H:3 * H])
        o_g = jax.nn.sigmoid(gates[:, 3 * H:4 * H])
        c = f_g * c + i_g * g_g
        h = o_g * jnp.tanh(c)
        ys.append(h)
    return jnp.stack(ys, axis=1), h, c


def _ref_forward(mel_spec, h0, c0, enc_params, dec_params):
    out = mel_spec
    hs, cs = [], []
    for layer, p in enumerate(enc_params):
        out, h, c = _ref_lstm_layer(out, h0[layer], c0[layer], *p)
        hs.append(h)
        cs.append(c)
    hid = (jnp.stack(hs, 0), jnp.stack(cs, 0))
    dec = out
    for layer, p in enumerate(dec_params):
        dec, _, _ = _ref_lstm_layer(dec, hid[0][layer], hid[1][layer], *p)
    return dec, hid


if __name__ == "__main__":
    # hidden_size == n_mels is required by the original forward's hidden handoff.
    config = {
        "model": {"hidden_size": 16, "embedding_size": 32, "num_layers": 2},
        "data": {"n_mels": 16},
    }
    hidden_size = config["model"]["hidden_size"]
    num_layers = config["model"]["num_layers"]
    n_mels = config["data"]["n_mels"]
    assert hidden_size == n_mels
    batch, seq_len = 2, 8

    key = jax.random.PRNGKey(0)
    enc_params, key = init_lstm_params(key, n_mels, hidden_size, num_layers)
    dec_params, key = init_lstm_params(key, hidden_size, n_mels, num_layers)

    # Stack all layer weights [enc..., dec...] so one pallas_call sees them all.
    wih_all = jnp.stack([p[0] for p in enc_params + dec_params], axis=0)
    whh_all = jnp.stack([p[1] for p in enc_params + dec_params], axis=0)
    bias_all = jnp.stack([p[2] for p in enc_params + dec_params], axis=0)

    key, kx = jax.random.split(key)
    mel_spec = jax.random.normal(kx, (batch, seq_len, n_mels), jnp.float32)
    # init_hidden: zeros of shape (num_layers, batch, hidden_size)
    h0 = jnp.zeros((num_layers, batch, hidden_size), jnp.float32)
    c0 = jnp.zeros((num_layers, batch, hidden_size), jnp.float32)

    mel_out, (h_out, c_out) = rvc_forward(mel_spec, h0, c0,
                                          wih_all, whh_all, bias_all)
    jax.block_until_ready((mel_out, h_out, c_out))

    # Sanity-check against the pure-JAX reference.
    ref_out, (ref_h, ref_c) = _ref_forward(mel_spec, h0, c0,
                                           enc_params, dec_params)
    assert mel_out.shape == (batch, seq_len, n_mels)
    assert h_out.shape == (num_layers, batch, hidden_size)
    assert c_out.shape == (num_layers, batch, hidden_size)
    assert jnp.allclose(mel_out, ref_out, rtol=5e-3, atol=5e-3)
    assert jnp.allclose(h_out, ref_h, rtol=5e-3, atol=5e-3)
    assert jnp.allclose(c_out, ref_c, rtol=5e-3, atol=5e-3)

    print("KERNEL_OK")
</pallas_src>

<mosaic_0001>
module attributes {stable_mosaic.version = 11 : i64} {
  func.func @_fused_rvc_kernel(%arg0: memref<16x16xf32, #tpu.memory_space<vmem>>, %arg1: memref<2x2x16xf32, #tpu.memory_space<vmem>>, %arg2: memref<2x2x16xf32, #tpu.memory_space<vmem>>, %arg3: memref<4x16x64xf32, #tpu.memory_space<vmem>>, %arg4: memref<4x16x64xf32, #tpu.memory_space<vmem>>, %arg5: memref<4x1x64xf32, #tpu.memory_space<vmem>>, %arg6: memref<16x16xf32, #tpu.memory_space<vmem>>, %arg7: memref<2x2x16xf32, #tpu.memory_space<vmem>>, %arg8: memref<2x2x16xf32, #tpu.memory_space<vmem>>, %arg9: memref<16x16xf32, #tpu.memory_space<vmem>>) attributes {dimension_semantics = [], scalar_prefetch = 0 : i64, scratch_operands = 1 : i64, tpu.core_type = #tpu.core_type<tc>} {
    %c0 = arith.constant 0 : index
    %c0_0 = arith.constant 0 : index
    %0 = vector.load %arg0[%c0, %c0_0] : memref<16x16xf32, #tpu.memory_space<vmem>>, vector<16x16xf32>
    %c0_1 = arith.constant 0 : index
    %c0_2 = arith.constant 0 : index
    %c0_3 = arith.constant 0 : index
    %1 = vector.load %arg1[%c0_1, %c0_2, %c0_3] : memref<2x2x16xf32, #tpu.memory_space<vmem>>, vector<1x2x16xf32>
    %2 = vector.shape_cast %1 : vector<1x2x16xf32> to vector<2x16xf32>
    %c0_4 = arith.constant 0 : index
    %c0_5 = arith.constant 0 : index
    %c0_6 = arith.constant 0 : index
    %3 = vector.load %arg2[%c0_4, %c0_5, %c0_6] : memref<2x2x16xf32, #tpu.memory_space<vmem>>, vector<1x2x16xf32>
    %4 = vector.shape_cast %3 : vector<1x2x16xf32> to vector<2x16xf32>
    %c0_7 = arith.constant 0 : index
    %c0_8 = arith.constant 0 : index
    %c0_9 = arith.constant 0 : index
    %5 = vector.load %arg3[%c0_7, %c0_8, %c0_9] : memref<4x16x64xf32, #tpu.memory_space<vmem>>, vector<1x16x64xf32>
    %6 = vector.shape_cast %5 : vector<1x16x64xf32> to vector<16x64xf32>
    %cst = arith.constant dense<0.000000e+00> : vector<16x64xf32>
    %7 = tpu.matmul %0, %6, %cst {dimension_numbers = #tpu.dot_dimension_numbers<[1], [0], [0], [1], [0, 0, 1, 1], [], []>} : vector<16x16xf32>, vector<16x64xf32>, vector<16x64xf32> -> vector<16x64xf32>
    %c0_10 = arith.constant 0 : index
    %c0_11 = arith.constant 0 : index
    %c0_12 = arith.constant 0 : index
    %8 = vector.load %arg5[%c0_10, %c0_11, %c0_12] : memref<4x1x64xf32, #tpu.memory_space<vmem>>, vector<1x1x64xf32>
    %9 = vector.shape_cast %8 : vector<1x1x64xf32> to vector<1x64xf32>
    %10 = vector.broadcast %9 : vector<1x64xf32> to vector<16x64xf32>
    %11 = arith.addf %7, %10 : vector<16x64xf32>
    %c0_13 = arith.constant 0 : index
    %c0_14 = arith.constant 0 : index
    %c0_15 = arith.constant 0 : index
    %12 = vector.load %arg4[%c0_13, %c0_14, %c0_15] : memref<4x16x64xf32, #tpu.memory_space<vmem>>, vector<1x16x64xf32>
    %13 = vector.shape_cast %12 : vector<1x16x64xf32> to vector<16x64xf32>
    %14 = vector.extract_strided_slice %11 {offsets = [0, 0], sizes = [2, 64], strides = [1, 1]} : vector<16x64xf32> to vector<2x64xf32>
    %cst_16 = arith.constant dense<0.000000e+00> : vector<2x64xf32>
    %15 = tpu.matmul %2, %13, %cst_16 {dimension_numbers = #tpu.dot_dimension_numbers<[1], [0], [0], [1], [0, 0, 1, 1], [], []>} : vector<2x16xf32>, vector<16x64xf32>, vector<2x64xf32> -> vector<2x64xf32>
    %16 = arith.addf %14, %15 : vector<2x64xf32>
    %17 = vector.extract_strided_slice %16 {offsets = [0, 0], sizes = [2, 16], strides = [1, 1]} : vector<2x64xf32> to vector<2x16xf32>
    %18 = arith.negf %17 : vector<2x16xf32>
    %19 = math.exp %18 : vector<2x16xf32>
    %cst_17 = arith.constant 1.000000e+00 : f32
    %20 = vector.broadcast %cst_17 : f32 to vector<2x16xf32>
    %21 = arith.addf %20, %19 : vector<2x16xf32>
    %22 = arith.divf %20, %21 : vector<2x16xf32>
    %23 = vector.extract_strided_slice %16 {offsets = [0, 16], sizes = [2, 16], strides = [1, 1]} : vector<2x64xf32> to vector<2x16xf32>
    %24 = arith.negf %23 : vector<2x16xf32>
    %25 = math.exp %24 : vector<2x16xf32>
    %cst_18 = arith.constant 1.000000e+00 : f32
    %26 = vector.broadcast %cst_18 : f32 to vector<2x16xf32>
    %27 = arith.addf %26, %25 : vector<2x16xf32>
    %28 = arith.divf %26, %27 : vector<2x16xf32>
    %29 = vector.extract_strided_slice %16 {offsets = [0, 32], sizes = [2, 16], strides = [1, 1]} : vector<2x64xf32> to vector<2x16xf32>
    %30 = math.tanh %29 : vector<2x16xf32>
    %31 = vector.extract_strided_slice %16 {offsets = [0, 48], sizes = [2, 16], strides = [1, 1]} : vector<2x64xf32> to vector<2x16xf32>
    %32 = arith.negf %31 : vector<2x16xf32>
    %33 = math.exp %32 : vector<2x16xf32>
    %cst_19 = arith.constant 1.000000e+00 : f32
    %34 = vector.broadcast %cst_19 : f32 to vector<2x16xf32>
    %35 = arith.addf %34, %33 : vector<2x16xf32>
    %36 = arith.divf %34, %35 : vector<2x16xf32>
    %37 = arith.mulf %28, %4 : vector<2x16xf32>
    %38 = arith.mulf %22, %30 : vector<2x16xf32>
    %39 = arith.addf %37, %38 : vector<2x16xf32>
    %40 = math.tanh %39 : vector<2x16xf32>
    %41 = arith.mulf %36, %40 : vector<2x16xf32>
    %c0_20 = arith.constant 0 : index
    %c0_21 = arith.constant 0 : index
    %42 = vector.load %arg9[%c0_20, %c0_21] : memref<16x16xf32, #tpu.memory_space<vmem>>, vector<2x16xf32>
    tpu.vector_store %arg9[%c0_20, %c0_21], %41 {strides = array<i32>} : memref<16x16xf32, #tpu.memory_space<vmem>>, vector<2x16xf32>,
    %43 = vector.extract_strided_slice %11 {offsets = [2, 0], sizes = [2, 64], strides = [1, 1]} : vector<16x64xf32> to vector<2x64xf32>
    %cst_22 = arith.constant dense<0.000000e+00> : vector<2x64xf32>
    %44 = tpu.matmul %41, %13, %cst_22 {dimension_numbers = #tpu.dot_dimension_numbers<[1], [0], [0], [1], [0, 0, 1, 1], [], []>} : vector<2x16xf32>, vector<16x64xf32>, vector<2x64xf32> -> vector<2x64xf32>
    %45 = arith.addf %43, %44 : vector<2x64xf32>
    %46 = vector.extract_strided_slice %45 {offsets = [0, 0], sizes = [2, 16], strides = [1, 1]} : vector<2x64xf32> to vector<2x16xf32>
    %47 = arith.negf %46 : vector<2x16xf32>
    %48 = math.exp %47 : vector<2x16xf32>
    %cst_23 = arith.constant 1.000000e+00 : f32
    %49 = vector.broadcast %cst_23 : f32 to vector<2x16xf32>
    %50 = arith.addf %49, %48 : vector<2x16xf32>
    %51 = arith.divf %49, %50 : vector<2x16xf32>
    %52 = vector.extract_strided_slice %45 {offsets = [0, 16], sizes = [2, 16], strides = [1, 1]} : vector<2x64xf32> to vector<2x16xf32>
    %53 = arith.negf %52 : vector<2x16xf32>
    %54 = math.exp %53 : vector<2x16xf32>
    %cst_24 = arith.constant 1.000000e+00 : f32
    %55 = vector.broadcast %cst_24 : f32 to vector<2x16xf32>
    %56 = arith.addf %55, %54 : vector<2x16xf32>
    %57 = arith.divf %55, %56 : vector<2x16xf32>
    %58 = vector.extract_strided_slice %45 {offsets = [0, 32], sizes = [2, 16], strides = [1, 1]} : vector<2x64xf32> to vector<2x16xf32>
    %59 = math.tanh %58 : vector<2x16xf32>
    %60 = vector.extract_strided_slice %45 {offsets = [0, 48], sizes = [2, 16], strides = [1, 1]} : vector<2x64xf32> to vector<2x16xf32>
    %61 = arith.negf %60 : vector<2x16xf32>
    %62 = math.exp %61 : vector<2x16xf32>
    %cst_25 = arith.constant 1.000000e+00 : f32
    %63 = vector.broadcast %cst_25 : f32 to vector<2x16xf32>
    %64 = arith.addf %63, %62 : vector<2x16xf32>
    %65 = arith.divf %63, %64 : vector<2x16xf32>
    %66 = arith.mulf %57, %39 : vector<2x16xf32>
    %67 = arith.mulf %51, %59 : vector<2x16xf32>
    %68 = arith.addf %66, %67 : vector<2x16xf32>
    %69 = math.tanh %68 : vector<2x16xf32>
    %70 = arith.mulf %65, %69 : vector<2x16xf32>
    %c2 = arith.constant 2 : index
    %c0_26 = arith.constant 0 : index
    %71 = vector.load %arg9[%c2, %c0_26] : memref<16x16xf32, #tpu.memory_space<vmem>>, vector<2x16xf32>
    tpu.vector_store %arg9[%c2, %c0_26], %70 {strides = array<i32>} : memref<16x16xf32, #tpu.memory_space<vmem>>, vector<2x16xf32>,
    %72 = vector.extract_strided_slice %11 {offsets = [4, 0], sizes = [2, 64], strides = [1, 1]} : vector<16x64xf32> to vector<2x64xf32>
    %cst_27 = arith.constant dense<0.000000e+00> : vector<2x64xf32>
    %73 = tpu.matmul %70, %13, %cst_27 {dimension_numbers = #tpu.dot_dimension_numbers<[1], [0], [0], [1], [0, 0, 1, 1], [], []>} : vector<2x16xf32>, vector<16x64xf32>, vector<2x64xf32> -> vector<2x64xf32>
    %74 = arith.addf %72, %73 : vector<2x64xf32>
    %75 = vector.extract_strided_slice %74 {offsets = [0, 0], sizes = [2, 16], strides = [1, 1]} : vector<2x64xf32> to vector<2x16xf32>
    %76 = arith.negf %75 : vector<2x16xf32>
    %77 = math.exp %76 : vector<2x16xf32>
    %cst_28 = arith.constant 1.000000e+00 : f32
    %78 = vector.broadcast %cst_28 : f32 to vector<2x16xf32>
    %79 = arith.addf %78, %77 : vector<2x16xf32>
    %80 = arith.divf %78, %79 : vector<2x16xf32>
    %81 = vector.extract_strided_slice %74 {offsets = [0, 16], sizes = [2, 16], strides = [1, 1]} : vector<2x64xf32> to vector<2x16xf32>
    %82 = arith.negf %81 : vector<2x16xf32>
    %83 = math.exp %82 : vector<2x16xf32>
    %cst_29 = arith.constant 1.000000e+00 : f32
    %84 = vector.broadcast %cst_29 : f32 to vector<2x16xf32>
    %85 = arith.addf %84, %83 : vector<2x16xf32>
    %86 = arith.divf %84, %85 : vector<2x16xf32>
    %87 = vector.extract_strided_slice %74 {offsets = [0, 32], sizes = [2, 16], strides = [1, 1]} : vector<2x64xf32> to vector<2x16xf32>
    %88 = math.tanh %87 : vector<2x16xf32>
    %89 = vector.extract_strided_slice %74 {offsets = [0, 48], sizes = [2, 16], strides = [1, 1]} : vector<2x64xf32> to vector<2x16xf32>
    %90 = arith.negf %89 : vector<2x16xf32>
    %91 = math.exp %90 : vector<2x16xf32>
    %cst_30 = arith.constant 1.000000e+00 : f32
    %92 = vector.broadcast %cst_30 : f32 to vector<2x16xf32>
    %93 = arith.addf %92, %91 : vector<2x16xf32>
    %94 = arith.divf %92, %93 : vector<2x16xf32>
    %95 = arith.mulf %86, %68 : vector<2x16xf32>
    %96 = arith.mulf %80, %88 : vector<2x16xf32>
    %97 = arith.addf %95, %96 : vector<2x16xf32>
    %98 = math.tanh %97 : vector<2x16xf32>
    %99 = arith.mulf %94, %98 : vector<2x16xf32>
    %c4 = arith.constant 4 : index
    %c0_31 = arith.constant 0 : index
    %100 = vector.load %arg9[%c4, %c0_31] : memref<16x16xf32, #tpu.memory_space<vmem>>, vector<2x16xf32>
    tpu.vector_store %arg9[%c4, %c0_31], %99 {strides = array<i32>} : memref<16x16xf32, #tpu.memory_space<vmem>>, vector<2x16xf32>,
    %101 = vector.extract_strided_slice %11 {offsets = [6, 0], sizes = [2, 64], strides = [1, 1]} : vector<16x64xf32> to vector<2x64xf32>
    %cst_32 = arith.constant dense<0.000000e+00> : vector<2x64xf32>
    %102 = tpu.matmul %99, %13, %cst_32 {dimension_numbers = #tpu.dot_dimension_numbers<[1], [0], [0], [1], [0, 0, 1, 1], [], []>} : vector<2x16xf32>, vector<16x64xf32>, vector<2x64xf32> -> vector<2x64xf32>
    %103 = arith.addf %101, %102 : vector<2x64xf32>
    %104 = vector.extract_strided_slice %103 {offsets = [0, 0], sizes = [2, 16], strides = [1, 1]} : vector<2x64xf32> to vector<2x16xf32>
    %105 = arith.negf %104 : vector<2x16xf32>
    %106 = math.exp %105 : vector<2x16xf32>
    %cst_33 = arith.constant 1.000000e+00 : f32
    %107 = vector.broadcast %cst_33 : f32 to vector<2x16xf32>
    %108 = arith.addf %107, %106 : vector<2x16xf32>
    %109 = arith.divf %107, %108 : vector<2x16xf32>
    %110 = vector.extract_strided_slice %103 {offsets = [0, 16], sizes = [2, 16], strides = [1, 1]} : vector<2x64xf32> to vector<2x16xf32>
    %111 = arith.negf %110 : vector<2x16xf32>
    %112 = math.exp %111 : vector<2x16xf32>
    %cst_34 = arith.constant 1.000000e+00 : f32
    %113 = vector.broadcast %cst_34 : f32 to vector<2x16xf32>
    %114 = arith.addf %113, %112 : vector<2x16xf32>
    %115 = arith.divf %113, %114 : vector<2x16xf32>
    %116 = vector.extract_strided_slice %103 {offsets = [0, 32], sizes = [2, 16], strides = [1, 1]} : vector<2x64xf32> to vector<2x16xf32>
    %117 = math.tanh %116 : vector<2x16xf32>
    %118 = vector.extract_strided_slice %103 {offsets = [0, 48], sizes = [2, 16], strides = [1, 1]} : vector<2x64xf32> to vector<2x16xf32>
    %119 = arith.negf %118 : vector<2x16xf32>
    %120 = math.exp %119 : vector<2x16xf32>
    %cst_35 = arith.constant 1.000000e+00 : f32
    %121 = vector.broadcast %cst_35 : f32 to vector<2x16xf32>
    %122 = arith.addf %121, %120 : vector<2x16xf32>
    %123 = arith.divf %121, %122 : vector<2x16xf32>
    %124 = arith.mulf %115, %97 : vector<2x16xf32>
    %125 = arith.mulf %109, %117 : vector<2x16xf32>
    %126 = arith.addf %124, %125 : vector<2x16xf32>
    %127 = math.tanh %126 : vector<2x16xf32>
    %128 = arith.mulf %123, %127 : vector<2x16xf32>
    %c6 = arith.constant 6 : index
    %c0_36 = arith.constant 0 : index
    %129 = vector.load %arg9[%c6, %c0_36] : memref<16x16xf32, #tpu.memory_space<vmem>>, vector<2x16xf32>
    tpu.vector_store %arg9[%c6, %c0_36], %128 {strides = array<i32>} : memref<16x16xf32, #tpu.memory_space<vmem>>, vector<2x16xf32>,
    %130 = vector.extract_strided_slice %11 {offsets = [8, 0], sizes = [2, 64], strides = [1, 1]} : vector<16x64xf32> to vector<2x64xf32>
    %cst_37 = arith.constant dense<0.000000e+00> : vector<2x64xf32>
    %131 = tpu.matmul %128, %13, %cst_37 {dimension_numbers = #tpu.dot_dimension_numbers<[1], [0], [0], [1], [0, 0, 1, 1], [], []>} : vector<2x16xf32>, vector<16x64xf32>, vector<2x64xf32> -> vector<2x64xf32>
    %132 = arith.addf %130, %131 : vector<2x64xf32>
    %133 = vector.extract_strided_slice %132 {offsets = [0, 0], sizes = [2, 16], strides = [1, 1]} : vector<2x64xf32> to vector<2x16xf32>
    %134 = arith.negf %133 : vector<2x16xf32>
    %135 = math.exp %134 : vector<2x16xf32>
    %cst_38 = arith.constant 1.000000e+00 : f32
    %136 = vector.broadcast %cst_38 : f32 to vector<2x16xf32>
    %137 = arith.addf %136, %135 : vector<2x16xf32>
    %138 = arith.divf %136, %137 : vector<2x16xf32>
    %139 = vector.extract_strided_slice %132 {offsets = [0, 16], sizes = [2, 16], strides = [1, 1]} : vector<2x64xf32> to vector<2x16xf32>
    %140 = arith.negf %139 : vector<2x16xf32>
    %141 = math.exp %140 : vector<2x16xf32>
    %cst_39 = arith.constant 1.000000e+00 : f32
    %142 = vector.broadcast %cst_39 : f32 to vector<2x16xf32>
    %143 = arith.addf %142, %141 : vector<2x16xf32>
    %144 = arith.divf %142, %143 : vector<2x16xf32>
    %145 = vector.extract_strided_slice %132 {offsets = [0, 32], sizes = [2, 16], strides = [1, 1]} : vector<2x64xf32> to vector<2x16xf32>
    %146 = math.tanh %145 : vector<2x16xf32>
    %147 = vector.extract_strided_slice %132 {offsets = [0, 48], sizes = [2, 16], strides = [1, 1]} : vector<2x64xf32> to vector<2x16xf32>
    %148 = arith.negf %147 : vector<2x16xf32>
    %149 = math.exp %148 : vector<2x16xf32>
    %cst_40 = arith.constant 1.000000e+00 : f32
    %150 = vector.broadcast %cst_40 : f32 to vector<2x16xf32>
    %151 = arith.addf %150, %149 : vector<2x16xf32>
    %152 = arith.divf %150, %151 : vector<2x16xf32>
    %153 = arith.mulf %144, %126 : vector<2x16xf32>
    %154 = arith.mulf %138, %146 : vector<2x16xf32>
    %155 = arith.addf %153, %154 : vector<2x16xf32>
    %156 = math.tanh %155 : vector<2x16xf32>
    %157 = arith.mulf %152, %156 : vector<2x16xf32>
    %c8 = arith.constant 8 : index
    %c0_41 = arith.constant 0 : index
    %158 = vector.load %arg9[%c8, %c0_41] : memref<16x16xf32, #tpu.memory_space<vmem>>, vector<2x16xf32>
    tpu.vector_store %arg9[%c8, %c0_41], %157 {strides = array<i32>} : memref<16x16xf32, #tpu.memory_space<vmem>>, vector<2x16xf32>,
    %159 = vector.extract_strided_slice %11 {offsets = [10, 0], sizes = [2, 64], strides = [1, 1]} : vector<16x64xf32> to vector<2x64xf32>
    %cst_42 = arith.constant dense<0.000000e+00> : vector<2x64xf32>
    %160 = tpu.matmul %157, %13, %cst_42 {dimension_numbers = #tpu.dot_dimension_numbers<[1], [0], [0], [1], [0, 0, 1, 1], [], []>} : vector<2x16xf32>, vector<16x64xf32>, vector<2x64xf32> -> vector<2x64xf32>
    %161 = arith.addf %159, %160 : vector<2x64xf32>
    %162 = vector.extract_strided_slice %161 {offsets = [0, 0], sizes = [2, 16], strides = [1, 1]} : vector<2x64xf32> to vector<2x16xf32>
    %163 = arith.negf %162 : vector<2x16xf32>
    %164 = math.exp %163 : vector<2x16xf32>
    %cst_43 = arith.constant 1.000000e+00 : f32
    %165 = vector.broadcast %cst_43 : f32 to vector<2x16xf32>
    %166 = arith.addf %165, %164 : vector<2x16xf32>
    %167 = arith.divf %165, %166 : vector<2x16xf32>
    %168 = vector.extract_strided_slice %161 {offsets = [0, 16], sizes = [2, 16], strides = [1, 1]} : vector<2x64xf32> to vector<2x16xf32>
    %169 = arith.negf %168 : vector<2x16xf32>
    %170 = math.exp %169 : vector<2x16xf32>
    %cst_44 = arith.constant 1.000000e+00 : f32
    %171 = vector.broadcast %cst_44 : f32 to vector<2x16xf32>
    %172 = arith.addf %171, %170 : vector<2x16xf32>
    %173 = arith.divf %171, %172 : vector<2x16xf32>
    %174 = vector.extract_strided_slice %161 {offsets = [0, 32], sizes = [2, 16], strides = [1, 1]} : vector<2x64xf32> to vector<2x16xf32>
    %175 = math.tanh %174 : vector<2x16xf32>
    %176 = vector.extract_strided_slice %161 {offsets = [0, 48], sizes = [2, 16], strides = [1, 1]} : vector<2x64xf32> to vector<2x16xf32>
    %177 = arith.negf %176 : vector<2x16xf32>
    %178 = math.exp %177 : vector<2x16xf32>
    %cst_45 = arith.constant 1.000000e+00 : f32
    %179 = vector.broadcast %cst_45 : f32 to vector<2x16xf32>
    %180 = arith.addf %179, %178 : vector<2x16xf32>
    %181 = arith.divf %179, %180 : vector<2x16xf32>
    %182 = arith.mulf %173, %155 : vector<2x16xf32>
    %183 = arith.mulf %167, %175 : vector<2x16xf32>
    %184 = arith.addf %182, %183 : vector<2x16xf32>
    %185 = math.tanh %184 : vector<2x16xf32>
    %186 = arith.mulf %181, %185 : vector<2x16xf32>
    %c10 = arith.constant 10 : index
    %c0_46 = arith.constant 0 : index
    %187 = vector.load %arg9[%c10, %c0_46] : memref<16x16xf32, #tpu.memory_space<vmem>>, vector<2x16xf32>
    tpu.vector_store %arg9[%c10, %c0_46], %186 {strides = array<i32>} : memref<16x16xf32, #tpu.memory_space<vmem>>, vector<2x16xf32>,
    %188 = vector.extract_strided_slice %11 {offsets = [12, 0], sizes = [2, 64], strides = [1, 1]} : vector<16x64xf32> to vector<2x64xf32>
    %cst_47 = arith.constant dense<0.000000e+00> : vector<2x64xf32>
    %189 = tpu.matmul %186, %13, %cst_47 {dimension_numbers = #tpu.dot_dimension_numbers<[1], [0], [0], [1], [0, 0, 1, 1], [], []>} : vector<2x16xf32>, vector<16x64xf32>, vector<2x64xf32> -> vector<2x64xf32>
    %190 = arith.addf %188, %189 : vector<2x64xf32>
    %191 = vector.extract_strided_slice %190 {offsets = [0, 0], sizes = [2, 16], strides = [1, 1]} : vector<2x64xf32> to vector<2x16xf32>
    %192 = arith.negf %191 : vector<2x16xf32>
    %193 = math.exp %192 : vector<2x16xf32>
    %cst_48 = arith.constant 1.000000e+00 : f32
    %194 = vector.broadcast %cst_48 : f32 to vector<2x16xf32>
    %195 = arith.addf %194, %193 : vector<2x16xf32>
    %196 = arith.divf %194, %195 : vector<2x16xf32>
    %197 = vector.extract_strided_slice %190 {offsets = [0, 16], sizes = [2, 16], strides = [1, 1]} : vector<2x64xf32> to vector<2x16xf32>
    %198 = arith.negf %197 : vector<2x16xf32>
    %199 = math.exp %198 : vector<2x16xf32>
    %cst_49 = arith.constant 1.000000e+00 : f32
    %200 = vector.broadcast %cst_49 : f32 to vector<2x16xf32>
    %201 = arith.addf %200, %199 : vector<2x16xf32>
    %202 = arith.divf %200, %201 : vector<2x16xf32>
    %203 = vector.extract_strided_slice %190 {offsets = [0, 32], sizes = [2, 16], strides = [1, 1]} : vector<2x64xf32> to vector<2x16xf32>
    %204 = math.tanh %203 : vector<2x16xf32>
    %205 = vector.extract_strided_slice %190 {offsets = [0, 48], sizes = [2, 16], strides = [1, 1]} : vector<2x64xf32> to vector<2x16xf32>
    %206 = arith.negf %205 : vector<2x16xf32>
    %207 = math.exp %206 : vector<2x16xf32>
    %cst_50 = arith.constant 1.000000e+00 : f32
    %208 = vector.broadcast %cst_50 : f32 to vector<2x16xf32>
    %209 = arith.addf %208, %207 : vector<2x16xf32>
    %210 = arith.divf %208, %209 : vector<2x16xf32>
    %211 = arith.mulf %202, %184 : vector<2x16xf32>
    %212 = arith.mulf %196, %204 : vector<2x16xf32>
    %213 = arith.addf %211, %212 : vector<2x16xf32>
    %214 = math.tanh %213 : vector<2x16xf32>
    %215 = arith.mulf %210, %214 : vector<2x16xf32>
    %c12 = arith.constant 12 : index
    %c0_51 = arith.constant 0 : index
    %216 = vector.load %arg9[%c12, %c0_51] : memref<16x16xf32, #tpu.memory_space<vmem>>, vector<2x16xf32>
    tpu.vector_store %arg9[%c12, %c0_51], %215 {strides = array<i32>} : memref<16x16xf32, #tpu.memory_space<vmem>>, vector<2x16xf32>,
    %217 = vector.extract_strided_slice %11 {offsets = [14, 0], sizes = [2, 64], strides = [1, 1]} : vector<16x64xf32> to vector<2x64xf32>
    %cst_52 = arith.constant dense<0.000000e+00> : vector<2x64xf32>
    %218 = tpu.matmul %215, %13, %cst_52 {dimension_numbers = #tpu.dot_dimension_numbers<[1], [0], [0], [1], [0, 0, 1, 1], [], []>} : vector<2x16xf32>, vector<16x64xf32>, vector<2x64xf32> -> vector<2x64xf32>
    %219 = arith.addf %217, %218 : vector<2x64xf32>
    %220 = vector.extract_strided_slice %219 {offsets = [0, 0], sizes = [2, 16], strides = [1, 1]} : vector<2x64xf32> to vector<2x16xf32>
    %221 = arith.negf %220 : vector<2x16xf32>
    %222 = math.exp %221 : vector<2x16xf32>
    %cst_53 = arith.constant 1.000000e+00 : f32
    %223 = vector.broadcast %cst_53 : f32 to vector<2x16xf32>
    %224 = arith.addf %223, %222 : vector<2x16xf32>
    %225 = arith.divf %223, %224 : vector<2x16xf32>
    %226 = vector.extract_strided_slice %219 {offsets = [0, 16], sizes = [2, 16], strides = [1, 1]} : vector<2x64xf32> to vector<2x16xf32>
    %227 = arith.negf %226 : vector<2x16xf32>
    %228 = math.exp %227 : vector<2x16xf32>
    %cst_54 = arith.constant 1.000000e+00 : f32
    %229 = vector.broadcast %cst_54 : f32 to vector<2x16xf32>
    %230 = arith.addf %229, %228 : vector<2x16xf32>
    %231 = arith.divf %229, %230 : vector<2x16xf32>
    %232 = vector.extract_strided_slice %219 {offsets = [0, 32], sizes = [2, 16], strides = [1, 1]} : vector<2x64xf32> to vector<2x16xf32>
    %233 = math.tanh %232 : vector<2x16xf32>
    %234 = vector.extract_strided_slice %219 {offsets = [0, 48], sizes = [2, 16], strides = [1, 1]} : vector<2x64xf32> to vector<2x16xf32>
    %235 = arith.negf %234 : vector<2x16xf32>
    %236 = math.exp %235 : vector<2x16xf32>
    %cst_55 = arith.constant 1.000000e+00 : f32
    %237 = vector.broadcast %cst_55 : f32 to vector<2x16xf32>
    %238 = arith.addf %237, %236 : vector<2x16xf32>
    %239 = arith.divf %237, %238 : vector<2x16xf32>
    %240 = arith.mulf %231, %213 : vector<2x16xf32>
    %241 = arith.mulf %225, %233 : vector<2x16xf32>
    %242 = arith.addf %240, %241 : vector<2x16xf32>
    %243 = math.tanh %242 : vector<2x16xf32>
    %244 = arith.mulf %239, %243 : vector<2x16xf32>
    %c14 = arith.constant 14 : index
    %c0_56 = arith.constant 0 : index
    %245 = vector.load %arg9[%c14, %c0_56] : memref<16x16xf32, #tpu.memory_space<vmem>>, vector<2x16xf32>
    tpu.vector_store %arg9[%c14, %c0_56], %244 {strides = array<i32>} : memref<16x16xf32, #tpu.memory_space<vmem>>, vector<2x16xf32>,
    %c0_57 = arith.constant 0 : index
    %c0_58 = arith.constant 0 : index
    %246 = vector.load %arg9[%c0_57, %c0_58] : memref<16x16xf32, #tpu.memory_space<vmem>>, vector<16x16xf32>
    %c1 = arith.constant 1 : index
    %c0_59 = arith.constant 0 : index
    %c0_60 = arith.constant 0 : index
    %247 = vector.load %arg1[%c1, %c0_59, %c0_60] : memref<2x2x16xf32, #tpu.memory_space<vmem>>, vector<1x2x16xf32>
    %248 = vector.shape_cast %247 : vector<1x2x16xf32> to vector<2x16xf32>
    %c1_61 = arith.constant 1 : index
    %c0_62 = arith.constant 0 : index
    %c0_63 = arith.constant 0 : index
    %249 = vector.load %arg2[%c1_61, %c0_62, %c0_63] : memref<2x2x16xf32, #tpu.memory_space<vmem>>, vector<1x2x16xf32>
    %250 = vector.shape_cast %249 : vector<1x2x16xf32> to vector<2x16xf32>
    %c1_64 = arith.constant 1 : index
    %c0_65 = arith.constant 0 : index
    %c0_66 = arith.constant 0 : index
    %251 = vector.load %arg3[%c1_64, %c0_65, %c0_66] : memref<4x16x64xf32, #tpu.memory_space<vmem>>, vector<1x16x64xf32>
    %252 = vector.shape_cast %251 : vector<1x16x64xf32> to vector<16x64xf32>
    %cst_67 = arith.constant dense<0.000000e+00> : vector<16x64xf32>
    %253 = tpu.matmul %246, %252, %cst_67 {dimension_numbers = #tpu.dot_dimension_numbers<[1], [0], [0], [1], [0, 0, 1, 1], [], []>} : vector<16x16xf32>, vector<16x64xf32>, vector<16x64xf32> -> vector<16x64xf32>
    %c1_68 = arith.constant 1 : index
    %c0_69 = arith.constant 0 : index
    %c0_70 = arith.constant 0 : index
    %254 = vector.load %arg5[%c1_68, %c0_69, %c0_70] : memref<4x1x64xf32, #tpu.memory_space<vmem>>, vector<1x1x64xf32>
    %255 = vector.shape_cast %254 : vector<1x1x64xf32> to vector<1x64xf32>
    %256 = vector.broadcast %255 : vector<1x64xf32> to vector<16x64xf32>
    %257 = arith.addf %253, %256 : vector<16x64xf32>
    %c1_71 = arith.constant 1 : index
    %c0_72 = arith.constant 0 : index
    %c0_73 = arith.constant 0 : index
    %258 = vector.load %arg4[%c1_71, %c0_72, %c0_73] : memref<4x16x64xf32, #tpu.memory_space<vmem>>, vector<1x16x64xf32>
    %259 = vector.shape_cast %258 : vector<1x16x64xf32> to vector<16x64xf32>
    %260 = vector.extract_strided_slice %257 {offsets = [0, 0], sizes = [2, 64], strides = [1, 1]} : vector<16x64xf32> to vector<2x64xf32>
    %cst_74 = arith.constant dense<0.000000e+00> : vector<2x64xf32>
    %261 = tpu.matmul %248, %259, %cst_74 {dimension_numbers = #tpu.dot_dimension_numbers<[1], [0], [0], [1], [0, 0, 1, 1], [], []>} : vector<2x16xf32>, vector<16x64xf32>, vector<2x64xf32> -> vector<2x64xf32>
    %262 = arith.addf %260, %261 : vector<2x64xf32>
    %263 = vector.extract_strided_slice %262 {offsets = [0, 0], sizes = [2, 16], strides = [1, 1]} : vector<2x64xf32> to vector<2x16xf32>
    %264 = arith.negf %263 : vector<2x16xf32>
    %265 = math.exp %264 : vector<2x16xf32>
    %cst_75 = arith.constant 1.000000e+00 : f32
    %266 = vector.broadcast %cst_75 : f32 to vector<2x16xf32>
    %267 = arith.addf %266, %265 : vector<2x16xf32>
    %268 = arith.divf %266, %267 : vector<2x16xf32>
    %269 = vector.extract_strided_slice %262 {offsets = [0, 16], sizes = [2, 16], strides = [1, 1]} : vector<2x64xf32> to vector<2x16xf32>
    %270 = arith.negf %269 : vector<2x16xf32>
    %271 = math.exp %270 : vector<2x16xf32>
    %cst_76 = arith.constant 1.000000e+00 : f32
    %272 = vector.broadcast %cst_76 : f32 to vector<2x16xf32>
    %273 = arith.addf %272, %271 : vector<2x16xf32>
    %274 = arith.divf %272, %273 : vector<2x16xf32>
    %275 = vector.extract_strided_slice %262 {offsets = [0, 32], sizes = [2, 16], strides = [1, 1]} : vector<2x64xf32> to vector<2x16xf32>
    %276 = math.tanh %275 : vector<2x16xf32>
    %277 = vector.extract_strided_slice %262 {offsets = [0, 48], sizes = [2, 16], strides = [1, 1]} : vector<2x64xf32> to vector<2x16xf32>
    %278 = arith.negf %277 : vector<2x16xf32>
    %279 = math.exp %278 : vector<2x16xf32>
    %cst_77 = arith.constant 1.000000e+00 : f32
    %280 = vector.broadcast %cst_77 : f32 to vector<2x16xf32>
    %281 = arith.addf %280, %279 : vector<2x16xf32>
    %282 = arith.divf %280, %281 : vector<2x16xf32>
    %283 = arith.mulf %274, %250 : vector<2x16xf32>
    %284 = arith.mulf %268, %276 : vector<2x16xf32>
    %285 = arith.addf %283, %284 : vector<2x16xf32>
    %286 = math.tanh %285 : vector<2x16xf32>
    %287 = arith.mulf %282, %286 : vector<2x16xf32>
    %c0_78 = arith.constant 0 : index
    %c0_79 = arith.constant 0 : index
    %288 = vector.load %arg9[%c0_78, %c0_79] : memref<16x16xf32, #tpu.memory_space<vmem>>, vector<2x16xf32>
    tpu.vector_store %arg9[%c0_78, %c0_79], %287 {strides = array<i32>} : memref<16x16xf32, #tpu.memory_space<vmem>>, vector<2x16xf32>,
    %289 = vector.extract_strided_slice %257 {offsets = [2, 0], sizes = [2, 64], strides = [1, 1]} : vector<16x64xf32> to vector<2x64xf32>
    %cst_80 = arith.constant dense<0.000000e+00> : vector<2x64xf32>
    %290 = tpu.matmul %287, %259, %cst_80 {dimension_numbers = #tpu.dot_dimension_numbers<[1], [0], [0], [1], [0, 0, 1, 1], [], []>} : vector<2x16xf32>, vector<16x64xf32>, vector<2x64xf32> -> vector<2x64xf32>
    %291 = arith.addf %289, %290 : vector<2x64xf32>
    %292 = vector.extract_strided_slice %291 {offsets = [0, 0], sizes = [2, 16], strides = [1, 1]} : vector<2x64xf32> to vector<2x16xf32>
    %293 = arith.negf %292 : vector<2x16xf32>
    %294 = math.exp %293 : vector<2x16xf32>
    %cst_81 = arith.constant 1.000000e+00 : f32
    %295 = vector.broadcast %cst_81 : f32 to vector<2x16xf32>
    %296 = arith.addf %295, %294 : vector<2x16xf32>
    %297 = arith.divf %295, %296 : vector<2x16xf32>
    %298 = vector.extract_strided_slice %291 {offsets = [0, 16], sizes = [2, 16], strides = [1, 1]} : vector<2x64xf32> to vector<2x16xf32>
    %299 = arith.negf %298 : vector<2x16xf32>
    %300 = math.exp %299 : vector<2x16xf32>
    %cst_82 = arith.constant 1.000000e+00 : f32
    %301 = vector.broadcast %cst_82 : f32 to vector<2x16xf32>
    %302 = arith.addf %301, %300 : vector<2x16xf32>
    %303 = arith.divf %301, %302 : vector<2x16xf32>
    %304 = vector.extract_strided_slice %291 {offsets = [0, 32], sizes = [2, 16], strides = [1, 1]} : vector<2x64xf32> to vector<2x16xf32>
    %305 = math.tanh %304 : vector<2x16xf32>
    %306 = vector.extract_strided_slice %291 {offsets = [0, 48], sizes = [2, 16], strides = [1, 1]} : vector<2x64xf32> to vector<2x16xf32>
    %307 = arith.negf %306 : vector<2x16xf32>
    %308 = math.exp %307 : vector<2x16xf32>
    %cst_83 = arith.constant 1.000000e+00 : f32
    %309 = vector.broadcast %cst_83 : f32 to vector<2x16xf32>
    %310 = arith.addf %309, %308 : vector<2x16xf32>
    %311 = arith.divf %309, %310 : vector<2x16xf32>
    %312 = arith.mulf %303, %285 : vector<2x16xf32>
    %313 = arith.mulf %297, %305 : vector<2x16xf32>
    %314 = arith.addf %312, %313 : vector<2x16xf32>
    %315 = math.tanh %314 : vector<2x16xf32>
    %316 = arith.mulf %311, %315 : vector<2x16xf32>
    %c2_84 = arith.constant 2 : index
    %c0_85 = arith.constant 0 : index
    %317 = vector.load %arg9[%c2_84, %c0_85] : memref<16x16xf32, #tpu.memory_space<vmem>>, vector<2x16xf32>
    tpu.vector_store %arg9[%c2_84, %c0_85], %316 {strides = array<i32>} : memref<16x16xf32, #tpu.memory_space<vmem>>, vector<2x16xf32>,
    %318 = vector.extract_strided_slice %257 {offsets = [4, 0], sizes = [2, 64], strides = [1, 1]} : vector<16x64xf32> to vector<2x64xf32>
    %cst_86 = arith.constant dense<0.000000e+00> : vector<2x64xf32>
    %319 = tpu.matmul %316, %259, %cst_86 {dimension_numbers = #tpu.dot_dimension_numbers<[1], [0], [0], [1], [0, 0, 1, 1], [], []>} : vector<2x16xf32>, vector<16x64xf32>, vector<2x64xf32> -> vector<2x64xf32>
    %320 = arith.addf %318, %319 : vector<2x64xf32>
    %321 = vector.extract_strided_slice %320 {offsets = [0, 0], sizes = [2, 16], strides = [1, 1]} : vector<2x64xf32> to vector<2x16xf32>
    %322 = arith.negf %321 : vector<2x16xf32>
    %323 = math.exp %322 : vector<2x16xf32>
    %cst_87 = arith.constant 1.000000e+00 : f32
    %324 = vector.broadcast %cst_87 : f32 to vector<2x16xf32>
    %325 = arith.addf %324, %323 : vector<2x16xf32>
    %326 = arith.divf %324, %325 : vector<2x16xf32>
    %327 = vector.extract_strided_slice %320 {offsets = [0, 16], sizes = [2, 16], strides = [1, 1]} : vector<2x64xf32> to vector<2x16xf32>
    %328 = arith.negf %327 : vector<2x16xf32>
    %329 = math.exp %328 : vector<2x16xf32>
    %cst_88 = arith.constant 1.000000e+00 : f32
    %330 = vector.broadcast %cst_88 : f32 to vector<2x16xf32>
    %331 = arith.addf %330, %329 : vector<2x16xf32>
    %332 = arith.divf %330, %331 : vector<2x16xf32>
    %333 = vector.extract_strided_slice %320 {offsets = [0, 32], sizes = [2, 16], strides = [1, 1]} : vector<2x64xf32> to vector<2x16xf32>
    %334 = math.tanh %333 : vector<2x16xf32>
    %335 = vector.extract_strided_slice %320 {offsets = [0, 48], sizes = [2, 16], strides = [1, 1]} : vector<2x64xf32> to vector<2x16xf32>
    %336 = arith.negf %335 : vector<2x16xf32>
    %337 = math.exp %336 : vector<2x16xf32>
    %cst_89 = arith.constant 1.000000e+00 : f32
    %338 = vector.broadcast %cst_89 : f32 to vector<2x16xf32>
    %339 = arith.addf %338, %337 : vector<2x16xf32>
    %340 = arith.divf %338, %339 : vector<2x16xf32>
    %341 = arith.mulf %332, %314 : vector<2x16xf32>
    %342 = arith.mulf %326, %334 : vector<2x16xf32>
    %343 = arith.addf %341, %342 : vector<2x16xf32>
    %344 = math.tanh %343 : vector<2x16xf32>
    %345 = arith.mulf %340, %344 : vector<2x16xf32>
    %c4_90 = arith.constant 4 : index
    %c0_91 = arith.constant 0 : index
    %346 = vector.load %arg9[%c4_90, %c0_91] : memref<16x16xf32, #tpu.memory_space<vmem>>, vector<2x16xf32>
    tpu.vector_store %arg9[%c4_90, %c0_91], %345 {strides = array<i32>} : memref<16x16xf32, #tpu.memory_space<vmem>>, vector<2x16xf32>,
    %347 = vector.extract_strided_slice %257 {offsets = [6, 0], sizes = [2, 64], strides = [1, 1]} : vector<16x64xf32> to vector<2x64xf32>
    %cst_92 = arith.constant dense<0.000000e+00> : vector<2x64xf32>
    %348 = tpu.matmul %345, %259, %cst_92 {dimension_numbers = #tpu.dot_dimension_numbers<[1], [0], [0], [1], [0, 0, 1, 1], [], []>} : vector<2x16xf32>, vector<16x64xf32>, vector<2x64xf32> -> vector<2x64xf32>
    %349 = arith.addf %347, %348 : vector<2x64xf32>
    %350 = vector.extract_strided_slice %349 {offsets = [0, 0], sizes = [2, 16], strides = [1, 1]} : vector<2x64xf32> to vector<2x16xf32>
    %351 = arith.negf %350 : vector<2x16xf32>
    %352 = math.exp %351 : vector<2x16xf32>
    %cst_93 = arith.constant 1.000000e+00 : f32
    %353 = vector.broadcast %cst_93 : f32 to vector<2x16xf32>
    %354 = arith.addf %353, %352 : vector<2x16xf32>
    %355 = arith.divf %353, %354 : vector<2x16xf32>
    %356 = vector.extract_strided_slice %349 {offsets = [0, 16], sizes = [2, 16], strides = [1, 1]} : vector<2x64xf32> to vector<2x16xf32>
    %357 = arith.negf %356 : vector<2x16xf32>
    %358 = math.exp %357 : vector<2x16xf32>
    %cst_94 = arith.constant 1.000000e+00 : f32
    %359 = vector.broadcast %cst_94 : f32 to vector<2x16xf32>
    %360 = arith.addf %359, %358 : vector<2x16xf32>
    %361 = arith.divf %359, %360 : vector<2x16xf32>
    %362 = vector.extract_strided_slice %349 {offsets = [0, 32], sizes = [2, 16], strides = [1, 1]} : vector<2x64xf32> to vector<2x16xf32>
    %363 = math.tanh %362 : vector<2x16xf32>
    %364 = vector.extract_strided_slice %349 {offsets = [0, 48], sizes = [2, 16], strides = [1, 1]} : vector<2x64xf32> to vector<2x16xf32>
    %365 = arith.negf %364 : vector<2x16xf32>
    %366 = math.exp %365 : vector<2x16xf32>
    %cst_95 = arith.constant 1.000000e+00 : f32
    %367 = vector.broadcast %cst_95 : f32 to vector<2x16xf32>
    %368 = arith.addf %367, %366 : vector<2x16xf32>
    %369 = arith.divf %367, %368 : vector<2x16xf32>
    %370 = arith.mulf %361, %343 : vector<2x16xf32>
    %371 = arith.mulf %355, %363 : vector<2x16xf32>
    %372 = arith.addf %370, %371 : vector<2x16xf32>
    %373 = math.tanh %372 : vector<2x16xf32>
    %374 = arith.mulf %369, %373 : vector<2x16xf32>
    %c6_96 = arith.constant 6 : index
    %c0_97 = arith.constant 0 : index
    %375 = vector.load %arg9[%c6_96, %c0_97] : memref<16x16xf32, #tpu.memory_space<vmem>>, vector<2x16xf32>
    tpu.vector_store %arg9[%c6_96, %c0_97], %374 {strides = array<i32>} : memref<16x16xf32, #tpu.memory_space<vmem>>, vector<2x16xf32>,
    %376 = vector.extract_strided_slice %257 {offsets = [8, 0], sizes = [2, 64], strides = [1, 1]} : vector<16x64xf32> to vector<2x64xf32>
    %cst_98 = arith.constant dense<0.000000e+00> : vector<2x64xf32>
    %377 = tpu.matmul %374, %259, %cst_98 {dimension_numbers = #tpu.dot_dimension_numbers<[1], [0], [0], [1], [0, 0, 1, 1], [], []>} : vector<2x16xf32>, vector<16x64xf32>, vector<2x64xf32> -> vector<2x64xf32>
    %378 = arith.addf %376, %377 : vector<2x64xf32>
    %379 = vector.extract_strided_slice %378 {offsets = [0, 0], sizes = [2, 16], strides = [1, 1]} : vector<2x64xf32> to vector<2x16xf32>
    %380 = arith.negf %379 : vector<2x16xf32>
    %381 = math.exp %380 : vector<2x16xf32>
    %cst_99 = arith.constant 1.000000e+00 : f32
    %382 = vector.broadcast %cst_99 : f32 to vector<2x16xf32>
    %383 = arith.addf %382, %381 : vector<2x16xf32>
    %384 = arith.divf %382, %383 : vector<2x16xf32>
    %385 = vector.extract_strided_slice %378 {offsets = [0, 16], sizes = [2, 16], strides = [1, 1]} : vector<2x64xf32> to vector<2x16xf32>
    %386 = arith.negf %385 : vector<2x16xf32>
    %387 = math.exp %386 : vector<2x16xf32>
    %cst_100 = arith.constant 1.000000e+00 : f32
    %388 = vector.broadcast %cst_100 : f32 to vector<2x16xf32>
    %389 = arith.addf %388, %387 : vector<2x16xf32>
    %390 = arith.divf %388, %389 : vector<2x16xf32>
    %391 = vector.extract_strided_slice %378 {offsets = [0, 32], sizes = [2, 16], strides = [1, 1]} : vector<2x64xf32> to vector<2x16xf32>
    %392 = math.tanh %391 : vector<2x16xf32>
    %393 = vector.extract_strided_slice %378 {offsets = [0, 48], sizes = [2, 16], strides = [1, 1]} : vector<2x64xf32> to vector<2x16xf32>
    %394 = arith.negf %393 : vector<2x16xf32>
    %395 = math.exp %394 : vector<2x16xf32>
    %cst_101 = arith.constant 1.000000e+00 : f32
    %396 = vector.broadcast %cst_101 : f32 to vector<2x16xf32>
    %397 = arith.addf %396, %395 : vector<2x16xf32>
    %398 = arith.divf %396, %397 : vector<2x16xf32>
    %399 = arith.mulf %390, %372 : vector<2x16xf32>
    %400 = arith.mulf %384, %392 : vector<2x16xf32>
    %401 = arith.addf %399, %400 : vector<2x16xf32>
    %402 = math.tanh %401 : vector<2x16xf32>
    %403 = arith.mulf %398, %402 : vector<2x16xf32>
    %c8_102 = arith.constant 8 : index
    %c0_103 = arith.constant 0 : index
    %404 = vector.load %arg9[%c8_102, %c0_103] : memref<16x16xf32, #tpu.memory_space<vmem>>, vector<2x16xf32>
    tpu.vector_store %arg9[%c8_102, %c0_103], %403 {strides = array<i32>} : memref<16x16xf32, #tpu.memory_space<vmem>>, vector<2x16xf32>,
    %405 = vector.extract_strided_slice %257 {offsets = [10, 0], sizes = [2, 64], strides = [1, 1]} : vector<16x64xf32> to vector<2x64xf32>
    %cst_104 = arith.constant dense<0.000000e+00> : vector<2x64xf32>
    %406 = tpu.matmul %403, %259, %cst_104 {dimension_numbers = #tpu.dot_dimension_numbers<[1], [0], [0], [1], [0, 0, 1, 1], [], []>} : vector<2x16xf32>, vector<16x64xf32>, vector<2x64xf32> -> vector<2x64xf32>
    %407 = arith.addf %405, %406 : vector<2x64xf32>
    %408 = vector.extract_strided_slice %407 {offsets = [0, 0], sizes = [2, 16], strides = [1, 1]} : vector<2x64xf32> to vector<2x16xf32>
    %409 = arith.negf %408 : vector<2x16xf32>
    %410 = math.exp %409 : vector<2x16xf32>
    %cst_105 = arith.constant 1.000000e+00 : f32
    %411 = vector.broadcast %cst_105 : f32 to vector<2x16xf32>
    %412 = arith.addf %411, %410 : vector<2x16xf32>
    %413 = arith.divf %411, %412 : vector<2x16xf32>
    %414 = vector.extract_strided_slice %407 {offsets = [0, 16], sizes = [2, 16], strides = [1, 1]} : vector<2x64xf32> to vector<2x16xf32>
    %415 = arith.negf %414 : vector<2x16xf32>
    %416 = math.exp %415 : vector<2x16xf32>
    %cst_106 = arith.constant 1.000000e+00 : f32
    %417 = vector.broadcast %cst_106 : f32 to vector<2x16xf32>
    %418 = arith.addf %417, %416 : vector<2x16xf32>
    %419 = arith.divf %417, %418 : vector<2x16xf32>
    %420 = vector.extract_strided_slice %407 {offsets = [0, 32], sizes = [2, 16], strides = [1, 1]} : vector<2x64xf32> to vector<2x16xf32>
    %421 = math.tanh %420 : vector<2x16xf32>
    %422 = vector.extract_strided_slice %407 {offsets = [0, 48], sizes = [2, 16], strides = [1, 1]} : vector<2x64xf32> to vector<2x16xf32>
    %423 = arith.negf %422 : vector<2x16xf32>
    %424 = math.exp %423 : vector<2x16xf32>
    %cst_107 = arith.constant 1.000000e+00 : f32
    %425 = vector.broadcast %cst_107 : f32 to vector<2x16xf32>
    %426 = arith.addf %425, %424 : vector<2x16xf32>
    %427 = arith.divf %425, %426 : vector<2x16xf32>
    %428 = arith.mulf %419, %401 : vector<2x16xf32>
    %429 = arith.mulf %413, %421 : vector<2x16xf32>
    %430 = arith.addf %428, %429 : vector<2x16xf32>
    %431 = math.tanh %430 : vector<2x16xf32>
    %432 = arith.mulf %427, %431 : vector<2x16xf32>
    %c10_108 = arith.constant 10 : index
    %c0_109 = arith.constant 0 : index
    %433 = vector.load %arg9[%c10_108, %c0_109] : memref<16x16xf32, #tpu.memory_space<vmem>>, vector<2x16xf32>
    tpu.vector_store %arg9[%c10_108, %c0_109], %432 {strides = array<i32>} : memref<16x16xf32, #tpu.memory_space<vmem>>, vector<2x16xf32>,
    %434 = vector.extract_strided_slice %257 {offsets = [12, 0], sizes = [2, 64], strides = [1, 1]} : vector<16x64xf32> to vector<2x64xf32>
    %cst_110 = arith.constant dense<0.000000e+00> : vector<2x64xf32>
    %435 = tpu.matmul %432, %259, %cst_110 {dimension_numbers = #tpu.dot_dimension_numbers<[1], [0], [0], [1], [0, 0, 1, 1], [], []>} : vector<2x16xf32>, vector<16x64xf32>, vector<2x64xf32> -> vector<2x64xf32>
    %436 = arith.addf %434, %435 : vector<2x64xf32>
    %437 = vector.extract_strided_slice %436 {offsets = [0, 0], sizes = [2, 16], strides = [1, 1]} : vector<2x64xf32> to vector<2x16xf32>
    %438 = arith.negf %437 : vector<2x16xf32>
    %439 = math.exp %438 : vector<2x16xf32>
    %cst_111 = arith.constant 1.000000e+00 : f32
    %440 = vector.broadcast %cst_111 : f32 to vector<2x16xf32>
    %441 = arith.addf %440, %439 : vector<2x16xf32>
    %442 = arith.divf %440, %441 : vector<2x16xf32>
    %443 = vector.extract_strided_slice %436 {offsets = [0, 16], sizes = [2, 16], strides = [1, 1]} : vector<2x64xf32> to vector<2x16xf32>
    %444 = arith.negf %443 : vector<2x16xf32>
    %445 = math.exp %444 : vector<2x16xf32>
    %cst_112 = arith.constant 1.000000e+00 : f32
    %446 = vector.broadcast %cst_112 : f32 to vector<2x16xf32>
    %447 = arith.addf %446, %445 : vector<2x16xf32>
    %448 = arith.divf %446, %447 : vector<2x16xf32>
    %449 = vector.extract_strided_slice %436 {offsets = [0, 32], sizes = [2, 16], strides = [1, 1]} : vector<2x64xf32> to vector<2x16xf32>
    %450 = math.tanh %449 : vector<2x16xf32>
    %451 = vector.extract_strided_slice %436 {offsets = [0, 48], sizes = [2, 16], strides = [1, 1]} : vector<2x64xf32> to vector<2x16xf32>
    %452 = arith.negf %451 : vector<2x16xf32>
    %453 = math.exp %452 : vector<2x16xf32>
    %cst_113 = arith.constant 1.000000e+00 : f32
    %454 = vector.broadcast %cst_113 : f32 to vector<2x16xf32>
    %455 = arith.addf %454, %453 : vector<2x16xf32>
    %456 = arith.divf %454, %455 : vector<2x16xf32>
    %457 = arith.mulf %448, %430 : vector<2x16xf32>
    %458 = arith.mulf %442, %450 : vector<2x16xf32>
    %459 = arith.addf %457, %458 : vector<2x16xf32>
    %460 = math.tanh %459 : vector<2x16xf32>
    %461 = arith.mulf %456, %460 : vector<2x16xf32>
    %c12_114 = arith.constant 12 : index
    %c0_115 = arith.constant 0 : index
    %462 = vector.load %arg9[%c12_114, %c0_115] : memref<16x16xf32, #tpu.memory_space<vmem>>, vector<2x16xf32>
    tpu.vector_store %arg9[%c12_114, %c0_115], %461 {strides = array<i32>} : memref<16x16xf32, #tpu.memory_space<vmem>>, vector<2x16xf32>,
    %463 = vector.extract_strided_slice %257 {offsets = [14, 0], sizes = [2, 64], strides = [1, 1]} : vector<16x64xf32> to vector<2x64xf32>
    %cst_116 = arith.constant dense<0.000000e+00> : vector<2x64xf32>
    %464 = tpu.matmul %461, %259, %cst_116 {dimension_numbers = #tpu.dot_dimension_numbers<[1], [0], [0], [1], [0, 0, 1, 1], [], []>} : vector<2x16xf32>, vector<16x64xf32>, vector<2x64xf32> -> vector<2x64xf32>
    %465 = arith.addf %463, %464 : vector<2x64xf32>
    %466 = vector.extract_strided_slice %465 {offsets = [0, 0], sizes = [2, 16], strides = [1, 1]} : vector<2x64xf32> to vector<2x16xf32>
    %467 = arith.negf %466 : vector<2x16xf32>
    %468 = math.exp %467 : vector<2x16xf32>
    %cst_117 = arith.constant 1.000000e+00 : f32
    %469 = vector.broadcast %cst_117 : f32 to vector<2x16xf32>
    %470 = arith.addf %469, %468 : vector<2x16xf32>
    %471 = arith.divf %469, %470 : vector<2x16xf32>
    %472 = vector.extract_strided_slice %465 {offsets = [0, 16], sizes = [2, 16], strides = [1, 1]} : vector<2x64xf32> to vector<2x16xf32>
    %473 = arith.negf %472 : vector<2x16xf32>
    %474 = math.exp %473 : vector<2x16xf32>
    %cst_118 = arith.constant 1.000000e+00 : f32
    %475 = vector.broadcast %cst_118 : f32 to vector<2x16xf32>
    %476 = arith.addf %475, %474 : vector<2x16xf32>
    %477 = arith.divf %475, %476 : vector<2x16xf32>
    %478 = vector.extract_strided_slice %465 {offsets = [0, 32], sizes = [2, 16], strides = [1, 1]} : vector<2x64xf32> to vector<2x16xf32>
    %479 = math.tanh %478 : vector<2x16xf32>
    %480 = vector.extract_strided_slice %465 {offsets = [0, 48], sizes = [2, 16], strides = [1, 1]} : vector<2x64xf32> to vector<2x16xf32>
    %481 = arith.negf %480 : vector<2x16xf32>
    %482 = math.exp %481 : vector<2x16xf32>
    %cst_119 = arith.constant 1.000000e+00 : f32
    %483 = vector.broadcast %cst_119 : f32 to vector<2x16xf32>
    %484 = arith.addf %483, %482 : vector<2x16xf32>
    %485 = arith.divf %483, %484 : vector<2x16xf32>
    %486 = arith.mulf %477, %459 : vector<2x16xf32>
    %487 = arith.mulf %471, %479 : vector<2x16xf32>
    %488 = arith.addf %486, %487 : vector<2x16xf32>
    %489 = math.tanh %488 : vector<2x16xf32>
    %490 = arith.mulf %485, %489 : vector<2x16xf32>
    %c14_120 = arith.constant 14 : index
    %c0_121 = arith.constant 0 : index
    %491 = vector.load %arg9[%c14_120, %c0_121] : memref<16x16xf32, #tpu.memory_space<vmem>>, vector<2x16xf32>
    tpu.vector_store %arg9[%c14_120, %c0_121], %490 {strides = array<i32>} : memref<16x16xf32, #tpu.memory_space<vmem>>, vector<2x16xf32>,
    %c0_122 = arith.constant 0 : index
    %c0_123 = arith.constant 0 : index
    %492 = vector.load %arg9[%c0_122, %c0_123] : memref<16x16xf32, #tpu.memory_space<vmem>>, vector<16x16xf32>
    %c2_124 = arith.constant 2 : index
    %c0_125 = arith.constant 0 : index
    %c0_126 = arith.constant 0 : index
    %493 = vector.load %arg3[%c2_124, %c0_125, %c0_126] : memref<4x16x64xf32, #tpu.memory_space<vmem>>, vector<1x16x64xf32>
    %494 = vector.shape_cast %493 : vector<1x16x64xf32> to vector<16x64xf32>
    %cst_127 = arith.constant dense<0.000000e+00> : vector<16x64xf32>
    %495 = tpu.matmul %492, %494, %cst_127 {dimension_numbers = #tpu.dot_dimension_numbers<[1], [0], [0], [1], [0, 0, 1, 1], [], []>} : vector<16x16xf32>, vector<16x64xf32>, vector<16x64xf32> -> vector<16x64xf32>
    %c2_128 = arith.constant 2 : index
    %c0_129 = arith.constant 0 : index
    %c0_130 = arith.constant 0 : index
    %496 = vector.load %arg5[%c2_128, %c0_129, %c0_130] : memref<4x1x64xf32, #tpu.memory_space<vmem>>, vector<1x1x64xf32>
    %497 = vector.shape_cast %496 : vector<1x1x64xf32> to vector<1x64xf32>
    %498 = vector.broadcast %497 : vector<1x64xf32> to vector<16x64xf32>
    %499 = arith.addf %495, %498 : vector<16x64xf32>
    %c2_131 = arith.constant 2 : index
    %c0_132 = arith.constant 0 : index
    %c0_133 = arith.constant 0 : index
    %500 = vector.load %arg4[%c2_131, %c0_132, %c0_133] : memref<4x16x64xf32, #tpu.memory_space<vmem>>, vector<1x16x64xf32>
    %501 = vector.shape_cast %500 : vector<1x16x64xf32> to vector<16x64xf32>
    %502 = vector.extract_strided_slice %499 {offsets = [0, 0], sizes = [2, 64], strides = [1, 1]} : vector<16x64xf32> to vector<2x64xf32>
    %cst_134 = arith.constant dense<0.000000e+00> : vector<2x64xf32>
    %503 = tpu.matmul %244, %501, %cst_134 {dimension_numbers = #tpu.dot_dimension_numbers<[1], [0], [0], [1], [0, 0, 1, 1], [], []>} : vector<2x16xf32>, vector<16x64xf32>, vector<2x64xf32> -> vector<2x64xf32>
    %504 = arith.addf %502, %503 : vector<2x64xf32>
    %505 = vector.extract_strided_slice %504 {offsets = [0, 0], sizes = [2, 16], strides = [1, 1]} : vector<2x64xf32> to vector<2x16xf32>
    %506 = arith.negf %505 : vector<2x16xf32>
    %507 = math.exp %506 : vector<2x16xf32>
    %cst_135 = arith.constant 1.000000e+00 : f32
    %508 = vector.broadcast %cst_135 : f32 to vector<2x16xf32>
    %509 = arith.addf %508, %507 : vector<2x16xf32>
    %510 = arith.divf %508, %509 : vector<2x16xf32>
    %511 = vector.extract_strided_slice %504 {offsets = [0, 16], sizes = [2, 16], strides = [1, 1]} : vector<2x64xf32> to vector<2x16xf32>
    %512 = arith.negf %511 : vector<2x16xf32>
    %513 = math.exp %512 : vector<2x16xf32>
    %cst_136 = arith.constant 1.000000e+00 : f32
    %514 = vector.broadcast %cst_136 : f32 to vector<2x16xf32>
    %515 = arith.addf %514, %513 : vector<2x16xf32>
    %516 = arith.divf %514, %515 : vector<2x16xf32>
    %517 = vector.extract_strided_slice %504 {offsets = [0, 32], sizes = [2, 16], strides = [1, 1]} : vector<2x64xf32> to vector<2x16xf32>
    %518 = math.tanh %517 : vector<2x16xf32>
    %519 = vector.extract_strided_slice %504 {offsets = [0, 48], sizes = [2, 16], strides = [1, 1]} : vector<2x64xf32> to vector<2x16xf32>
    %520 = arith.negf %519 : vector<2x16xf32>
    %521 = math.exp %520 : vector<2x16xf32>
    %cst_137 = arith.constant 1.000000e+00 : f32
    %522 = vector.broadcast %cst_137 : f32 to vector<2x16xf32>
    %523 = arith.addf %522, %521 : vector<2x16xf32>
    %524 = arith.divf %522, %523 : vector<2x16xf32>
    %525 = arith.mulf %516, %242 : vector<2x16xf32>
    %526 = arith.mulf %510, %518 : vector<2x16xf32>
    %527 = arith.addf %525, %526 : vector<2x16xf32>
    %528 = math.tanh %527 : vector<2x16xf32>
    %529 = arith.mulf %524, %528 : vector<2x16xf32>
    %c0_138 = arith.constant 0 : index
    %c0_139 = arith.constant 0 : index
    %530 = vector.load %arg9[%c0_138, %c0_139] : memref<16x16xf32, #tpu.memory_space<vmem>>, vector<2x16xf32>
    tpu.vector_store %arg9[%c0_138, %c0_139], %529 {strides = array<i32>} : memref<16x16xf32, #tpu.memory_space<vmem>>, vector<2x16xf32>,
    %531 = vector.extract_strided_slice %499 {offsets = [2, 0], sizes = [2, 64], strides = [1, 1]} : vector<16x64xf32> to vector<2x64xf32>
    %cst_140 = arith.constant dense<0.000000e+00> : vector<2x64xf32>
    %532 = tpu.matmul %529, %501, %cst_140 {dimension_numbers = #tpu.dot_dimension_numbers<[1], [0], [0], [1], [0, 0, 1, 1], [], []>} : vector<2x16xf32>, vector<16x64xf32>, vector<2x64xf32> -> vector<2x64xf32>
    %533 = arith.addf %531, %532 : vector<2x64xf32>
    %534 = vector.extract_strided_slice %533 {offsets = [0, 0], sizes = [2, 16], strides = [1, 1]} : vector<2x64xf32> to vector<2x16xf32>
    %535 = arith.negf %534 : vector<2x16xf32>
    %536 = math.exp %535 : vector<2x16xf32>
    %cst_141 = arith.constant 1.000000e+00 : f32
    %537 = vector.broadcast %cst_141 : f32 to vector<2x16xf32>
    %538 = arith.addf %537, %536 : vector<2x16xf32>
    %539 = arith.divf %537, %538 : vector<2x16xf32>
    %540 = vector.extract_strided_slice %533 {offsets = [0, 16], sizes = [2, 16], strides = [1, 1]} : vector<2x64xf32> to vector<2x16xf32>
    %541 = arith.negf %540 : vector<2x16xf32>
    %542 = math.exp %541 : vector<2x16xf32>
    %cst_142 = arith.constant 1.000000e+00 : f32
    %543 = vector.broadcast %cst_142 : f32 to vector<2x16xf32>
    %544 = arith.addf %543, %542 : vector<2x16xf32>
    %545 = arith.divf %543, %544 : vector<2x16xf32>
    %546 = vector.extract_strided_slice %533 {offsets = [0, 32], sizes = [2, 16], strides = [1, 1]} : vector<2x64xf32> to vector<2x16xf32>
    %547 = math.tanh %546 : vector<2x16xf32>
    %548 = vector.extract_strided_slice %533 {offsets = [0, 48], sizes = [2, 16], strides = [1, 1]} : vector<2x64xf32> to vector<2x16xf32>
    %549 = arith.negf %548 : vector<2x16xf32>
    %550 = math.exp %549 : vector<2x16xf32>
    %cst_143 = arith.constant 1.000000e+00 : f32
    %551 = vector.broadcast %cst_143 : f32 to vector<2x16xf32>
    %552 = arith.addf %551, %550 : vector<2x16xf32>
    %553 = arith.divf %551, %552 : vector<2x16xf32>
    %554 = arith.mulf %545, %527 : vector<2x16xf32>
    %555 = arith.mulf %539, %547 : vector<2x16xf32>
    %556 = arith.addf %554, %555 : vector<2x16xf32>
    %557 = math.tanh %556 : vector<2x16xf32>
    %558 = arith.mulf %553, %557 : vector<2x16xf32>
    %c2_144 = arith.constant 2 : index
    %c0_145 = arith.constant 0 : index
    %559 = vector.load %arg9[%c2_144, %c0_145] : memref<16x16xf32, #tpu.memory_space<vmem>>, vector<2x16xf32>
    tpu.vector_store %arg9[%c2_144, %c0_145], %558 {strides = array<i32>} : memref<16x16xf32, #tpu.memory_space<vmem>>, vector<2x16xf32>,
    %560 = vector.extract_strided_slice %499 {offsets = [4, 0], sizes = [2, 64], strides = [1, 1]} : vector<16x64xf32> to vector<2x64xf32>
    %cst_146 = arith.constant dense<0.000000e+00> : vector<2x64xf32>
    %561 = tpu.matmul %558, %501, %cst_146 {dimension_numbers = #tpu.dot_dimension_numbers<[1], [0], [0], [1], [0, 0, 1, 1], [], []>} : vector<2x16xf32>, vector<16x64xf32>, vector<2x64xf32> -> vector<2x64xf32>
    %562 = arith.addf %560, %561 : vector<2x64xf32>
    %563 = vector.extract_strided_slice %562 {offsets = [0, 0], sizes = [2, 16], strides = [1, 1]} : vector<2x64xf32> to vector<2x16xf32>
    %564 = arith.negf %563 : vector<2x16xf32>
    %565 = math.exp %564 : vector<2x16xf32>
    %cst_147 = arith.constant 1.000000e+00 : f32
    %566 = vector.broadcast %cst_147 : f32 to vector<2x16xf32>
    %567 = arith.addf %566, %565 : vector<2x16xf32>
    %568 = arith.divf %566, %567 : vector<2x16xf32>
    %569 = vector.extract_strided_slice %562 {offsets = [0, 16], sizes = [2, 16], strides = [1, 1]} : vector<2x64xf32> to vector<2x16xf32>
    %570 = arith.negf %569 : vector<2x16xf32>
    %571 = math.exp %570 : vector<2x16xf32>
    %cst_148 = arith.constant 1.000000e+00 : f32
    %572 = vector.broadcast %cst_148 : f32 to vector<2x16xf32>
    %573 = arith.addf %572, %571 : vector<2x16xf32>
    %574 = arith.divf %572, %573 : vector<2x16xf32>
    %575 = vector.extract_strided_slice %562 {offsets = [0, 32], sizes = [2, 16], strides = [1, 1]} : vector<2x64xf32> to vector<2x16xf32>
    %576 = math.tanh %575 : vector<2x16xf32>
    %577 = vector.extract_strided_slice %562 {offsets = [0, 48], sizes = [2, 16], strides = [1, 1]} : vector<2x64xf32> to vector<2x16xf32>
    %578 = arith.negf %577 : vector<2x16xf32>
    %579 = math.exp %578 : vector<2x16xf32>
    %cst_149 = arith.constant 1.000000e+00 : f32
    %580 = vector.broadcast %cst_149 : f32 to vector<2x16xf32>
    %581 = arith.addf %580, %579 : vector<2x16xf32>
    %582 = arith.divf %580, %581 : vector<2x16xf32>
    %583 = arith.mulf %574, %556 : vector<2x16xf32>
    %584 = arith.mulf %568, %576 : vector<2x16xf32>
    %585 = arith.addf %583, %584 : vector<2x16xf32>
    %586 = math.tanh %585 : vector<2x16xf32>
    %587 = arith.mulf %582, %586 : vector<2x16xf32>
    %c4_150 = arith.constant 4 : index
    %c0_151 = arith.constant 0 : index
    %588 = vector.load %arg9[%c4_150, %c0_151] : memref<16x16xf32, #tpu.memory_space<vmem>>, vector<2x16xf32>
    tpu.vector_store %arg9[%c4_150, %c0_151], %587 {strides = array<i32>} : memref<16x16xf32, #tpu.memory_space<vmem>>, vector<2x16xf32>,
    %589 = vector.extract_strided_slice %499 {offsets = [6, 0], sizes = [2, 64], strides = [1, 1]} : vector<16x64xf32> to vector<2x64xf32>
    %cst_152 = arith.constant dense<0.000000e+00> : vector<2x64xf32>
    %590 = tpu.matmul %587, %501, %cst_152 {dimension_numbers = #tpu.dot_dimension_numbers<[1], [0], [0], [1], [0, 0, 1, 1], [], []>} : vector<2x16xf32>, vector<16x64xf32>, vector<2x64xf32> -> vector<2x64xf32>
    %591 = arith.addf %589, %590 : vector<2x64xf32>
    %592 = vector.extract_strided_slice %591 {offsets = [0, 0], sizes = [2, 16], strides = [1, 1]} : vector<2x64xf32> to vector<2x16xf32>
    %593 = arith.negf %592 : vector<2x16xf32>
    %594 = math.exp %593 : vector<2x16xf32>
    %cst_153 = arith.constant 1.000000e+00 : f32
    %595 = vector.broadcast %cst_153 : f32 to vector<2x16xf32>
    %596 = arith.addf %595, %594 : vector<2x16xf32>
    %597 = arith.divf %595, %596 : vector<2x16xf32>
    %598 = vector.extract_strided_slice %591 {offsets = [0, 16], sizes = [2, 16], strides = [1, 1]} : vector<2x64xf32> to vector<2x16xf32>
    %599 = arith.negf %598 : vector<2x16xf32>
    %600 = math.exp %599 : vector<2x16xf32>
    %cst_154 = arith.constant 1.000000e+00 : f32
    %601 = vector.broadcast %cst_154 : f32 to vector<2x16xf32>
    %602 = arith.addf %601, %600 : vector<2x16xf32>
    %603 = arith.divf %601, %602 : vector<2x16xf32>
    %604 = vector.extract_strided_slice %591 {offsets = [0, 32], sizes = [2, 16], strides = [1, 1]} : vector<2x64xf32> to vector<2x16xf32>
    %605 = math.tanh %604 : vector<2x16xf32>
    %606 = vector.extract_strided_slice %591 {offsets = [0, 48], sizes = [2, 16], strides = [1, 1]} : vector<2x64xf32> to vector<2x16xf32>
    %607 = arith.negf %606 : vector<2x16xf32>
    %608 = math.exp %607 : vector<2x16xf32>
    %cst_155 = arith.constant 1.000000e+00 : f32
    %609 = vector.broadcast %cst_155 : f32 to vector<2x16xf32>
    %610 = arith.addf %609, %608 : vector<2x16xf32>
    %611 = arith.divf %609, %610 : vector<2x16xf32>
    %612 = arith.mulf %603, %585 : vector<2x16xf32>
    %613 = arith.mulf %597, %605 : vector<2x16xf32>
    %614 = arith.addf %612, %613 : vector<2x16xf32>
    %615 = math.tanh %614 : vector<2x16xf32>
    %616 = arith.mulf %611, %615 : vector<2x16xf32>
    %c6_156 = arith.constant 6 : index
    %c0_157 = arith.constant 0 : index
    %617 = vector.load %arg9[%c6_156, %c0_157] : memref<16x16xf32, #tpu.memory_space<vmem>>, vector<2x16xf32>
    tpu.vector_store %arg9[%c6_156, %c0_157], %616 {strides = array<i32>} : memref<16x16xf32, #tpu.memory_space<vmem>>, vector<2x16xf32>,
    %618 = vector.extract_strided_slice %499 {offsets = [8, 0], sizes = [2, 64], strides = [1, 1]} : vector<16x64xf32> to vector<2x64xf32>
    %cst_158 = arith.constant dense<0.000000e+00> : vector<2x64xf32>
    %619 = tpu.matmul %616, %501, %cst_158 {dimension_numbers = #tpu.dot_dimension_numbers<[1], [0], [0], [1], [0, 0, 1, 1], [], []>} : vector<2x16xf32>, vector<16x64xf32>, vector<2x64xf32> -> vector<2x64xf32>
    %620 = arith.addf %618, %619 : vector<2x64xf32>
    %621 = vector.extract_strided_slice %620 {offsets = [0, 0], sizes = [2, 16], strides = [1, 1]} : vector<2x64xf32> to vector<2x16xf32>
    %622 = arith.negf %621 : vector<2x16xf32>
    %623 = math.exp %622 : vector<2x16xf32>
    %cst_159 = arith.constant 1.000000e+00 : f32
    %624 = vector.broadcast %cst_159 : f32 to vector<2x16xf32>
    %625 = arith.addf %624, %623 : vector<2x16xf32>
    %626 = arith.divf %624, %625 : vector<2x16xf32>
    %627 = vector.extract_strided_slice %620 {offsets = [0, 16], sizes = [2, 16], strides = [1, 1]} : vector<2x64xf32> to vector<2x16xf32>
    %628 = arith.negf %627 : vector<2x16xf32>
    %629 = math.exp %628 : vector<2x16xf32>
    %cst_160 = arith.constant 1.000000e+00 : f32
    %630 = vector.broadcast %cst_160 : f32 to vector<2x16xf32>
    %631 = arith.addf %630, %629 : vector<2x16xf32>
    %632 = arith.divf %630, %631 : vector<2x16xf32>
    %633 = vector.extract_strided_slice %620 {offsets = [0, 32], sizes = [2, 16], strides = [1, 1]} : vector<2x64xf32> to vector<2x16xf32>
    %634 = math.tanh %633 : vector<2x16xf32>
    %635 = vector.extract_strided_slice %620 {offsets = [0, 48], sizes = [2, 16], strides = [1, 1]} : vector<2x64xf32> to vector<2x16xf32>
    %636 = arith.negf %635 : vector<2x16xf32>
    %637 = math.exp %636 : vector<2x16xf32>
    %cst_161 = arith.constant 1.000000e+00 : f32
    %638 = vector.broadcast %cst_161 : f32 to vector<2x16xf32>
    %639 = arith.addf %638, %637 : vector<2x16xf32>
    %640 = arith.divf %638, %639 : vector<2x16xf32>
    %641 = arith.mulf %632, %614 : vector<2x16xf32>
    %642 = arith.mulf %626, %634 : vector<2x16xf32>
    %643 = arith.addf %641, %642 : vector<2x16xf32>
    %644 = math.tanh %643 : vector<2x16xf32>
    %645 = arith.mulf %640, %644 : vector<2x16xf32>
    %c8_162 = arith.constant 8 : index
    %c0_163 = arith.constant 0 : index
    %646 = vector.load %arg9[%c8_162, %c0_163] : memref<16x16xf32, #tpu.memory_space<vmem>>, vector<2x16xf32>
    tpu.vector_store %arg9[%c8_162, %c0_163], %645 {strides = array<i32>} : memref<16x16xf32, #tpu.memory_space<vmem>>, vector<2x16xf32>,
    %647 = vector.extract_strided_slice %499 {offsets = [10, 0], sizes = [2, 64], strides = [1, 1]} : vector<16x64xf32> to vector<2x64xf32>
    %cst_164 = arith.constant dense<0.000000e+00> : vector<2x64xf32>
    %648 = tpu.matmul %645, %501, %cst_164 {dimension_numbers = #tpu.dot_dimension_numbers<[1], [0], [0], [1], [0, 0, 1, 1], [], []>} : vector<2x16xf32>, vector<16x64xf32>, vector<2x64xf32> -> vector<2x64xf32>
    %649 = arith.addf %647, %648 : vector<2x64xf32>
    %650 = vector.extract_strided_slice %649 {offsets = [0, 0], sizes = [2, 16], strides = [1, 1]} : vector<2x64xf32> to vector<2x16xf32>
    %651 = arith.negf %650 : vector<2x16xf32>
    %652 = math.exp %651 : vector<2x16xf32>
    %cst_165 = arith.constant 1.000000e+00 : f32
    %653 = vector.broadcast %cst_165 : f32 to vector<2x16xf32>
    %654 = arith.addf %653, %652 : vector<2x16xf32>
    %655 = arith.divf %653, %654 : vector<2x16xf32>
    %656 = vector.extract_strided_slice %649 {offsets = [0, 16], sizes = [2, 16], strides = [1, 1]} : vector<2x64xf32> to vector<2x16xf32>
    %657 = arith.negf %656 : vector<2x16xf32>
    %658 = math.exp %657 : vector<2x16xf32>
    %cst_166 = arith.constant 1.000000e+00 : f32
    %659 = vector.broadcast %cst_166 : f32 to vector<2x16xf32>
    %660 = arith.addf %659, %658 : vector<2x16xf32>
    %661 = arith.divf %659, %660 : vector<2x16xf32>
    %662 = vector.extract_strided_slice %649 {offsets = [0, 32], sizes = [2, 16], strides = [1, 1]} : vector<2x64xf32> to vector<2x16xf32>
    %663 = math.tanh %662 : vector<2x16xf32>
    %664 = vector.extract_strided_slice %649 {offsets = [0, 48], sizes = [2, 16], strides = [1, 1]} : vector<2x64xf32> to vector<2x16xf32>
    %665 = arith.negf %664 : vector<2x16xf32>
    %666 = math.exp %665 : vector<2x16xf32>
    %cst_167 = arith.constant 1.000000e+00 : f32
    %667 = vector.broadcast %cst_167 : f32 to vector<2x16xf32>
    %668 = arith.addf %667, %666 : vector<2x16xf32>
    %669 = arith.divf %667, %668 : vector<2x16xf32>
    %670 = arith.mulf %661, %643 : vector<2x16xf32>
    %671 = arith.mulf %655, %663 : vector<2x16xf32>
    %672 = arith.addf %670, %671 : vector<2x16xf32>
    %673 = math.tanh %672 : vector<2x16xf32>
    %674 = arith.mulf %669, %673 : vector<2x16xf32>
    %c10_168 = arith.constant 10 : index
    %c0_169 = arith.constant 0 : index
    %675 = vector.load %arg9[%c10_168, %c0_169] : memref<16x16xf32, #tpu.memory_space<vmem>>, vector<2x16xf32>
    tpu.vector_store %arg9[%c10_168, %c0_169], %674 {strides = array<i32>} : memref<16x16xf32, #tpu.memory_space<vmem>>, vector<2x16xf32>,
    %676 = vector.extract_strided_slice %499 {offsets = [12, 0], sizes = [2, 64], strides = [1, 1]} : vector<16x64xf32> to vector<2x64xf32>
    %cst_170 = arith.constant dense<0.000000e+00> : vector<2x64xf32>
    %677 = tpu.matmul %674, %501, %cst_170 {dimension_numbers = #tpu.dot_dimension_numbers<[1], [0], [0], [1], [0, 0, 1, 1], [], []>} : vector<2x16xf32>, vector<16x64xf32>, vector<2x64xf32> -> vector<2x64xf32>
    %678 = arith.addf %676, %677 : vector<2x64xf32>
    %679 = vector.extract_strided_slice %678 {offsets = [0, 0], sizes = [2, 16], strides = [1, 1]} : vector<2x64xf32> to vector<2x16xf32>
    %680 = arith.negf %679 : vector<2x16xf32>
    %681 = math.exp %680 : vector<2x16xf32>
    %cst_171 = arith.constant 1.000000e+00 : f32
    %682 = vector.broadcast %cst_171 : f32 to vector<2x16xf32>
    %683 = arith.addf %682, %681 : vector<2x16xf32>
    %684 = arith.divf %682, %683 : vector<2x16xf32>
    %685 = vector.extract_strided_slice %678 {offsets = [0, 16], sizes = [2, 16], strides = [1, 1]} : vector<2x64xf32> to vector<2x16xf32>
    %686 = arith.negf %685 : vector<2x16xf32>
    %687 = math.exp %686 : vector<2x16xf32>
    %cst_172 = arith.constant 1.000000e+00 : f32
    %688 = vector.broadcast %cst_172 : f32 to vector<2x16xf32>
    %689 = arith.addf %688, %687 : vector<2x16xf32>
    %690 = arith.divf %688, %689 : vector<2x16xf32>
    %691 = vector.extract_strided_slice %678 {offsets = [0, 32], sizes = [2, 16], strides = [1, 1]} : vector<2x64xf32> to vector<2x16xf32>
    %692 = math.tanh %691 : vector<2x16xf32>
    %693 = vector.extract_strided_slice %678 {offsets = [0, 48], sizes = [2, 16], strides = [1, 1]} : vector<2x64xf32> to vector<2x16xf32>
    %694 = arith.negf %693 : vector<2x16xf32>
    %695 = math.exp %694 : vector<2x16xf32>
    %cst_173 = arith.constant 1.000000e+00 : f32
    %696 = vector.broadcast %cst_173 : f32 to vector<2x16xf32>
    %697 = arith.addf %696, %695 : vector<2x16xf32>
    %698 = arith.divf %696, %697 : vector<2x16xf32>
    %699 = arith.mulf %690, %672 : vector<2x16xf32>
    %700 = arith.mulf %684, %692 : vector<2x16xf32>
    %701 = arith.addf %699, %700 : vector<2x16xf32>
    %702 = math.tanh %701 : vector<2x16xf32>
    %703 = arith.mulf %698, %702 : vector<2x16xf32>
    %c12_174 = arith.constant 12 : index
    %c0_175 = arith.constant 0 : index
    %704 = vector.load %arg9[%c12_174, %c0_175] : memref<16x16xf32, #tpu.memory_space<vmem>>, vector<2x16xf32>
    tpu.vector_store %arg9[%c12_174, %c0_175], %703 {strides = array<i32>} : memref<16x16xf32, #tpu.memory_space<vmem>>, vector<2x16xf32>,
    %705 = vector.extract_strided_slice %499 {offsets = [14, 0], sizes = [2, 64], strides = [1, 1]} : vector<16x64xf32> to vector<2x64xf32>
    %cst_176 = arith.constant dense<0.000000e+00> : vector<2x64xf32>
    %706 = tpu.matmul %703, %501, %cst_176 {dimension_numbers = #tpu.dot_dimension_numbers<[1], [0], [0], [1], [0, 0, 1, 1], [], []>} : vector<2x16xf32>, vector<16x64xf32>, vector<2x64xf32> -> vector<2x64xf32>
    %707 = arith.addf %705, %706 : vector<2x64xf32>
    %708 = vector.extract_strided_slice %707 {offsets = [0, 0], sizes = [2, 16], strides = [1, 1]} : vector<2x64xf32> to vector<2x16xf32>
    %709 = arith.negf %708 : vector<2x16xf32>
    %710 = math.exp %709 : vector<2x16xf32>
    %cst_177 = arith.constant 1.000000e+00 : f32
    %711 = vector.broadcast %cst_177 : f32 to vector<2x16xf32>
    %712 = arith.addf %711, %710 : vector<2x16xf32>
    %713 = arith.divf %711, %712 : vector<2x16xf32>
    %714 = vector.extract_strided_slice %707 {offsets = [0, 16], sizes = [2, 16], strides = [1, 1]} : vector<2x64xf32> to vector<2x16xf32>
    %715 = arith.negf %714 : vector<2x16xf32>
    %716 = math.exp %715 : vector<2x16xf32>
    %cst_178 = arith.constant 1.000000e+00 : f32
    %717 = vector.broadcast %cst_178 : f32 to vector<2x16xf32>
    %718 = arith.addf %717, %716 : vector<2x16xf32>
    %719 = arith.divf %717, %718 : vector<2x16xf32>
    %720 = vector.extract_strided_slice %707 {offsets = [0, 32], sizes = [2, 16], strides = [1, 1]} : vector<2x64xf32> to vector<2x16xf32>
    %721 = math.tanh %720 : vector<2x16xf32>
    %722 = vector.extract_strided_slice %707 {offsets = [0, 48], sizes = [2, 16], strides = [1, 1]} : vector<2x64xf32> to vector<2x16xf32>
    %723 = arith.negf %722 : vector<2x16xf32>
    %724 = math.exp %723 : vector<2x16xf32>
    %cst_179 = arith.constant 1.000000e+00 : f32
    %725 = vector.broadcast %cst_179 : f32 to vector<2x16xf32>
    %726 = arith.addf %725, %724 : vector<2x16xf32>
    %727 = arith.divf %725, %726 : vector<2x16xf32>
    %728 = arith.mulf %719, %701 : vector<2x16xf32>
    %729 = arith.mulf %713, %721 : vector<2x16xf32>
    %730 = arith.addf %728, %729 : vector<2x16xf32>
    %731 = math.tanh %730 : vector<2x16xf32>
    %732 = arith.mulf %727, %731 : vector<2x16xf32>
    %c14_180 = arith.constant 14 : index
    %c0_181 = arith.constant 0 : index
    %733 = vector.load %arg9[%c14_180, %c0_181] : memref<16x16xf32, #tpu.memory_space<vmem>>, vector<2x16xf32>
    tpu.vector_store %arg9[%c14_180, %c0_181], %732 {strides = array<i32>} : memref<16x16xf32, #tpu.memory_space<vmem>>, vector<2x16xf32>,
    %c0_182 = arith.constant 0 : index
    %c0_183 = arith.constant 0 : index
    %734 = vector.load %arg9[%c0_182, %c0_183] : memref<16x16xf32, #tpu.memory_space<vmem>>, vector<16x16xf32>
    %c3 = arith.constant 3 : index
    %c0_184 = arith.constant 0 : index
    %c0_185 = arith.constant 0 : index
    %735 = vector.load %arg3[%c3, %c0_184, %c0_185] : memref<4x16x64xf32, #tpu.memory_space<vmem>>, vector<1x16x64xf32>
    %736 = vector.shape_cast %735 : vector<1x16x64xf32> to vector<16x64xf32>
    %cst_186 = arith.constant dense<0.000000e+00> : vector<16x64xf32>
    %737 = tpu.matmul %734, %736, %cst_186 {dimension_numbers = #tpu.dot_dimension_numbers<[1], [0], [0], [1], [0, 0, 1, 1], [], []>} : vector<16x16xf32>, vector<16x64xf32>, vector<16x64xf32> -> vector<16x64xf32>
    %c3_187 = arith.constant 3 : index
    %c0_188 = arith.constant 0 : index
    %c0_189 = arith.constant 0 : index
    %738 = vector.load %arg5[%c3_187, %c0_188, %c0_189] : memref<4x1x64xf32, #tpu.memory_space<vmem>>, vector<1x1x64xf32>
    %739 = vector.shape_cast %738 : vector<1x1x64xf32> to vector<1x64xf32>
    %740 = vector.broadcast %739 : vector<1x64xf32> to vector<16x64xf32>
    %741 = arith.addf %737, %740 : vector<16x64xf32>
    %c3_190 = arith.constant 3 : index
    %c0_191 = arith.constant 0 : index
    %c0_192 = arith.constant 0 : index
    %742 = vector.load %arg4[%c3_190, %c0_191, %c0_192] : memref<4x16x64xf32, #tpu.memory_space<vmem>>, vector<1x16x64xf32>
    %743 = vector.shape_cast %742 : vector<1x16x64xf32> to vector<16x64xf32>
    %744 = vector.extract_strided_slice %741 {offsets = [0, 0], sizes = [2, 64], strides = [1, 1]} : vector<16x64xf32> to vector<2x64xf32>
    %cst_193 = arith.constant dense<0.000000e+00> : vector<2x64xf32>
    %745 = tpu.matmul %490, %743, %cst_193 {dimension_numbers = #tpu.dot_dimension_numbers<[1], [0], [0], [1], [0, 0, 1, 1], [], []>} : vector<2x16xf32>, vector<16x64xf32>, vector<2x64xf32> -> vector<2x64xf32>
    %746 = arith.addf %744, %745 : vector<2x64xf32>
    %747 = vector.extract_strided_slice %746 {offsets = [0, 0], sizes = [2, 16], strides = [1, 1]} : vector<2x64xf32> to vector<2x16xf32>
    %748 = arith.negf %747 : vector<2x16xf32>
    %749 = math.exp %748 : vector<2x16xf32>
    %cst_194 = arith.constant 1.000000e+00 : f32
    %750 = vector.broadcast %cst_194 : f32 to vector<2x16xf32>
    %751 = arith.addf %750, %749 : vector<2x16xf32>
    %752 = arith.divf %750, %751 : vector<2x16xf32>
    %753 = vector.extract_strided_slice %746 {offsets = [0, 16], sizes = [2, 16], strides = [1, 1]} : vector<2x64xf32> to vector<2x16xf32>
    %754 = arith.negf %753 : vector<2x16xf32>
    %755 = math.exp %754 : vector<2x16xf32>
    %cst_195 = arith.constant 1.000000e+00 : f32
    %756 = vector.broadcast %cst_195 : f32 to vector<2x16xf32>
    %757 = arith.addf %756, %755 : vector<2x16xf32>
    %758 = arith.divf %756, %757 : vector<2x16xf32>
    %759 = vector.extract_strided_slice %746 {offsets = [0, 32], sizes = [2, 16], strides = [1, 1]} : vector<2x64xf32> to vector<2x16xf32>
    %760 = math.tanh %759 : vector<2x16xf32>
    %761 = vector.extract_strided_slice %746 {offsets = [0, 48], sizes = [2, 16], strides = [1, 1]} : vector<2x64xf32> to vector<2x16xf32>
    %762 = arith.negf %761 : vector<2x16xf32>
    %763 = math.exp %762 : vector<2x16xf32>
    %cst_196 = arith.constant 1.000000e+00 : f32
    %764 = vector.broadcast %cst_196 : f32 to vector<2x16xf32>
    %765 = arith.addf %764, %763 : vector<2x16xf32>
    %766 = arith.divf %764, %765 : vector<2x16xf32>
    %767 = arith.mulf %758, %488 : vector<2x16xf32>
    %768 = arith.mulf %752, %760 : vector<2x16xf32>
    %769 = arith.addf %767, %768 : vector<2x16xf32>
    %770 = math.tanh %769 : vector<2x16xf32>
    %771 = arith.mulf %766, %770 : vector<2x16xf32>
    %c0_197 = arith.constant 0 : index
    %c0_198 = arith.constant 0 : index
    %772 = vector.load %arg6[%c0_197, %c0_198] : memref<16x16xf32, #tpu.memory_space<vmem>>, vector<2x16xf32>
    tpu.vector_store %arg6[%c0_197, %c0_198], %771 {strides = array<i32>} : memref<16x16xf32, #tpu.memory_space<vmem>>, vector<2x16xf32>,
    %773 = vector.extract_strided_slice %741 {offsets = [2, 0], sizes = [2, 64], strides = [1, 1]} : vector<16x64xf32> to vector<2x64xf32>
    %cst_199 = arith.constant dense<0.000000e+00> : vector<2x64xf32>
    %774 = tpu.matmul %771, %743, %cst_199 {dimension_numbers = #tpu.dot_dimension_numbers<[1], [0], [0], [1], [0, 0, 1, 1], [], []>} : vector<2x16xf32>, vector<16x64xf32>, vector<2x64xf32> -> vector<2x64xf32>
    %775 = arith.addf %773, %774 : vector<2x64xf32>
    %776 = vector.extract_strided_slice %775 {offsets = [0, 0], sizes = [2, 16], strides = [1, 1]} : vector<2x64xf32> to vector<2x16xf32>
    %777 = arith.negf %776 : vector<2x16xf32>
    %778 = math.exp %777 : vector<2x16xf32>
    %cst_200 = arith.constant 1.000000e+00 : f32
    %779 = vector.broadcast %cst_200 : f32 to vector<2x16xf32>
    %780 = arith.addf %779, %778 : vector<2x16xf32>
    %781 = arith.divf %779, %780 : vector<2x16xf32>
    %782 = vector.extract_strided_slice %775 {offsets = [0, 16], sizes = [2, 16], strides = [1, 1]} : vector<2x64xf32> to vector<2x16xf32>
    %783 = arith.negf %782 : vector<2x16xf32>
    %784 = math.exp %783 : vector<2x16xf32>
    %cst_201 = arith.constant 1.000000e+00 : f32
    %785 = vector.broadcast %cst_201 : f32 to vector<2x16xf32>
    %786 = arith.addf %785, %784 : vector<2x16xf32>
    %787 = arith.divf %785, %786 : vector<2x16xf32>
    %788 = vector.extract_strided_slice %775 {offsets = [0, 32], sizes = [2, 16], strides = [1, 1]} : vector<2x64xf32> to vector<2x16xf32>
    %789 = math.tanh %788 : vector<2x16xf32>
    %790 = vector.extract_strided_slice %775 {offsets = [0, 48], sizes = [2, 16], strides = [1, 1]} : vector<2x64xf32> to vector<2x16xf32>
    %791 = arith.negf %790 : vector<2x16xf32>
    %792 = math.exp %791 : vector<2x16xf32>
    %cst_202 = arith.constant 1.000000e+00 : f32
    %793 = vector.broadcast %cst_202 : f32 to vector<2x16xf32>
    %794 = arith.addf %793, %792 : vector<2x16xf32>
    %795 = arith.divf %793, %794 : vector<2x16xf32>
    %796 = arith.mulf %787, %769 : vector<2x16xf32>
    %797 = arith.mulf %781, %789 : vector<2x16xf32>
    %798 = arith.addf %796, %797 : vector<2x16xf32>
    %799 = math.tanh %798 : vector<2x16xf32>
    %800 = arith.mulf %795, %799 : vector<2x16xf32>
    %c2_203 = arith.constant 2 : index
    %c0_204 = arith.constant 0 : index
    %801 = vector.load %arg6[%c2_203, %c0_204] : memref<16x16xf32, #tpu.memory_space<vmem>>, vector<2x16xf32>
    tpu.vector_store %arg6[%c2_203, %c0_204], %800 {strides = array<i32>} : memref<16x16xf32, #tpu.memory_space<vmem>>, vector<2x16xf32>,
    %802 = vector.extract_strided_slice %741 {offsets = [4, 0], sizes = [2, 64], strides = [1, 1]} : vector<16x64xf32> to vector<2x64xf32>
    %cst_205 = arith.constant dense<0.000000e+00> : vector<2x64xf32>
    %803 = tpu.matmul %800, %743, %cst_205 {dimension_numbers = #tpu.dot_dimension_numbers<[1], [0], [0], [1], [0, 0, 1, 1], [], []>} : vector<2x16xf32>, vector<16x64xf32>, vector<2x64xf32> -> vector<2x64xf32>
    %804 = arith.addf %802, %803 : vector<2x64xf32>
    %805 = vector.extract_strided_slice %804 {offsets = [0, 0], sizes = [2, 16], strides = [1, 1]} : vector<2x64xf32> to vector<2x16xf32>
    %806 = arith.negf %805 : vector<2x16xf32>
    %807 = math.exp %806 : vector<2x16xf32>
    %cst_206 = arith.constant 1.000000e+00 : f32
    %808 = vector.broadcast %cst_206 : f32 to vector<2x16xf32>
    %809 = arith.addf %808, %807 : vector<2x16xf32>
    %810 = arith.divf %808, %809 : vector<2x16xf32>
    %811 = vector.extract_strided_slice %804 {offsets = [0, 16], sizes = [2, 16], strides = [1, 1]} : vector<2x64xf32> to vector<2x16xf32>
    %812 = arith.negf %811 : vector<2x16xf32>
    %813 = math.exp %812 : vector<2x16xf32>
    %cst_207 = arith.constant 1.000000e+00 : f32
    %814 = vector.broadcast %cst_207 : f32 to vector<2x16xf32>
    %815 = arith.addf %814, %813 : vector<2x16xf32>
    %816 = arith.divf %814, %815 : vector<2x16xf32>
    %817 = vector.extract_strided_slice %804 {offsets = [0, 32], sizes = [2, 16], strides = [1, 1]} : vector<2x64xf32> to vector<2x16xf32>
    %818 = math.tanh %817 : vector<2x16xf32>
    %819 = vector.extract_strided_slice %804 {offsets = [0, 48], sizes = [2, 16], strides = [1, 1]} : vector<2x64xf32> to vector<2x16xf32>
    %820 = arith.negf %819 : vector<2x16xf32>
    %821 = math.exp %820 : vector<2x16xf32>
    %cst_208 = arith.constant 1.000000e+00 : f32
    %822 = vector.broadcast %cst_208 : f32 to vector<2x16xf32>
    %823 = arith.addf %822, %821 : vector<2x16xf32>
    %824 = arith.divf %822, %823 : vector<2x16xf32>
    %825 = arith.mulf %816, %798 : vector<2x16xf32>
    %826 = arith.mulf %810, %818 : vector<2x16xf32>
    %827 = arith.addf %825, %826 : vector<2x16xf32>
    %828 = math.tanh %827 : vector<2x16xf32>
    %829 = arith.mulf %824, %828 : vector<2x16xf32>
    %c4_209 = arith.constant 4 : index
    %c0_210 = arith.constant 0 : index
    %830 = vector.load %arg6[%c4_209, %c0_210] : memref<16x16xf32, #tpu.memory_space<vmem>>, vector<2x16xf32>
    tpu.vector_store %arg6[%c4_209, %c0_210], %829 {strides = array<i32>} : memref<16x16xf32, #tpu.memory_space<vmem>>, vector<2x16xf32>,
    %831 = vector.extract_strided_slice %741 {offsets = [6, 0], sizes = [2, 64], strides = [1, 1]} : vector<16x64xf32> to vector<2x64xf32>
    %cst_211 = arith.constant dense<0.000000e+00> : vector<2x64xf32>
    %832 = tpu.matmul %829, %743, %cst_211 {dimension_numbers = #tpu.dot_dimension_numbers<[1], [0], [0], [1], [0, 0, 1, 1], [], []>} : vector<2x16xf32>, vector<16x64xf32>, vector<2x64xf32> -> vector<2x64xf32>
    %833 = arith.addf %831, %832 : vector<2x64xf32>
    %834 = vector.extract_strided_slice %833 {offsets = [0, 0], sizes = [2, 16], strides = [1, 1]} : vector<2x64xf32> to vector<2x16xf32>
    %835 = arith.negf %834 : vector<2x16xf32>
    %836 = math.exp %835 : vector<2x16xf32>
    %cst_212 = arith.constant 1.000000e+00 : f32
    %837 = vector.broadcast %cst_212 : f32 to vector<2x16xf32>
    %838 = arith.addf %837, %836 : vector<2x16xf32>
    %839 = arith.divf %837, %838 : vector<2x16xf32>
    %840 = vector.extract_strided_slice %833 {offsets = [0, 16], sizes = [2, 16], strides = [1, 1]} : vector<2x64xf32> to vector<2x16xf32>
    %841 = arith.negf %840 : vector<2x16xf32>
    %842 = math.exp %841 : vector<2x16xf32>
    %cst_213 = arith.constant 1.000000e+00 : f32
    %843 = vector.broadcast %cst_213 : f32 to vector<2x16xf32>
    %844 = arith.addf %843, %842 : vector<2x16xf32>
    %845 = arith.divf %843, %844 : vector<2x16xf32>
    %846 = vector.extract_strided_slice %833 {offsets = [0, 32], sizes = [2, 16], strides = [1, 1]} : vector<2x64xf32> to vector<2x16xf32>
    %847 = math.tanh %846 : vector<2x16xf32>
    %848 = vector.extract_strided_slice %833 {offsets = [0, 48], sizes = [2, 16], strides = [1, 1]} : vector<2x64xf32> to vector<2x16xf32>
    %849 = arith.negf %848 : vector<2x16xf32>
    %850 = math.exp %849 : vector<2x16xf32>
    %cst_214 = arith.constant 1.000000e+00 : f32
    %851 = vector.broadcast %cst_214 : f32 to vector<2x16xf32>
    %852 = arith.addf %851, %850 : vector<2x16xf32>
    %853 = arith.divf %851, %852 : vector<2x16xf32>
    %854 = arith.mulf %845, %827 : vector<2x16xf32>
    %855 = arith.mulf %839, %847 : vector<2x16xf32>
    %856 = arith.addf %854, %855 : vector<2x16xf32>
    %857 = math.tanh %856 : vector<2x16xf32>
    %858 = arith.mulf %853, %857 : vector<2x16xf32>
    %c6_215 = arith.constant 6 : index
    %c0_216 = arith.constant 0 : index
    %859 = vector.load %arg6[%c6_215, %c0_216] : memref<16x16xf32, #tpu.memory_space<vmem>>, vector<2x16xf32>
    tpu.vector_store %arg6[%c6_215, %c0_216], %858 {strides = array<i32>} : memref<16x16xf32, #tpu.memory_space<vmem>>, vector<2x16xf32>,
    %860 = vector.extract_strided_slice %741 {offsets = [8, 0], sizes = [2, 64], strides = [1, 1]} : vector<16x64xf32> to vector<2x64xf32>
    %cst_217 = arith.constant dense<0.000000e+00> : vector<2x64xf32>
    %861 = tpu.matmul %858, %743, %cst_217 {dimension_numbers = #tpu.dot_dimension_numbers<[1], [0], [0], [1], [0, 0, 1, 1], [], []>} : vector<2x16xf32>, vector<16x64xf32>, vector<2x64xf32> -> vector<2x64xf32>
    %862 = arith.addf %860, %861 : vector<2x64xf32>
    %863 = vector.extract_strided_slice %862 {offsets = [0, 0], sizes = [2, 16], strides = [1, 1]} : vector<2x64xf32> to vector<2x16xf32>
    %864 = arith.negf %863 : vector<2x16xf32>
    %865 = math.exp %864 : vector<2x16xf32>
    %cst_218 = arith.constant 1.000000e+00 : f32
    %866 = vector.broadcast %cst_218 : f32 to vector<2x16xf32>
    %867 = arith.addf %866, %865 : vector<2x16xf32>
    %868 = arith.divf %866, %867 : vector<2x16xf32>
    %869 = vector.extract_strided_slice %862 {offsets = [0, 16], sizes = [2, 16], strides = [1, 1]} : vector<2x64xf32> to vector<2x16xf32>
    %870 = arith.negf %869 : vector<2x16xf32>
    %871 = math.exp %870 : vector<2x16xf32>
    %cst_219 = arith.constant 1.000000e+00 : f32
    %872 = vector.broadcast %cst_219 : f32 to vector<2x16xf32>
    %873 = arith.addf %872, %871 : vector<2x16xf32>
    %874 = arith.divf %872, %873 : vector<2x16xf32>
    %875 = vector.extract_strided_slice %862 {offsets = [0, 32], sizes = [2, 16], strides = [1, 1]} : vector<2x64xf32> to vector<2x16xf32>
    %876 = math.tanh %875 : vector<2x16xf32>
    %877 = vector.extract_strided_slice %862 {offsets = [0, 48], sizes = [2, 16], strides = [1, 1]} : vector<2x64xf32> to vector<2x16xf32>
    %878 = arith.negf %877 : vector<2x16xf32>
    %879 = math.exp %878 : vector<2x16xf32>
    %cst_220 = arith.constant 1.000000e+00 : f32
    %880 = vector.broadcast %cst_220 : f32 to vector<2x16xf32>
    %881 = arith.addf %880, %879 : vector<2x16xf32>
    %882 = arith.divf %880, %881 : vector<2x16xf32>
    %883 = arith.mulf %874, %856 : vector<2x16xf32>
    %884 = arith.mulf %868, %876 : vector<2x16xf32>
    %885 = arith.addf %883, %884 : vector<2x16xf32>
    %886 = math.tanh %885 : vector<2x16xf32>
    %887 = arith.mulf %882, %886 : vector<2x16xf32>
    %c8_221 = arith.constant 8 : index
    %c0_222 = arith.constant 0 : index
    %888 = vector.load %arg6[%c8_221, %c0_222] : memref<16x16xf32, #tpu.memory_space<vmem>>, vector<2x16xf32>
    tpu.vector_store %arg6[%c8_221, %c0_222], %887 {strides = array<i32>} : memref<16x16xf32, #tpu.memory_space<vmem>>, vector<2x16xf32>,
    %889 = vector.extract_strided_slice %741 {offsets = [10, 0], sizes = [2, 64], strides = [1, 1]} : vector<16x64xf32> to vector<2x64xf32>
    %cst_223 = arith.constant dense<0.000000e+00> : vector<2x64xf32>
    %890 = tpu.matmul %887, %743, %cst_223 {dimension_numbers = #tpu.dot_dimension_numbers<[1], [0], [0], [1], [0, 0, 1, 1], [], []>} : vector<2x16xf32>, vector<16x64xf32>, vector<2x64xf32> -> vector<2x64xf32>
    %891 = arith.addf %889, %890 : vector<2x64xf32>
    %892 = vector.extract_strided_slice %891 {offsets = [0, 0], sizes = [2, 16], strides = [1, 1]} : vector<2x64xf32> to vector<2x16xf32>
    %893 = arith.negf %892 : vector<2x16xf32>
    %894 = math.exp %893 : vector<2x16xf32>
    %cst_224 = arith.constant 1.000000e+00 : f32
    %895 = vector.broadcast %cst_224 : f32 to vector<2x16xf32>
    %896 = arith.addf %895, %894 : vector<2x16xf32>
    %897 = arith.divf %895, %896 : vector<2x16xf32>
    %898 = vector.extract_strided_slice %891 {offsets = [0, 16], sizes = [2, 16], strides = [1, 1]} : vector<2x64xf32> to vector<2x16xf32>
    %899 = arith.negf %898 : vector<2x16xf32>
    %900 = math.exp %899 : vector<2x16xf32>
    %cst_225 = arith.constant 1.000000e+00 : f32
    %901 = vector.broadcast %cst_225 : f32 to vector<2x16xf32>
    %902 = arith.addf %901, %900 : vector<2x16xf32>
    %903 = arith.divf %901, %902 : vector<2x16xf32>
    %904 = vector.extract_strided_slice %891 {offsets = [0, 32], sizes = [2, 16], strides = [1, 1]} : vector<2x64xf32> to vector<2x16xf32>
    %905 = math.tanh %904 : vector<2x16xf32>
    %906 = vector.extract_strided_slice %891 {offsets = [0, 48], sizes = [2, 16], strides = [1, 1]} : vector<2x64xf32> to vector<2x16xf32>
    %907 = arith.negf %906 : vector<2x16xf32>
    %908 = math.exp %907 : vector<2x16xf32>
    %cst_226 = arith.constant 1.000000e+00 : f32
    %909 = vector.broadcast %cst_226 : f32 to vector<2x16xf32>
    %910 = arith.addf %909, %908 : vector<2x16xf32>
    %911 = arith.divf %909, %910 : vector<2x16xf32>
    %912 = arith.mulf %903, %885 : vector<2x16xf32>
    %913 = arith.mulf %897, %905 : vector<2x16xf32>
    %914 = arith.addf %912, %913 : vector<2x16xf32>
    %915 = math.tanh %914 : vector<2x16xf32>
    %916 = arith.mulf %911, %915 : vector<2x16xf32>
    %c10_227 = arith.constant 10 : index
    %c0_228 = arith.constant 0 : index
    %917 = vector.load %arg6[%c10_227, %c0_228] : memref<16x16xf32, #tpu.memory_space<vmem>>, vector<2x16xf32>
    tpu.vector_store %arg6[%c10_227, %c0_228], %916 {strides = array<i32>} : memref<16x16xf32, #tpu.memory_space<vmem>>, vector<2x16xf32>,
    %918 = vector.extract_strided_slice %741 {offsets = [12, 0], sizes = [2, 64], strides = [1, 1]} : vector<16x64xf32> to vector<2x64xf32>
    %cst_229 = arith.constant dense<0.000000e+00> : vector<2x64xf32>
    %919 = tpu.matmul %916, %743, %cst_229 {dimension_numbers = #tpu.dot_dimension_numbers<[1], [0], [0], [1], [0, 0, 1, 1], [], []>} : vector<2x16xf32>, vector<16x64xf32>, vector<2x64xf32> -> vector<2x64xf32>
    %920 = arith.addf %918, %919 : vector<2x64xf32>
    %921 = vector.extract_strided_slice %920 {offsets = [0, 0], sizes = [2, 16], strides = [1, 1]} : vector<2x64xf32> to vector<2x16xf32>
    %922 = arith.negf %921 : vector<2x16xf32>
    %923 = math.exp %922 : vector<2x16xf32>
    %cst_230 = arith.constant 1.000000e+00 : f32
    %924 = vector.broadcast %cst_230 : f32 to vector<2x16xf32>
    %925 = arith.addf %924, %923 : vector<2x16xf32>
    %926 = arith.divf %924, %925 : vector<2x16xf32>
    %927 = vector.extract_strided_slice %920 {offsets = [0, 16], sizes = [2, 16], strides = [1, 1]} : vector<2x64xf32> to vector<2x16xf32>
    %928 = arith.negf %927 : vector<2x16xf32>
    %929 = math.exp %928 : vector<2x16xf32>
    %cst_231 = arith.constant 1.000000e+00 : f32
    %930 = vector.broadcast %cst_231 : f32 to vector<2x16xf32>
    %931 = arith.addf %930, %929 : vector<2x16xf32>
    %932 = arith.divf %930, %931 : vector<2x16xf32>
    %933 = vector.extract_strided_slice %920 {offsets = [0, 32], sizes = [2, 16], strides = [1, 1]} : vector<2x64xf32> to vector<2x16xf32>
    %934 = math.tanh %933 : vector<2x16xf32>
    %935 = vector.extract_strided_slice %920 {offsets = [0, 48], sizes = [2, 16], strides = [1, 1]} : vector<2x64xf32> to vector<2x16xf32>
    %936 = arith.negf %935 : vector<2x16xf32>
    %937 = math.exp %936 : vector<2x16xf32>
    %cst_232 = arith.constant 1.000000e+00 : f32
    %938 = vector.broadcast %cst_232 : f32 to vector<2x16xf32>
    %939 = arith.addf %938, %937 : vector<2x16xf32>
    %940 = arith.divf %938, %939 : vector<2x16xf32>
    %941 = arith.mulf %932, %914 : vector<2x16xf32>
    %942 = arith.mulf %926, %934 : vector<2x16xf32>
    %943 = arith.addf %941, %942 : vector<2x16xf32>
    %944 = math.tanh %943 : vector<2x16xf32>
    %945 = arith.mulf %940, %944 : vector<2x16xf32>
    %c12_233 = arith.constant 12 : index
    %c0_234 = arith.constant 0 : index
    %946 = vector.load %arg6[%c12_233, %c0_234] : memref<16x16xf32, #tpu.memory_space<vmem>>, vector<2x16xf32>
    tpu.vector_store %arg6[%c12_233, %c0_234], %945 {strides = array<i32>} : memref<16x16xf32, #tpu.memory_space<vmem>>, vector<2x16xf32>,
    %947 = vector.extract_strided_slice %741 {offsets = [14, 0], sizes = [2, 64], strides = [1, 1]} : vector<16x64xf32> to vector<2x64xf32>
    %cst_235 = arith.constant dense<0.000000e+00> : vector<2x64xf32>
    %948 = tpu.matmul %945, %743, %cst_235 {dimension_numbers = #tpu.dot_dimension_numbers<[1], [0], [0], [1], [0, 0, 1, 1], [], []>} : vector<2x16xf32>, vector<16x64xf32>, vector<2x64xf32> -> vector<2x64xf32>
    %949 = arith.addf %947, %948 : vector<2x64xf32>
    %950 = vector.extract_strided_slice %949 {offsets = [0, 0], sizes = [2, 16], strides = [1, 1]} : vector<2x64xf32> to vector<2x16xf32>
    %951 = arith.negf %950 : vector<2x16xf32>
    %952 = math.exp %951 : vector<2x16xf32>
    %cst_236 = arith.constant 1.000000e+00 : f32
    %953 = vector.broadcast %cst_236 : f32 to vector<2x16xf32>
    %954 = arith.addf %953, %952 : vector<2x16xf32>
    %955 = arith.divf %953, %954 : vector<2x16xf32>
    %956 = vector.extract_strided_slice %949 {offsets = [0, 16], sizes = [2, 16], strides = [1, 1]} : vector<2x64xf32> to vector<2x16xf32>
    %957 = arith.negf %956 : vector<2x16xf32>
    %958 = math.exp %957 : vector<2x16xf32>
    %cst_237 = arith.constant 1.000000e+00 : f32
    %959 = vector.broadcast %cst_237 : f32 to vector<2x16xf32>
    %960 = arith.addf %959, %958 : vector<2x16xf32>
    %961 = arith.divf %959, %960 : vector<2x16xf32>
    %962 = vector.extract_strided_slice %949 {offsets = [0, 32], sizes = [2, 16], strides = [1, 1]} : vector<2x64xf32> to vector<2x16xf32>
    %963 = math.tanh %962 : vector<2x16xf32>
    %964 = vector.extract_strided_slice %949 {offsets = [0, 48], sizes = [2, 16], strides = [1, 1]} : vector<2x64xf32> to vector<2x16xf32>
    %965 = arith.negf %964 : vector<2x16xf32>
    %966 = math.exp %965 : vector<2x16xf32>
    %cst_238 = arith.constant 1.000000e+00 : f32
    %967 = vector.broadcast %cst_238 : f32 to vector<2x16xf32>
    %968 = arith.addf %967, %966 : vector<2x16xf32>
    %969 = arith.divf %967, %968 : vector<2x16xf32>
    %970 = arith.mulf %961, %943 : vector<2x16xf32>
    %971 = arith.mulf %955, %963 : vector<2x16xf32>
    %972 = arith.addf %970, %971 : vector<2x16xf32>
    %973 = math.tanh %972 : vector<2x16xf32>
    %974 = arith.mulf %969, %973 : vector<2x16xf32>
    %c14_239 = arith.constant 14 : index
    %c0_240 = arith.constant 0 : index
    %975 = vector.load %arg6[%c14_239, %c0_240] : memref<16x16xf32, #tpu.memory_space<vmem>>, vector<2x16xf32>
    tpu.vector_store %arg6[%c14_239, %c0_240], %974 {strides = array<i32>} : memref<16x16xf32, #tpu.memory_space<vmem>>, vector<2x16xf32>,
    %c0_241 = arith.constant 0 : index
    %c0_242 = arith.constant 0 : index
    %c0_243 = arith.constant 0 : index
    %976 = vector.load %arg7[%c0_241, %c0_242, %c0_243] : memref<2x2x16xf32, #tpu.memory_space<vmem>>, vector<1x2x16xf32>
    %977 = vector.shape_cast %976 : vector<1x2x16xf32> to vector<2x16xf32>
    %978 = vector.shape_cast %244 : vector<2x16xf32> to vector<1x2x16xf32>
    tpu.vector_store %arg7[%c0_241, %c0_242, %c0_243], %978 {strides = array<i32>} : memref<2x2x16xf32, #tpu.memory_space<vmem>>, vector<1x2x16xf32>,
    %c0_244 = arith.constant 0 : index
    %c0_245 = arith.constant 0 : index
    %c0_246 = arith.constant 0 : index
    %979 = vector.load %arg8[%c0_244, %c0_245, %c0_246] : memref<2x2x16xf32, #tpu.memory_space<vmem>>, vector<1x2x16xf32>
    %980 = vector.shape_cast %979 : vector<1x2x16xf32> to vector<2x16xf32>
    %981 = vector.shape_cast %242 : vector<2x16xf32> to vector<1x2x16xf32>
    tpu.vector_store %arg8[%c0_244, %c0_245, %c0_246], %981 {strides = array<i32>} : memref<2x2x16xf32, #tpu.memory_space<vmem>>, vector<1x2x16xf32>,
    %c1_247 = arith.constant 1 : index
    %c0_248 = arith.constant 0 : index
    %c0_249 = arith.constant 0 : index
    %982 = vector.load %arg7[%c1_247, %c0_248, %c0_249] : memref<2x2x16xf32, #tpu.memory_space<vmem>>, vector<1x2x16xf32>
    %983 = vector.shape_cast %982 : vector<1x2x16xf32> to vector<2x16xf32>
    %984 = vector.shape_cast %490 : vector<2x16xf32> to vector<1x2x16xf32>
    tpu.vector_store %arg7[%c1_247, %c0_248, %c0_249], %984 {strides = array<i32>} : memref<2x2x16xf32, #tpu.memory_space<vmem>>, vector<1x2x16xf32>,
    %c1_250 = arith.constant 1 : index
    %c0_251 = arith.constant 0 : index
    %c0_252 = arith.constant 0 : index
    %985 = vector.load %arg8[%c1_250, %c0_251, %c0_252] : memref<2x2x16xf32, #tpu.memory_space<vmem>>, vector<1x2x16xf32>
    %986 = vector.shape_cast %985 : vector<1x2x16xf32> to vector<2x16xf32>
    %987 = vector.shape_cast %488 : vector<2x16xf32> to vector<1x2x16xf32>
    tpu.vector_store %arg8[%c1_250, %c0_251, %c0_252], %987 {strides = array<i32>} : memref<2x2x16xf32, #tpu.memory_space<vmem>>, vector<1x2x16xf32>,
    return
  }
}

</mosaic_0001>

<llo_original>
// kernel: rvc_forward.1
$region0: #{rvc_forward.1}
  #allocation0 [shape = 'u32[]', space=smem, size = 0x4, offset = 0x4, fixed_abs, tag = 'smem constant byte address 0x4 - core index']
  #allocation1 [shape = 'u32[144,128]{1,0:T(1,128)}', space=vmem, size = 0x12000, scoped, tag = 'internal scratch']
  #allocation2 [shape = 'f32[16,16]{1,0:T(8,128)}', space=vmem, size = 0x2000, scoped, tag = 'scratch operand']
  %s0 = inlined_call_operand.vmem [shape: f32[16,16], index: 0, kind: input, shape index: {}]
  %s1 = inlined_call_operand.vmem [shape: f32[2,2,16], index: 1, kind: input, shape index: {}]
  %s2 = inlined_call_operand.vmem [shape: f32[2,2,16], index: 2, kind: input, shape index: {}]
  %s3 = inlined_call_operand.hbm [shape: f32[4,16,64], index: 3, kind: input, shape index: {}]
  %s4 = inlined_call_operand.hbm [shape: f32[4,16,64], index: 4, kind: input, shape index: {}]
  %s5 = inlined_call_operand.vmem [shape: f32[4,1,64], index: 5, kind: input, shape index: {}]
  %s6 = inlined_call_operand.vmem [shape: f32[16,16], index: 6, kind: output, shape index: {0}]
  %s7 = inlined_call_operand.hbm [shape: f32[2,2,16], index: 7, kind: output, shape index: {1}]
  %s8 = inlined_call_operand.hbm [shape: f32[2,2,16], index: 8, kind: output, shape index: {2}]
  %9 = xla_tuple %s6, %s7, %s8
  %s10 = sld [smem:[#allocation0]]
  $region58: #{rvc_forward.1} parent=0
    _
  %s12 = ssub.s32 1, %s10
  %s13 = scalar_select 0, %s12, %s10
  $region1: #{rvc_forward.1} parent=0
    #allocation3 [shape = 'u8[32768]{0}', space=vmem, size = 0x8000, scoped, tag = 'input window, operand 3, single buffered']
    #allocation4 [shape = 's32[1]{0}', space=sflag, size = 0x4, scoped, tag = 'scoped memory for rvc_forward.1']
    #allocation5 [shape = 's32[1]{0}', space=sflag, size = 0x4, scoped, tag = 'scoped memory for rvc_forward.1']
    #allocation6 [shape = 'u8[32768]{0}', space=vmem, size = 0x8000, scoped, tag = 'input window, operand 4, single buffered']
    #allocation7 [shape = 's32[1]{0}', space=sflag, size = 0x4, scoped, tag = 'scoped memory for rvc_forward.1']
    #allocation8 [shape = 'u8[2048]{0}', space=vmem, size = 0x800, scoped, tag = 'output window, operand 1, single buffered']
    #allocation9 [shape = 'u8[2048]{0}', space=vmem, size = 0x800, scoped, tag = 'output window, operand 2, single buffered']
    #allocation10 [shape = 's32[1]{0}', space=sflag, size = 0x4, scoped, tag = 'scoped memory for rvc_forward.1']
    %14 = vsyncpa [#allocation4], 0
    %15 = vsyncpa [#allocation7], 0
    %16 = vsyncpa [#allocation5], 0
    %17 = vsyncpa [#allocation10], 0
    // Predicated region
    $region2: #{rvc_forward.1} parent=1 // pred_check
      _
    $region3: #{rvc_forward.1} parent=1 // pred_check_branch
      %19 = sbr.rel (0) target = $region5
    $region4: #{rvc_forward.1} parent=1 // pred_region
      _
    $region5: #{rvc_forward.1} parent=1 // pred_fallthru
      _
    // Predicated region
    $region6: #{rvc_forward.1} parent=1 // pred_check
      _
    $region7: #{rvc_forward.1} parent=1 // pred_check_branch
      %21 = sbr.rel (0) target = $region9
    $region8: #{rvc_forward.1} parent=1 // pred_region
      _
    $region9: #{rvc_forward.1} parent=1 // pred_fallthru
      _
    // Predicated region
    $region10: #{rvc_forward.1} parent=1 // pred_check
      _
    $region11: #{rvc_forward.1} parent=1 // pred_check_branch
      %23 = sbr.rel (0) target = $region13
    $region12: #{rvc_forward.1} parent=1 // pred_region
      _
    $region13: #{rvc_forward.1} parent=1 // pred_fallthru
      _
    // Predicated region
    $region14: #{rvc_forward.1} parent=1 // pred_check
      _
    $region15: #{rvc_forward.1} parent=1 // pred_check_branch
      %25 = sbr.rel (0) target = $region17
    $region16: #{rvc_forward.1} parent=1 // pred_region
      %s27 = ssub.s32 1024, 1024
      %28 = vsyncadd [#allocation4], %s27
      %s29 = sshll.u32 [#allocation3], 4
      %s30 = int_to_ptr.vmem [resolvable:$true] %s29
      %35 = dma.hbm_to_vmem [thread:$0]  %s3, 1024, %s30, [#allocation4], 128, 128, 8
    $region17: #{rvc_forward.1} parent=1 // pred_fallthru
      _
    // Predicated region
    $region18: #{rvc_forward.1} parent=1 // pred_check
      _
    $region19: #{rvc_forward.1} parent=1 // pred_check_branch
      %37 = sbr.rel (0) target = $region21
    $region20: #{rvc_forward.1} parent=1 // pred_region
      %s39 = ssub.s32 1024, 1024
      %40 = vsyncadd [#allocation7], %s39
      %s41 = sshll.u32 [#allocation6], 4
      %s42 = int_to_ptr.vmem [resolvable:$true] %s41
      %47 = dma.hbm_to_vmem [thread:$0]  %s4, 1024, %s42, [#allocation7], 128, 128, 8
    $region21: #{rvc_forward.1} parent=1 // pred_fallthru
      _
    // Predicated region
    $region22: #{rvc_forward.1} parent=1 // pred_check
      _
    $region23: #{rvc_forward.1} parent=1 // pred_check_branch
      %49 = sbr.rel (0) target = $region25
    $region24: #{rvc_forward.1} parent=1 // pred_region
      _
    $region25: #{rvc_forward.1} parent=1 // pred_fallthru
      _
    // Predicated region
    $region26: #{rvc_forward.1} parent=1 // pred_check
      _
    $region27: #{rvc_forward.1} parent=1 // pred_check_branch
      %51 = sbr.rel (0) target = $region29
    $region28: #{rvc_forward.1} parent=1 // pred_region
      %52 = dma.done [#allocation4], 1024
    $region29: #{rvc_forward.1} parent=1 // pred_fallthru
      _
    // Predicated region
    $region30: #{rvc_forward.1} parent=1 // pred_check
      _
    $region31: #{rvc_forward.1} parent=1 // pred_check_branch
      %54 = sbr.rel (0) target = $region33
    $region32: #{rvc_forward.1} parent=1 // pred_region
      %55 = dma.done [#allocation7], 1024
    $region33: #{rvc_forward.1} parent=1 // pred_fallthru
      _
    %v56 = vld [vmem:[%s0] sm:$0xff]
    %v57 = vld [vmem:[%s0 + $0x8] sm:$0xff]
    %v58 = vld [vmem:[%s1] sm:$0x3]
    %v59 = vld [vmem:[%s2] sm:$0x3]
    %v60 = vld [vmem:[#allocation3] sm:$0xff]
    %v61 = vld [vmem:[#allocation3 + $0x8] sm:$0xff]
    %v62 = vld [vmem:[%s5] sm:$0x1]
    %v64 = vlaneseq
    %v65 = vshrl.u32 %v64, 7
    %v66 = vsub.s32 0, %v65
    %v67 = vrot.slane %v62, %v66
    %vm69 = vcmask 130048
    %v71 = vsel %vm69, %v56, 0
    %v74 = vsel %vm69, %v57, 0
    %76 = vmatprep.subr.mxu0 0.0
    %77 = vmatpush1.msra.mxu0 %v60
    %78 = vmatprep.subr.mxu0 0.0
    %79 = vmatpush1.msra.mxu0 %v61
    %80 = vmatprep.subr.mxu0 0.0
    %81 = vmatpush1.msra.mxu0 0.0
    %82 = vmatprep.subr.mxu0 0.0
    %83 = vmatpush1.msra.mxu0 0.0
    %84 = vmatprep.subr.mxu0 0.0
    %85 = vmatpush1.msra.mxu0 0.0
    %86 = vmatprep.subr.mxu0 0.0
    %87 = vmatpush1.msra.mxu0 0.0
    %88 = vmatprep.subr.mxu0 0.0
    %89 = vmatpush1.msra.mxu0 0.0
    %90 = vmatprep.subr.mxu0 0.0
    %91 = vmatpush1.msra.mxu0 0.0
    %92 = vmatprep.subr.mxu0 0.0
    %93 = vmatpush1.msra.mxu0 0.0
    %94 = vmatprep.subr.mxu0 0.0
    %95 = vmatpush1.msra.mxu0 0.0
    %96 = vmatprep.subr.mxu0 0.0
    %97 = vmatpush1.msra.mxu0 0.0
    %98 = vmatprep.subr.mxu0 0.0
    %99 = vmatpush1.msra.mxu0 0.0
    %100 = vmatprep.subr.mxu0 0.0
    %101 = vmatpush1.msra.mxu0 0.0
    %102 = vmatprep.subr.mxu0 0.0
    %103 = vmatpush1.msra.mxu0 0.0
    %104 = vmatprep.subr.mxu0 0.0
    %105 = vmatpush1.msra.mxu0 0.0
    %106 = vmatprep.subr.mxu0 0.0
    %107 = vmatpush1.msra.mxu0 0.0
    %108 = vmatprep.subr.mxu0 0.0
    %109 = vmatpush1.msra.mxu0 0.0
    %110 = vmatprep.subr.mxu0 0.0
    %111 = vmatpush1.msra.mxu0 0.0
    %112 = vmatprep.subr.mxu0 0.0
    %113 = vmatpush1.msra.mxu0 0.0
    %114 = vmatprep.subr.mxu0 0.0
    %115 = vmatpush1.msra.mxu0 0.0
    %116 = vmatprep.subr.mxu0 0.0
    %117 = vmatpush1.msra.mxu0 0.0
    %118 = vmatprep.subr.mxu0 0.0
    %119 = vmatpush1.msra.mxu0 0.0
    %120 = vmatprep.subr.mxu0 0.0
    %121 = vmatpush1.msra.mxu0 0.0
    %122 = vmatprep.subr.mxu0 0.0
    %123 = vmatpush1.msra.mxu0 0.0
    %124 = vmatprep.subr.mxu0 0.0
    %125 = vmatpush1.msra.mxu0 0.0
    %126 = vmatprep.subr.mxu0 0.0
    %127 = vmatpush1.msra.mxu0 0.0
    %128 = vmatprep.subr.mxu0 0.0
    %129 = vmatpush1.msra.mxu0 0.0
    %130 = vmatprep.subr.mxu0 0.0
    %131 = vmatpush1.msra.mxu0 0.0
    %132 = vmatprep.subr.mxu0 0.0
    %133 = vmatpush1.msra.mxu0 0.0
    %134 = vmatprep.subr.mxu0 0.0
    %135 = vmatpush1.msra.mxu0 0.0
    %136 = vmatprep.subr.mxu0 0.0
    %137 = vmatpush1.msra.mxu0 0.0
    %138 = vmatprep.subr.mxu0 0.0
    %139 = vmatpush1.msra.mxu0 0.0
    %140 = vmatprep.mubr.f32.mxu0 0.0
    %141 = vmatmul.mubr.f32.gmra.mrb[0].mxu0 %v71
    %v142 = vpop.f32.mrb[0].mxu0
    %v143 = vadd.f32 %v67, %v142
    %v144 = vpop.f32.mrb[0].mxu0
    %145 = vmatprep.mubr.f32.mxu0 0.0
    %146 = vmatmul.mubr.f32.gmra.mrb[0].mxu0 %v74
    %v147 = vpop.f32.mrb[0].mxu0
    %v148 = vadd.f32 %v67, %v147
    %v149 = vpop.f32.mrb[0].mxu0
    %150 = vdwg.mxu0
    %v151 = vld [vmem:[#allocation6] sm:$0xff]
    %v152 = vld [vmem:[#allocation6 + $0x8] sm:$0xff]
    %v154 = vsel %vm69, %v58, 0
    %156 = vmatprep.subr.mxu0 0.0
    %157 = vmatpush1.msra.mxu0 %v151
    %158 = vmatprep.subr.mxu0 0.0
    %159 = vmatpush1.msra.mxu0 %v152
    %160 = vmatprep.subr.mxu0 0.0
    %161 = vmatpush1.msra.mxu0 0.0
    %162 = vmatprep.subr.mxu0 0.0
    %163 = vmatpush1.msra.mxu0 0.0
    %164 = vmatprep.subr.mxu0 0.0
    %165 = vmatpush1.msra.mxu0 0.0
    %166 = vmatprep.subr.mxu0 0.0
    %167 = vmatpush1.msra.mxu0 0.0
    %168 = vmatprep.subr.mxu0 0.0
    %169 = vmatpush1.msra.mxu0 0.0
    %170 = vmatprep.subr.mxu0 0.0
    %171 = vmatpush1.msra.mxu0 0.0
    %172 = vmatprep.subr.mxu0 0.0
    %173 = vmatpush1.msra.mxu0 0.0
    %174 = vmatprep.subr.mxu0 0.0
    %175 = vmatpush1.msra.mxu0 0.0
    %176 = vmatprep.subr.mxu0 0.0
    %177 = vmatpush1.msra.mxu0 0.0
    %178 = vmatprep.subr.mxu0 0.0
    %179 = vmatpush1.msra.mxu0 0.0
    %180 = vmatprep.subr.mxu0 0.0
    %181 = vmatpush1.msra.mxu0 0.0
    %182 = vmatprep.subr.mxu0 0.0
    %183 = vmatpush1.msra.mxu0 0.0
    %184 = vmatprep.subr.mxu0 0.0
    %185 = vmatpush1.msra.mxu0 0.0
    %186 = vmatprep.subr.mxu0 0.0
    %187 = vmatpush1.msra.mxu0 0.0
    %188 = vmatprep.subr.mxu0 0.0
    %189 = vmatpush1.msra.mxu0 0.0
    %190 = vmatprep.subr.mxu0 0.0
    %191 = vmatpush1.msra.mxu0 0.0
    %192 = vmatprep.subr.mxu0 0.0
    %193 = vmatpush1.msra.mxu0 0.0
    %194 = vmatprep.subr.mxu0 0.0
    %195 = vmatpush1.msra.mxu0 0.0
    %196 = vmatprep.subr.mxu0 0.0
    %197 = vmatpush1.msra.mxu0 0.0
    %198 = vmatprep.subr.mxu0 0.0
    %199 = vmatpush1.msra.mxu0 0.0
    %200 = vmatprep.subr.mxu0 0.0
    %201 = vmatpush1.msra.mxu0 0.0
    %202 = vmatprep.subr.mxu0 0.0
    %203 = vmatpush1.msra.mxu0 0.0
    %204 = vmatprep.subr.mxu0 0.0
    %205 = vmatpush1.msra.mxu0 0.0
    %206 = vmatprep.subr.mxu0 0.0
    %207 = vmatpush1.msra.mxu0 0.0
    %208 = vmatprep.subr.mxu0 0.0
    %209 = vmatpush1.msra.mxu0 0.0
    %210 = vmatprep.subr.mxu0 0.0
    %211 = vmatpush1.msra.mxu0 0.0
    %212 = vmatprep.subr.mxu0 0.0
    %213 = vmatpush1.msra.mxu0 0.0
    %214 = vmatprep.subr.mxu0 0.0
    %215 = vmatpush1.msra.mxu0 0.0
    %216 = vmatprep.subr.mxu0 0.0
    %217 = vmatpush1.msra.mxu0 0.0
    %218 = vmatprep.subr.mxu0 0.0
    %219 = vmatpush1.msra.mxu0 0.0
    %220 = vmatprep.mubr.f32.mxu0 0.0
    %221 = vmatmul.mubr.f32.gmra.mrb[0].mxu0 %v154
    %v222 = vpop.f32.mrb[0].mxu0
    %v223 = vadd.f32 0.0, %v222
    %v224 = vpop.f32.mrb[0].mxu0
    %225 = vdwg.mxu0
    %v226 = vadd.f32 %v143, %v223
    %v227 = vxor.u32 %v226, 2147483648
    %v228 = vmul.f32 %v227, 1.442695
    %v229 = vpow.pop %v228
    %v230 = vadd.f32 %v229, 1.0
    %v231 = vrcp.pop %v230
    %v232 = vmul.f32 1.0, %v231
    %v233 = vtanh.pop %v226
    %235 = vrot.lane.b32.xlu0 %v59, 16
    %v236 = vpop.permute.xlu0 %235
    %v238 = vmul.f32 %v232, %v236
    %240 = vrot.lane.b32.xlu0 %v233, 96
    %v241 = vpop.permute.xlu0 %240
    %v243 = vmul.f32 %v232, %v241
    %245 = vrot.lane.b32.xlu0 %v243, 16
    %v246 = vpop.permute.xlu0 %245
    %v248 = vadd.f32 %v238, %v246
    %v249 = vtanh.pop %v248
    %251 = vrot.lane.b32.xlu0 %v249, 32
    %v252 = vpop.permute.xlu0 %251
    %v254 = vmul.f32 %v232, %v252
    %256 = vrot.lane.b32.xlu0 %v254, 80
    %v257 = vpop.permute.xlu0 %256
    %vm259 = vcmask 123904
    %260 = vst.msk [vmem:[#allocation2] sm:$0x3] %vm259, %v257
    %v261 = vsel %vm69, %v257, 0
    %263 = vmatprep.subr.mxu0 0.0
    %264 = vmatpush1.msra.mxu0 %v151
    %265 = vmatprep.subr.mxu0 0.0
    %266 = vmatpush1.msra.mxu0 %v152
    %267 = vmatprep.subr.mxu0 0.0
    %268 = vmatpush1.msra.mxu0 0.0
    %269 = vmatprep.subr.mxu0 0.0
    %270 = vmatpush1.msra.mxu0 0.0
    %271 = vmatprep.subr.mxu0 0.0
    %272 = vmatpush1.msra.mxu0 0.0
    %273 = vmatprep.subr.mxu0 0.0
    %274 = vmatpush1.msra.mxu0 0.0
    %275 = vmatprep.subr.mxu0 0.0
    %276 = vmatpush1.msra.mxu0 0.0
    %277 = vmatprep.subr.mxu0 0.0
    %278 = vmatpush1.msra.mxu0 0.0
    %279 = vmatprep.subr.mxu0 0.0
    %280 = vmatpush1.msra.mxu0 0.0
    %281 = vmatprep.subr.mxu0 0.0
    %282 = vmatpush1.msra.mxu0 0.0
    %283 = vmatprep.subr.mxu0 0.0
    %284 = vmatpush1.msra.mxu0 0.0
    %285 = vmatprep.subr.mxu0 0.0
    %286 = vmatpush1.msra.mxu0 0.0
    %287 = vmatprep.subr.mxu0 0.0
    %288 = vmatpush1.msra.mxu0 0.0
    %289 = vmatprep.subr.mxu0 0.0
    %290 = vmatpush1.msra.mxu0 0.0
    %291 = vmatprep.subr.mxu0 0.0
    %292 = vmatpush1.msra.mxu0 0.0
    %293 = vmatprep.subr.mxu0 0.0
    %294 = vmatpush1.msra.mxu0 0.0
    %295 = vmatprep.subr.mxu0 0.0
    %296 = vmatpush1.msra.mxu0 0.0
    %297 = vmatprep.subr.mxu0 0.0
    %298 = vmatpush1.msra.mxu0 0.0
    %299 = vmatprep.subr.mxu0 0.0
    %300 = vmatpush1.msra.mxu0 0.0
    %301 = vmatprep.subr.mxu0 0.0
    %302 = vmatpush1.msra.mxu0 0.0
    %303 = vmatprep.subr.mxu0 0.0
    %304 = vmatpush1.msra.mxu0 0.0
    %305 = vmatprep.subr.mxu0 0.0
    %306 = vmatpush1.msra.mxu0 0.0
    %307 = vmatprep.subr.mxu0 0.0
    %308 = vmatpush1.msra.mxu0 0.0
    %309 = vmatprep.subr.mxu0 0.0
    %310 = vmatpush1.msra.mxu0 0.0
    %311 = vmatprep.subr.mxu0 0.0
    %312 = vmatpush1.msra.mxu0 0.0
    %313 = vmatprep.subr.mxu0 0.0
    %314 = vmatpush1.msra.mxu0 0.0
    %315 = vmatprep.subr.mxu0 0.0
    %316 = vmatpush1.msra.mxu0 0.0
    %317 = vmatprep.subr.mxu0 0.0
    %318 = vmatpush1.msra.mxu0 0.0
    %319 = vmatprep.subr.mxu0 0.0
    %320 = vmatpush1.msra.mxu0 0.0
    %321 = vmatprep.subr.mxu0 0.0
    %322 = vmatpush1.msra.mxu0 0.0
    %323 = vmatprep.subr.mxu0 0.0
    %324 = vmatpush1.msra.mxu0 0.0
    %325 = vmatprep.subr.mxu0 0.0
    %326 = vmatpush1.msra.mxu0 0.0
    %327 = vmatprep.mubr.f32.mxu0 0.0
    %328 = vmatmul.mubr.f32.gmra.mrb[0].mxu0 %v261
    %v329 = vpop.f32.mrb[0].mxu0
    %v330 = vadd.f32 0.0, %v329
    %v331 = vpop.f32.mrb[0].mxu0
    %332 = vdwg.mxu0
    %v334 = vrot.slane %v330, 6
    %v336 = vadd.f32 %v143, %v334
    %v337 = vxor.u32 %v336, 2147483648
    %v338 = vmul.f32 %v337, 1.442695
    %v339 = vpow.pop %v338
    %v340 = vadd.f32 %v339, 1.0
    %v341 = vrcp.pop %v340
    %v342 = vmul.f32 1.0, %v341
    %v343 = vtanh.pop %v336
    %v345 = vrot.slane %v248, 6
    %v347 = vmul.f32 %v342, %v345
    %349 = vrot.lane.b32.xlu0 %v343, 96
    %v350 = vpop.permute.xlu0 %349
    %v352 = vmul.f32 %v342, %v350
    %354 = vrot.lane.b32.xlu0 %v352, 16
    %v355 = vpop.permute.xlu0 %354
    %v357 = vadd.f32 %v347, %v355
    %v358 = vtanh.pop %v357
    %360 = vrot.lane.b32.xlu0 %v358, 32
    %v361 = vpop.permute.xlu0 %360
    %v363 = vmul.f32 %v342, %v361
    %365 = vrot.lane.b32.xlu0 %v363, 80
    %v366 = vpop.permute.xlu0 %365
    %vm368 = vcmask 125954
    %369 = vst.msk [vmem:[#allocation2] sm:$0xc] %vm368, %v366
    %v370 = vrot.slane %v363, 2
    %371 = vrot.lane.b32.xlu0 %v370, 80
    %v372 = vpop.permute.xlu0 %371
    %v373 = vsel %vm69, %v372, 0
    %375 = vmatprep.subr.mxu0 0.0
    %376 = vmatpush1.msra.mxu0 %v151
    %377 = vmatprep.subr.mxu0 0.0
    %378 = vmatpush1.msra.mxu0 %v152
    %379 = vmatprep.subr.mxu0 0.0
    %380 = vmatpush1.msra.mxu0 0.0
    %381 = vmatprep.subr.mxu0 0.0
    %382 = vmatpush1.msra.mxu0 0.0
    %383 = vmatprep.subr.mxu0 0.0
    %384 = vmatpush1.msra.mxu0 0.0
    %385 = vmatprep.subr.mxu0 0.0
    %386 = vmatpush1.msra.mxu0 0.0
    %387 = vmatprep.subr.mxu0 0.0
    %388 = vmatpush1.msra.mxu0 0.0
    %389 = vmatprep.subr.mxu0 0.0
    %390 = vmatpush1.msra.mxu0 0.0
    %391 = vmatprep.subr.mxu0 0.0
    %392 = vmatpush1.msra.mxu0 0.0
    %393 = vmatprep.subr.mxu0 0.0
    %394 = vmatpush1.msra.mxu0 0.0
    %395 = vmatprep.subr.mxu0 0.0
    %396 = vmatpush1.msra.mxu0 0.0
    %397 = vmatprep.subr.mxu0 0.0
    %398 = vmatpush1.msra.mxu0 0.0
    %399 = vmatprep.subr.mxu0 0.0
    %400 = vmatpush1.msra.mxu0 0.0
    %401 = vmatprep.subr.mxu0 0.0
    %402 = vmatpush1.msra.mxu0 0.0
    %403 = vmatprep.subr.mxu0 0.0
    %404 = vmatpush1.msra.mxu0 0.0
    %405 = vmatprep.subr.mxu0 0.0
    %406 = vmatpush1.msra.mxu0 0.0
    %407 = vmatprep.subr.mxu0 0.0
    %408 = vmatpush1.msra.mxu0 0.0
    %409 = vmatprep.subr.mxu0 0.0
    %410 = vmatpush1.msra.mxu0 0.0
    %411 = vmatprep.subr.mxu0 0.0
    %412 = vmatpush1.msra.mxu0 0.0
    %413 = vmatprep.subr.mxu0 0.0
    %414 = vmatpush1.msra.mxu0 0.0
    %415 = vmatprep.subr.mxu0 0.0
    %416 = vmatpush1.msra.mxu0 0.0
    %417 = vmatprep.subr.mxu0 0.0
    %418 = vmatpush1.msra.mxu0 0.0
    %419 = vmatprep.subr.mxu0 0.0
    %420 = vmatpush1.msra.mxu0 0.0
    %421 = vmatprep.subr.mxu0 0.0
    %422 = vmatpush1.msra.mxu0 0.0
    %423 = vmatprep.subr.mxu0 0.0
    %424 = vmatpush1.msra.mxu0 0.0
    %425 = vmatprep.subr.mxu0 0.0
    %426 = vmatpush1.msra.mxu0 0.0
    %427 = vmatprep.subr.mxu0 0.0
    %428 = vmatpush1.msra.mxu0 0.0
    %429 = vmatprep.subr.mxu0 0.0
    %430 = vmatpush1.msra.mxu0 0.0
    %431 = vmatprep.subr.mxu0 0.0
    %432 = vmatpush1.msra.mxu0 0.0
    %433 = vmatprep.subr.mxu0 0.0
    %434 = vmatpush1.msra.mxu0 0.0
    %435 = vmatprep.subr.mxu0 0.0
    %436 = vmatpush1.msra.mxu0 0.0
    %437 = vmatprep.subr.mxu0 0.0
    %438 = vmatpush1.msra.mxu0 0.0
    %439 = vmatprep.mubr.f32.mxu0 0.0
    %440 = vmatmul.mubr.f32.gmra.mrb[0].mxu0 %v373
    %v441 = vpop.f32.mrb[0].mxu0
    %v442 = vadd.f32 0.0, %v441
    %v443 = vpop.f32.mrb[0].mxu0
    %444 = vdwg.mxu0
    %v446 = vrot.slane %v442, 4
    %v448 = vadd.f32 %v143, %v446
    %v449 = vxor.u32 %v448, 2147483648
    %v450 = vmul.f32 %v449, 1.442695
    %v451 = vpow.pop %v450
    %v452 = vadd.f32 %v451, 1.0
    %v453 = vrcp.pop %v452
    %v454 = vmul.f32 1.0, %v453
    %v455 = vtanh.pop %v448
    %v457 = vrot.slane %v357, 6
    %v459 = vmul.f32 %v454, %v457
    %461 = vrot.lane.b32.xlu0 %v455, 96
    %v462 = vpop.permute.xlu0 %461
    %v464 = vmul.f32 %v454, %v462
    %466 = vrot.lane.b32.xlu0 %v464, 16
    %v467 = vpop.permute.xlu0 %466
    %v469 = vadd.f32 %v459, %v467
    %v470 = vtanh.pop %v469
    %472 = vrot.lane.b32.xlu0 %v470, 32
    %v473 = vpop.permute.xlu0 %472
    %v475 = vmul.f32 %v454, %v473
    %477 = vrot.lane.b32.xlu0 %v475, 80
    %v478 = vpop.permute.xlu0 %477
    %vm480 = vcmask 128004
    %481 = vst.msk [vmem:[#allocation2] sm:$0x30] %vm480, %v478
    %v482 = vrot.slane %v475, 4
    %483 = vrot.lane.b32.xlu0 %v482, 80
    %v484 = vpop.permute.xlu0 %483
    %v485 = vsel %vm69, %v484, 0
    %487 = vmatprep.subr.mxu0 0.0
    %488 = vmatpush1.msra.mxu0 %v151
    %489 = vmatprep.subr.mxu0 0.0
    %490 = vmatpush1.msra.mxu0 %v152
    %491 = vmatprep.subr.mxu0 0.0
    %492 = vmatpush1.msra.mxu0 0.0
    %493 = vmatprep.subr.mxu0 0.0
    %494 = vmatpush1.msra.mxu0 0.0
    %495 = vmatprep.subr.mxu0 0.0
    %496 = vmatpush1.msra.mxu0 0.0
    %497 = vmatprep.subr.mxu0 0.0
    %498 = vmatpush1.msra.mxu0 0.0
    %499 = vmatprep.subr.mxu0 0.0
    %500 = vmatpush1.msra.mxu0 0.0
    %501 = vmatprep.subr.mxu0 0.0
    %502 = vmatpush1.msra.mxu0 0.0
    %503 = vmatprep.subr.mxu0 0.0
    %504 = vmatpush1.msra.mxu0 0.0
    %505 = vmatprep.subr.mxu0 0.0
    %506 = vmatpush1.msra.mxu0 0.0
    %507 = vmatprep.subr.mxu0 0.0
    %508 = vmatpush1.msra.mxu0 0.0
    %509 = vmatprep.subr.mxu0 0.0
    %510 = vmatpush1.msra.mxu0 0.0
    %511 = vmatprep.subr.mxu0 0.0
    %512 = vmatpush1.msra.mxu0 0.0
    %513 = vmatprep.subr.mxu0 0.0
    %514 = vmatpush1.msra.mxu0 0.0
    %515 = vmatprep.subr.mxu0 0.0
    %516 = vmatpush1.msra.mxu0 0.0
    %517 = vmatprep.subr.mxu0 0.0
    %518 = vmatpush1.msra.mxu0 0.0
    %519 = vmatprep.subr.mxu0 0.0
    %520 = vmatpush1.msra.mxu0 0.0
    %521 = vmatprep.subr.mxu0 0.0
    %522 = vmatpush1.msra.mxu0 0.0
    %523 = vmatprep.subr.mxu0 0.0
    %524 = vmatpush1.msra.mxu0 0.0
    %525 = vmatprep.subr.mxu0 0.0
    %526 = vmatpush1.msra.mxu0 0.0
    %527 = vmatprep.subr.mxu0 0.0
    %528 = vmatpush1.msra.mxu0 0.0
    %529 = vmatprep.subr.mxu0 0.0
    %530 = vmatpush1.msra.mxu0 0.0
    %531 = vmatprep.subr.mxu0 0.0
    %532 = vmatpush1.msra.mxu0 0.0
    %533 = vmatprep.subr.mxu0 0.0
    %534 = vmatpush1.msra.mxu0 0.0
    %535 = vmatprep.subr.mxu0 0.0
    %536 = vmatpush1.msra.mxu0 0.0
    %537 = vmatprep.subr.mxu0 0.0
    %538 = vmatpush1.msra.mxu0 0.0
    %539 = vmatprep.subr.mxu0 0.0
    %540 = vmatpush1.msra.mxu0 0.0
    %541 = vmatprep.subr.mxu0 0.0
    %542 = vmatpush1.msra.mxu0 0.0
    %543 = vmatprep.subr.mxu0 0.0
    %544 = vmatpush1.msra.mxu0 0.0
    %545 = vmatprep.subr.mxu0 0.0
    %546 = vmatpush1.msra.mxu0 0.0
    %547 = vmatprep.subr.mxu0 0.0
    %548 = vmatpush1.msra.mxu0 0.0
    %549 = vmatprep.subr.mxu0 0.0
    %550 = vmatpush1.msra.mxu0 0.0
    %551 = vmatprep.mubr.f32.mxu0 0.0
    %552 = vmatmul.mubr.f32.gmra.mrb[0].mxu0 %v485
    %v553 = vpop.f32.mrb[0].mxu0
    %v554 = vadd.f32 0.0, %v553
    %v555 = vpop.f32.mrb[0].mxu0
    %556 = vdwg.mxu0
    %v558 = vrot.slane %v554, 2
    %v560 = vadd.f32 %v143, %v558
    %v561 = vxor.u32 %v560, 2147483648
    %v562 = vmul.f32 %v561, 1.442695
    %v563 = vpow.pop %v562
    %v564 = vadd.f32 %v563, 1.0
    %v565 = vrcp.pop %v564
    %v566 = vmul.f32 1.0, %v565
    %v567 = vtanh.pop %v560
    %v569 = vrot.slane %v469, 6
    %v571 = vmul.f32 %v566, %v569
    %573 = vrot.lane.b32.xlu0 %v567, 96
    %v574 = vpop.permute.xlu0 %573
    %v576 = vmul.f32 %v566, %v574
    %578 = vrot.lane.b32.xlu0 %v576, 16
    %v579 = vpop.permute.xlu0 %578
    %v581 = vadd.f32 %v571, %v579
    %v582 = vtanh.pop %v581
    %584 = vrot.lane.b32.xlu0 %v582, 32
    %v585 = vpop.permute.xlu0 %584
    %v587 = vmul.f32 %v566, %v585
    %589 = vrot.lane.b32.xlu0 %v587, 80
    %v590 = vpop.permute.xlu0 %589
    %vm592 = vcmask 130054
    %593 = vst.msk [vmem:[#allocation2] sm:$0xc0] %vm592, %v590
    %v594 = vrot.slane %v587, 6
    %595 = vrot.lane.b32.xlu0 %v594, 80
    %v596 = vpop.permute.xlu0 %595
    %v597 = vsel %vm69, %v596, 0
    %599 = vmatprep.subr.mxu0 0.0
    %600 = vmatpush1.msra.mxu0 %v151
    %601 = vmatprep.subr.mxu0 0.0
    %602 = vmatpush1.msra.mxu0 %v152
    %603 = vmatprep.subr.mxu0 0.0
    %604 = vmatpush1.msra.mxu0 0.0
    %605 = vmatprep.subr.mxu0 0.0
    %606 = vmatpush1.msra.mxu0 0.0
    %607 = vmatprep.subr.mxu0 0.0
    %608 = vmatpush1.msra.mxu0 0.0
    %609 = vmatprep.subr.mxu0 0.0
    %610 = vmatpush1.msra.mxu0 0.0
    %611 = vmatprep.subr.mxu0 0.0
    %612 = vmatpush1.msra.mxu0 0.0
    %613 = vmatprep.subr.mxu0 0.0
    %614 = vmatpush1.msra.mxu0 0.0
    %615 = vmatprep.subr.mxu0 0.0
    %616 = vmatpush1.msra.mxu0 0.0
    %617 = vmatprep.subr.mxu0 0.0
    %618 = vmatpush1.msra.mxu0 0.0
    %619 = vmatprep.subr.mxu0 0.0
    %620 = vmatpush1.msra.mxu0 0.0
    %621 = vmatprep.subr.mxu0 0.0
    %622 = vmatpush1.msra.mxu0 0.0
    %623 = vmatprep.subr.mxu0 0.0
    %624 = vmatpush1.msra.mxu0 0.0
    %625 = vmatprep.subr.mxu0 0.0
    %626 = vmatpush1.msra.mxu0 0.0
    %627 = vmatprep.subr.mxu0 0.0
    %628 = vmatpush1.msra.mxu0 0.0
    %629 = vmatprep.subr.mxu0 0.0
    %630 = vmatpush1.msra.mxu0 0.0
    %631 = vmatprep.subr.mxu0 0.0
    %632 = vmatpush1.msra.mxu0 0.0
    %633 = vmatprep.subr.mxu0 0.0
    %634 = vmatpush1.msra.mxu0 0.0
    %635 = vmatprep.subr.mxu0 0.0
    %636 = vmatpush1.msra.mxu0 0.0
    %637 = vmatprep.subr.mxu0 0.0
    %638 = vmatpush1.msra.mxu0 0.0
    %639 = vmatprep.subr.mxu0 0.0
    %640 = vmatpush1.msra.mxu0 0.0
    %641 = vmatprep.subr.mxu0 0.0
    %642 = vmatpush1.msra.mxu0 0.0
    %643 = vmatprep.subr.mxu0 0.0
    %644 = vmatpush1.msra.mxu0 0.0
    %645 = vmatprep.subr.mxu0 0.0
    %646 = vmatpush1.msra.mxu0 0.0
    %647 = vmatprep.subr.mxu0 0.0
    %648 = vmatpush1.msra.mxu0 0.0
    %649 = vmatprep.subr.mxu0 0.0
    %650 = vmatpush1.msra.mxu0 0.0
    %651 = vmatprep.subr.mxu0 0.0
    %652 = vmatpush1.msra.mxu0 0.0
    %653 = vmatprep.subr.mxu0 0.0
    %654 = vmatpush1.msra.mxu0 0.0
    %655 = vmatprep.subr.mxu0 0.0
    %656 = vmatpush1.msra.mxu0 0.0
    %657 = vmatprep.subr.mxu0 0.0
    %658 = vmatpush1.msra.mxu0 0.0
    %659 = vmatprep.subr.mxu0 0.0
    %660 = vmatpush1.msra.mxu0 0.0
    %661 = vmatprep.subr.mxu0 0.0
    %662 = vmatpush1.msra.mxu0 0.0
    %663 = vmatprep.mubr.f32.mxu0 0.0
    %664 = vmatmul.mubr.f32.gmra.mrb[0].mxu0 %v597
    %v665 = vpop.f32.mrb[0].mxu0
    %v666 = vadd.f32 0.0, %v665
    %v667 = vpop.f32.mrb[0].mxu0
    %668 = vdwg.mxu0
    %v669 = vadd.f32 %v148, %v666
    %v670 = vxor.u32 %v669, 2147483648
    %v671 = vmul.f32 %v670, 1.442695
    %v672 = vpow.pop %v671
    %v673 = vadd.f32 %v672, 1.0
    %v674 = vrcp.pop %v673
    %v675 = vmul.f32 1.0, %v674
    %v676 = vtanh.pop %v669
    %v678 = vrot.slane %v581, 6
    %v680 = vmul.f32 %v675, %v678
    %682 = vrot.lane.b32.xlu0 %v676, 96
    %v683 = vpop.permute.xlu0 %682
    %v685 = vmul.f32 %v675, %v683
    %687 = vrot.lane.b32.xlu0 %v685, 16
    %v688 = vpop.permute.xlu0 %687
    %v690 = vadd.f32 %v680, %v688
    %v691 = vtanh.pop %v690
    %693 = vrot.lane.b32.xlu0 %v691, 32
    %v694 = vpop.permute.xlu0 %693
    %v696 = vmul.f32 %v675, %v694
    %698 = vrot.lane.b32.xlu0 %v696, 80
    %v699 = vpop.permute.xlu0 %698
    %701 = vst.msk [vmem:[#allocation2 + $0x8] sm:$0x3] %vm259, %v699
    %v702 = vsel %vm69, %v699, 0
    %704 = vmatprep.subr.mxu0 0.0
    %705 = vmatpush1.msra.mxu0 %v151
    %706 = vmatprep.subr.mxu0 0.0
    %707 = vmatpush1.msra.mxu0 %v152
    %708 = vmatprep.subr.mxu0 0.0
    %709 = vmatpush1.msra.mxu0 0.0
    %710 = vmatprep.subr.mxu0 0.0
    %711 = vmatpush1.msra.mxu0 0.0
    %712 = vmatprep.subr.mxu0 0.0
    %713 = vmatpush1.msra.mxu0 0.0
    %714 = vmatprep.subr.mxu0 0.0
    %715 = vmatpush1.msra.mxu0 0.0
    %716 = vmatprep.subr.mxu0 0.0
    %717 = vmatpush1.msra.mxu0 0.0
    %718 = vmatprep.subr.mxu0 0.0
    %719 = vmatpush1.msra.mxu0 0.0
    %720 = vmatprep.subr.mxu0 0.0
    %721 = vmatpush1.msra.mxu0 0.0
    %722 = vmatprep.subr.mxu0 0.0
    %723 = vmatpush1.msra.mxu0 0.0
    %724 = vmatprep.subr.mxu0 0.0
    %725 = vmatpush1.msra.mxu0 0.0
    %726 = vmatprep.subr.mxu0 0.0
    %727 = vmatpush1.msra.mxu0 0.0
    %728 = vmatprep.subr.mxu0 0.0
    %729 = vmatpush1.msra.mxu0 0.0
    %730 = vmatprep.subr.mxu0 0.0
    %731 = vmatpush1.msra.mxu0 0.0
    %732 = vmatprep.subr.mxu0 0.0
    %733 = vmatpush1.msra.mxu0 0.0
    %734 = vmatprep.subr.mxu0 0.0
    %735 = vmatpush1.msra.mxu0 0.0
    %736 = vmatprep.subr.mxu0 0.0
    %737 = vmatpush1.msra.mxu0 0.0
    %738 = vmatprep.subr.mxu0 0.0
    %739 = vmatpush1.msra.mxu0 0.0
    %740 = vmatprep.subr.mxu0 0.0
    %741 = vmatpush1.msra.mxu0 0.0
    %742 = vmatprep.subr.mxu0 0.0
    %743 = vmatpush1.msra.mxu0 0.0
    %744 = vmatprep.subr.mxu0 0.0
    %745 = vmatpush1.msra.mxu0 0.0
    %746 = vmatprep.subr.mxu0 0.0
    %747 = vmatpush1.msra.mxu0 0.0
    %748 = vmatprep.subr.mxu0 0.0
    %749 = vmatpush1.msra.mxu0 0.0
    %750 = vmatprep.subr.mxu0 0.0
    %751 = vmatpush1.msra.mxu0 0.0
    %752 = vmatprep.subr.mxu0 0.0
    %753 = vmatpush1.msra.mxu0 0.0
    %754 = vmatprep.subr.mxu0 0.0
    %755 = vmatpush1.msra.mxu0 0.0
    %756 = vmatprep.subr.mxu0 0.0
    %757 = vmatpush1.msra.mxu0 0.0
    %758 = vmatprep.subr.mxu0 0.0
    %759 = vmatpush1.msra.mxu0 0.0
    %760 = vmatprep.subr.mxu0 0.0
    %761 = vmatpush1.msra.mxu0 0.0
    %762 = vmatprep.subr.mxu0 0.0
    %763 = vmatpush1.msra.mxu0 0.0
    %764 = vmatprep.subr.mxu0 0.0
    %765 = vmatpush1.msra.mxu0 0.0
    %766 = vmatprep.subr.mxu0 0.0
    %767 = vmatpush1.msra.mxu0 0.0
    %768 = vmatprep.mubr.f32.mxu0 0.0
    %769 = vmatmul.mubr.f32.gmra.mrb[0].mxu0 %v702
    %v770 = vpop.f32.mrb[0].mxu0
    %v771 = vadd.f32 0.0, %v770
    %v772 = vpop.f32.mrb[0].mxu0
    %773 = vdwg.mxu0
    %v775 = vrot.slane %v771, 6
    %v777 = vadd.f32 %v148, %v775
    %v778 = vxor.u32 %v777, 2147483648
    %v779 = vmul.f32 %v778, 1.442695
    %v780 = vpow.pop %v779
    %v781 = vadd.f32 %v780, 1.0
    %v782 = vrcp.pop %v781
    %v783 = vmul.f32 1.0, %v782
    %v784 = vtanh.pop %v777
    %v786 = vrot.slane %v690, 6
    %v788 = vmul.f32 %v783, %v786
    %790 = vrot.lane.b32.xlu0 %v784, 96
    %v791 = vpop.permute.xlu0 %790
    %v793 = vmul.f32 %v783, %v791
    %795 = vrot.lane.b32.xlu0 %v793, 16
    %v796 = vpop.permute.xlu0 %795
    %v798 = vadd.f32 %v788, %v796
    %v799 = vtanh.pop %v798
    %801 = vrot.lane.b32.xlu0 %v799, 32
    %v802 = vpop.permute.xlu0 %801
    %v804 = vmul.f32 %v783, %v802
    %806 = vrot.lane.b32.xlu0 %v804, 80
    %v807 = vpop.permute.xlu0 %806
    %809 = vst.msk [vmem:[#allocation2 + $0x8] sm:$0xc] %vm368, %v807
    %v810 = vrot.slane %v804, 2
    %811 = vrot.lane.b32.xlu0 %v810, 80
    %v812 = vpop.permute.xlu0 %811
    %v813 = vsel %vm69, %v812, 0
    %815 = vmatprep.subr.mxu0 0.0
    %816 = vmatpush1.msra.mxu0 %v151
    %817 = vmatprep.subr.mxu0 0.0
    %818 = vmatpush1.msra.mxu0 %v152
    %819 = vmatprep.subr.mxu0 0.0
    %820 = vmatpush1.msra.mxu0 0.0
    %821 = vmatprep.subr.mxu0 0.0
    %822 = vmatpush1.msra.mxu0 0.0
    %823 = vmatprep.subr.mxu0 0.0
    %824 = vmatpush1.msra.mxu0 0.0
    %825 = vmatprep.subr.mxu0 0.0
    %826 = vmatpush1.msra.mxu0 0.0
    %827 = vmatprep.subr.mxu0 0.0
    %828 = vmatpush1.msra.mxu0 0.0
    %829 = vmatprep.subr.mxu0 0.0
    %830 = vmatpush1.msra.mxu0 0.0
    %831 = vmatprep.subr.mxu0 0.0
    %832 = vmatpush1.msra.mxu0 0.0
    %833 = vmatprep.subr.mxu0 0.0
    %834 = vmatpush1.msra.mxu0 0.0
    %835 = vmatprep.subr.mxu0 0.0
    %836 = vmatpush1.msra.mxu0 0.0
    %837 = vmatprep.subr.mxu0 0.0
    %838 = vmatpush1.msra.mxu0 0.0
    %839 = vmatprep.subr.mxu0 0.0
    %840 = vmatpush1.msra.mxu0 0.0
    %841 = vmatprep.subr.mxu0 0.0
    %842 = vmatpush1.msra.mxu0 0.0
    %843 = vmatprep.subr.mxu0 0.0
    %844 = vmatpush1.msra.mxu0 0.0
    %845 = vmatprep.subr.mxu0 0.0
    %846 = vmatpush1.msra.mxu0 0.0
    %847 = vmatprep.subr.mxu0 0.0
    %848 = vmatpush1.msra.mxu0 0.0
    %849 = vmatprep.subr.mxu0 0.0
    %850 = vmatpush1.msra.mxu0 0.0
    %851 = vmatprep.subr.mxu0 0.0
    %852 = vmatpush1.msra.mxu0 0.0
    %853 = vmatprep.subr.mxu0 0.0
    %854 = vmatpush1.msra.mxu0 0.0
    %855 = vmatprep.subr.mxu0 0.0
    %856 = vmatpush1.msra.mxu0 0.0
    %857 = vmatprep.subr.mxu0 0.0
    %858 = vmatpush1.msra.mxu0 0.0
    %859 = vmatprep.subr.mxu0 0.0
    %860 = vmatpush1.msra.mxu0 0.0
    %861 = vmatprep.subr.mxu0 0.0
    %862 = vmatpush1.msra.mxu0 0.0
    %863 = vmatprep.subr.mxu0 0.0
    %864 = vmatpush1.msra.mxu0 0.0
    %865 = vmatprep.subr.mxu0 0.0
    %866 = vmatpush1.msra.mxu0 0.0
    %867 = vmatprep.subr.mxu0 0.0
    %868 = vmatpush1.msra.mxu0 0.0
    %869 = vmatprep.subr.mxu0 0.0
    %870 = vmatpush1.msra.mxu0 0.0
    %871 = vmatprep.subr.mxu0 0.0
    %872 = vmatpush1.msra.mxu0 0.0
    %873 = vmatprep.subr.mxu0 0.0
    %874 = vmatpush1.msra.mxu0 0.0
    %875 = vmatprep.subr.mxu0 0.0
    %876 = vmatpush1.msra.mxu0 0.0
    %877 = vmatprep.subr.mxu0 0.0
    %878 = vmatpush1.msra.mxu0 0.0
    %879 = vmatprep.mubr.f32.mxu0 0.0
    %880 = vmatmul.mubr.f32.gmra.mrb[0].mxu0 %v813
    %v881 = vpop.f32.mrb[0].mxu0
    %v882 = vadd.f32 0.0, %v881
    %v883 = vpop.f32.mrb[0].mxu0
    %884 = vdwg.mxu0
    %v886 = vrot.slane %v882, 4
    %v888 = vadd.f32 %v148, %v886
    %v889 = vxor.u32 %v888, 2147483648
    %v890 = vmul.f32 %v889, 1.442695
    %v891 = vpow.pop %v890
    %v892 = vadd.f32 %v891, 1.0
    %v893 = vrcp.pop %v892
    %v894 = vmul.f32 1.0, %v893
    %v895 = vtanh.pop %v888
    %v897 = vrot.slane %v798, 6
    %v899 = vmul.f32 %v894, %v897
    %901 = vrot.lane.b32.xlu0 %v895, 96
    %v902 = vpop.permute.xlu0 %901
    %v904 = vmul.f32 %v894, %v902
    %906 = vrot.lane.b32.xlu0 %v904, 16
    %v907 = vpop.permute.xlu0 %906
    %v909 = vadd.f32 %v899, %v907
    %v910 = vtanh.pop %v909
    %912 = vrot.lane.b32.xlu0 %v910, 32
    %v913 = vpop.permute.xlu0 %912
    %v915 = vmul.f32 %v894, %v913
    %917 = vrot.lane.b32.xlu0 %v915, 80
    %v918 = vpop.permute.xlu0 %917
    %920 = vst.msk [vmem:[#allocation2 + $0x8] sm:$0x30] %vm480, %v918
    %v921 = vrot.slane %v915, 4
    %922 = vrot.lane.b32.xlu0 %v921, 80
    %v923 = vpop.permute.xlu0 %922
    %v924 = vsel %vm69, %v923, 0
    %926 = vmatprep.subr.mxu0 0.0
    %927 = vmatpush1.msra.mxu0 %v151
    %928 = vmatprep.subr.mxu0 0.0
    %929 = vmatpush1.msra.mxu0 %v152
    %930 = vmatprep.subr.mxu0 0.0
    %931 = vmatpush1.msra.mxu0 0.0
    %932 = vmatprep.subr.mxu0 0.0
    %933 = vmatpush1.msra.mxu0 0.0
    %934 = vmatprep.subr.mxu0 0.0
    %935 = vmatpush1.msra.mxu0 0.0
    %936 = vmatprep.subr.mxu0 0.0
    %937 = vmatpush1.msra.mxu0 0.0
    %938 = vmatprep.subr.mxu0 0.0
    %939 = vmatpush1.msra.mxu0 0.0
    %940 = vmatprep.subr.mxu0 0.0
    %941 = vmatpush1.msra.mxu0 0.0
    %942 = vmatprep.subr.mxu0 0.0
    %943 = vmatpush1.msra.mxu0 0.0
    %944 = vmatprep.subr.mxu0 0.0
    %945 = vmatpush1.msra.mxu0 0.0
    %946 = vmatprep.subr.mxu0 0.0
    %947 = vmatpush1.msra.mxu0 0.0
    %948 = vmatprep.subr.mxu0 0.0
    %949 = vmatpush1.msra.mxu0 0.0
    %950 = vmatprep.subr.mxu0 0.0
    %951 = vmatpush1.msra.mxu0 0.0
    %952 = vmatprep.subr.mxu0 0.0
    %953 = vmatpush1.msra.mxu0 0.0
    %954 = vmatprep.subr.mxu0 0.0
    %955 = vmatpush1.msra.mxu0 0.0
    %956 = vmatprep.subr.mxu0 0.0
    %957 = vmatpush1.msra.mxu0 0.0
    %958 = vmatprep.subr.mxu0 0.0
    %959 = vmatpush1.msra.mxu0 0.0
    %960 = vmatprep.subr.mxu0 0.0
    %961 = vmatpush1.msra.mxu0 0.0
    %962 = vmatprep.subr.mxu0 0.0
    %963 = vmatpush1.msra.mxu0 0.0
    %964 = vmatprep.subr.mxu0 0.0
    %965 = vmatpush1.msra.mxu0 0.0
    %966 = vmatprep.subr.mxu0 0.0
    %967 = vmatpush1.msra.mxu0 0.0
    %968 = vmatprep.subr.mxu0 0.0
    %969 = vmatpush1.msra.mxu0 0.0
    %970 = vmatprep.subr.mxu0 0.0
    %971 = vmatpush1.msra.mxu0 0.0
    %972 = vmatprep.subr.mxu0 0.0
    %973 = vmatpush1.msra.mxu0 0.0
    %974 = vmatprep.subr.mxu0 0.0
    %975 = vmatpush1.msra.mxu0 0.0
    %976 = vmatprep.subr.mxu0 0.0
    %977 = vmatpush1.msra.mxu0 0.0
    %978 = vmatprep.subr.mxu0 0.0
    %979 = vmatpush1.msra.mxu0 0.0
    %980 = vmatprep.subr.mxu0 0.0
    %981 = vmatpush1.msra.mxu0 0.0
    %982 = vmatprep.subr.mxu0 0.0
    %983 = vmatpush1.msra.mxu0 0.0
    %984 = vmatprep.subr.mxu0 0.0
    %985 = vmatpush1.msra.mxu0 0.0
    %986 = vmatprep.subr.mxu0 0.0
    %987 = vmatpush1.msra.mxu0 0.0
    %988 = vmatprep.subr.mxu0 0.0
    %989 = vmatpush1.msra.mxu0 0.0
    %990 = vmatprep.mubr.f32.mxu0 0.0
    %991 = vmatmul.mubr.f32.gmra.mrb[0].mxu0 %v924
    %v992 = vpop.f32.mrb[0].mxu0
    %v993 = vadd.f32 0.0, %v992
    %v994 = vpop.f32.mrb[0].mxu0
    %995 = vdwg.mxu0
    %v997 = vrot.slane %v993, 2
    %v999 = vadd.f32 %v148, %v997
    %v1000 = vxor.u32 %v999, 2147483648
    %v1001 = vmul.f32 %v1000, 1.442695
    %v1002 = vpow.pop %v1001
    %v1003 = vadd.f32 %v1002, 1.0
    %v1004 = vrcp.pop %v1003
    %v1005 = vmul.f32 1.0, %v1004
    %v1006 = vtanh.pop %v999
    %v1008 = vrot.slane %v909, 6
    %v1010 = vmul.f32 %v1005, %v1008
    %1012 = vrot.lane.b32.xlu0 %v1006, 96
    %v1013 = vpop.permute.xlu0 %1012
    %v1015 = vmul.f32 %v1005, %v1013
    %1017 = vrot.lane.b32.xlu0 %v1015, 16
    %v1018 = vpop.permute.xlu0 %1017
    %v1020 = vadd.f32 %v1010, %v1018
    %v1021 = vtanh.pop %v1020
    %1023 = vrot.lane.b32.xlu0 %v1021, 32
    %v1024 = vpop.permute.xlu0 %1023
    %v1026 = vmul.f32 %v1005, %v1024
    %1028 = vrot.lane.b32.xlu0 %v1026, 80
    %v1029 = vpop.permute.xlu0 %1028
    %1031 = vst.msk [vmem:[#allocation2 + $0x8] sm:$0xc0] %vm592, %v1029
    %v1032 = vld [vmem:[#allocation2] sm:$0xff]
    %v1033 = vld [vmem:[#allocation2 + $0x8] sm:$0xff]
    %s1034 = scalar_lea.vmem %s1, 2
    %v1035 = vld [vmem:[%s1034] sm:$0x3]
    %s1036 = scalar_lea.vmem %s2, 2
    %v1037 = vld [vmem:[%s1036] sm:$0x3]
    %s1038 = scalar_lea.vmem [#allocation3], 16
    %v1039 = vld [vmem:[%s1038] sm:$0xff]
    %v1040 = vld [vmem:[%s1038 + $0x8] sm:$0xff]
    %s1041 = scalar_lea.vmem %s5, 1
    %v1042 = vld [vmem:[%s1041] sm:$0x1]
    %v1044 = vlaneseq
    %v1045 = vshrl.u32 %v1044, 7
    %v1046 = vsub.s32 0, %v1045
    %v1047 = vrot.slane %v1042, %v1046
    %v1050 = vsel %vm69, %v1032, 0
    %v1053 = vsel %vm69, %v1033, 0
    %1055 = vmatprep.subr.mxu0 0.0
    %1056 = vmatpush1.msra.mxu0 %v1039
    %1057 = vmatprep.subr.mxu0 0.0
    %1058 = vmatpush1.msra.mxu0 %v1040
    %1059 = vmatprep.subr.mxu0 0.0
    %1060 = vmatpush1.msra.mxu0 0.0
    %1061 = vmatprep.subr.mxu0 0.0
    %1062 = vmatpush1.msra.mxu0 0.0
    %1063 = vmatprep.subr.mxu0 0.0
    %1064 = vmatpush1.msra.mxu0 0.0
    %1065 = vmatprep.subr.mxu0 0.0
    %1066 = vmatpush1.msra.mxu0 0.0
    %1067 = vmatprep.subr.mxu0 0.0
    %1068 = vmatpush1.msra.mxu0 0.0
    %1069 = vmatprep.subr.mxu0 0.0
    %1070 = vmatpush1.msra.mxu0 0.0
    %1071 = vmatprep.subr.mxu0 0.0
    %1072 = vmatpush1.msra.mxu0 0.0
    %1073 = vmatprep.subr.mxu0 0.0
    %1074 = vmatpush1.msra.mxu0 0.0
    %1075 = vmatprep.subr.mxu0 0.0
    %1076 = vmatpush1.msra.mxu0 0.0
    %1077 = vmatprep.subr.mxu0 0.0
    %1078 = vmatpush1.msra.mxu0 0.0
    %1079 = vmatprep.subr.mxu0 0.0
    %1080 = vmatpush1.msra.mxu0 0.0
    %1081 = vmatprep.subr.mxu0 0.0
    %1082 = vmatpush1.msra.mxu0 0.0
    %1083 = vmatprep.subr.mxu0 0.0
    %1084 = vmatpush1.msra.mxu0 0.0
    %1085 = vmatprep.subr.mxu0 0.0
    %1086 = vmatpush1.msra.mxu0 0.0
    %1087 = vmatprep.subr.mxu0 0.0
    %1088 = vmatpush1.msra.mxu0 0.0
    %1089 = vmatprep.subr.mxu0 0.0
    %1090 = vmatpush1.msra.mxu0 0.0
    %1091 = vmatprep.subr.mxu0 0.0
    %1092 = vmatpush1.msra.mxu0 0.0
    %1093 = vmatprep.subr.mxu0 0.0
    %1094 = vmatpush1.msra.mxu0 0.0
    %1095 = vmatprep.subr.mxu0 0.0
    %1096 = vmatpush1.msra.mxu0 0.0
    %1097 = vmatprep.subr.mxu0 0.0
    %1098 = vmatpush1.msra.mxu0 0.0
    %1099 = vmatprep.subr.mxu0 0.0
    %1100 = vmatpush1.msra.mxu0 0.0
    %1101 = vmatprep.subr.mxu0 0.0
    %1102 = vmatpush1.msra.mxu0 0.0
    %1103 = vmatprep.subr.mxu0 0.0
    %1104 = vmatpush1.msra.mxu0 0.0
    %1105 = vmatprep.subr.mxu0 0.0
    %1106 = vmatpush1.msra.mxu0 0.0
    %1107 = vmatprep.subr.mxu0 0.0
    %1108 = vmatpush1.msra.mxu0 0.0
    %1109 = vmatprep.subr.mxu0 0.0
    %1110 = vmatpush1.msra.mxu0 0.0
    %1111 = vmatprep.subr.mxu0 0.0
    %1112 = vmatpush1.msra.mxu0 0.0
    %1113 = vmatprep.subr.mxu0 0.0
    %1114 = vmatpush1.msra.mxu0 0.0
    %1115 = vmatprep.subr.mxu0 0.0
    %1116 = vmatpush1.msra.mxu0 0.0
    %1117 = vmatprep.subr.mxu0 0.0
    %1118 = vmatpush1.msra.mxu0 0.0
    %1119 = vmatprep.mubr.f32.mxu0 0.0
    %1120 = vmatmul.mubr.f32.gmra.mrb[0].mxu0 %v1050
    %v1121 = vpop.f32.mrb[0].mxu0
    %v1122 = vadd.f32 %v1047, %v1121
    %v1123 = vpop.f32.mrb[0].mxu0
    %1124 = vmatprep.mubr.f32.mxu0 0.0
    %1125 = vmatmul.mubr.f32.gmra.mrb[0].mxu0 %v1053
    %v1126 = vpop.f32.mrb[0].mxu0
    %v1127 = vadd.f32 %v1047, %v1126
    %v1128 = vpop.f32.mrb[0].mxu0
    %1129 = vdwg.mxu0
    %s1130 = scalar_lea.vmem [#allocation6], 16
    %v1131 = vld [vmem:[%s1130] sm:$0xff]
    %v1132 = vld [vmem:[%s1130 + $0x8] sm:$0xff]
    %v1134 = vsel %vm69, %v1035, 0
    %1136 = vmatprep.subr.mxu0 0.0
    %1137 = vmatpush1.msra.mxu0 %v1131
    %1138 = vmatprep.subr.mxu0 0.0
    %1139 = vmatpush1.msra.mxu0 %v1132
    %1140 = vmatprep.subr.mxu0 0.0
    %1141 = vmatpush1.msra.mxu0 0.0
    %1142 = vmatprep.subr.mxu0 0.0
    %1143 = vmatpush1.msra.mxu0 0.0
    %1144 = vmatprep.subr.mxu0 0.0
    %1145 = vmatpush1.msra.mxu0 0.0
    %1146 = vmatprep.subr.mxu0 0.0
    %1147 = vmatpush1.msra.mxu0 0.0
    %1148 = vmatprep.subr.mxu0 0.0
    %1149 = vmatpush1.msra.mxu0 0.0
    %1150 = vmatprep.subr.mxu0 0.0
    %1151 = vmatpush1.msra.mxu0 0.0
    %1152 = vmatprep.subr.mxu0 0.0
    %1153 = vmatpush1.msra.mxu0 0.0
    %1154 = vmatprep.subr.mxu0 0.0
    %1155 = vmatpush1.msra.mxu0 0.0
    %1156 = vmatprep.subr.mxu0 0.0
    %1157 = vmatpush1.msra.mxu0 0.0
    %1158 = vmatprep.subr.mxu0 0.0
    %1159 = vmatpush1.msra.mxu0 0.0
    %1160 = vmatprep.subr.mxu0 0.0
    %1161 = vmatpush1.msra.mxu0 0.0
    %1162 = vmatprep.subr.mxu0 0.0
    %1163 = vmatpush1.msra.mxu0 0.0
    %1164 = vmatprep.subr.mxu0 0.0
    %1165 = vmatpush1.msra.mxu0 0.0
    %1166 = vmatprep.subr.mxu0 0.0
    %1167 = vmatpush1.msra.mxu0 0.0
    %1168 = vmatprep.subr.mxu0 0.0
    %1169 = vmatpush1.msra.mxu0 0.0
    %1170 = vmatprep.subr.mxu0 0.0
    %1171 = vmatpush1.msra.mxu0 0.0
    %1172 = vmatprep.subr.mxu0 0.0
    %1173 = vmatpush1.msra.mxu0 0.0
    %1174 = vmatprep.subr.mxu0 0.0
    %1175 = vmatpush1.msra.mxu0 0.0
    %1176 = vmatprep.subr.mxu0 0.0
    %1177 = vmatpush1.msra.mxu0 0.0
    %1178 = vmatprep.subr.mxu0 0.0
    %1179 = vmatpush1.msra.mxu0 0.0
    %1180 = vmatprep.subr.mxu0 0.0
    %1181 = vmatpush1.msra.mxu0 0.0
    %1182 = vmatprep.subr.mxu0 0.0
    %1183 = vmatpush1.msra.mxu0 0.0
    %1184 = vmatprep.subr.mxu0 0.0
    %1185 = vmatpush1.msra.mxu0 0.0
    %1186 = vmatprep.subr.mxu0 0.0
    %1187 = vmatpush1.msra.mxu0 0.0
    %1188 = vmatprep.subr.mxu0 0.0
    %1189 = vmatpush1.msra.mxu0 0.0
    %1190 = vmatprep.subr.mxu0 0.0
    %1191 = vmatpush1.msra.mxu0 0.0
    %1192 = vmatprep.subr.mxu0 0.0
    %1193 = vmatpush1.msra.mxu0 0.0
    %1194 = vmatprep.subr.mxu0 0.0
    %1195 = vmatpush1.msra.mxu0 0.0
    %1196 = vmatprep.subr.mxu0 0.0
    %1197 = vmatpush1.msra.mxu0 0.0
    %1198 = vmatprep.subr.mxu0 0.0
    %1199 = vmatpush1.msra.mxu0 0.0
    %1200 = vmatprep.mubr.f32.mxu0 0.0
    %1201 = vmatmul.mubr.f32.gmra.mrb[0].mxu0 %v1134
    %v1202 = vpop.f32.mrb[0].mxu0
    %v1203 = vadd.f32 0.0, %v1202
    %v1204 = vpop.f32.mrb[0].mxu0
    %1205 = vdwg.mxu0
    %v1206 = vadd.f32 %v1122, %v1203
    %v1207 = vxor.u32 %v1206, 2147483648
    %v1208 = vmul.f32 %v1207, 1.442695
    %v1209 = vpow.pop %v1208
    %v1210 = vadd.f32 %v1209, 1.0
    %v1211 = vrcp.pop %v1210
    %v1212 = vmul.f32 1.0, %v1211
    %v1213 = vtanh.pop %v1206
    %1215 = vrot.lane.b32.xlu0 %v1037, 16
    %v1216 = vpop.permute.xlu0 %1215
    %v1218 = vmul.f32 %v1212, %v1216
    %1220 = vrot.lane.b32.xlu0 %v1213, 96
    %v1221 = vpop.permute.xlu0 %1220
    %v1223 = vmul.f32 %v1212, %v1221
    %1225 = vrot.lane.b32.xlu0 %v1223, 16
    %v1226 = vpop.permute.xlu0 %1225
    %v1228 = vadd.f32 %v1218, %v1226
    %v1229 = vtanh.pop %v1228
    %1231 = vrot.lane.b32.xlu0 %v1229, 32
    %v1232 = vpop.permute.xlu0 %1231
    %v1234 = vmul.f32 %v1212, %v1232
    %1236 = vrot.lane.b32.xlu0 %v1234, 80
    %v1237 = vpop.permute.xlu0 %1236
    %1239 = vst.msk [vmem:[#allocation2] sm:$0x3] %vm259, %v1237
    %v1240 = vsel %vm69, %v1237, 0
    %1242 = vmatprep.subr.mxu0 0.0
    %1243 = vmatpush1.msra.mxu0 %v1131
    %1244 = vmatprep.subr.mxu0 0.0
    %1245 = vmatpush1.msra.mxu0 %v1132
    %1246 = vmatprep.subr.mxu0 0.0
    %1247 = vmatpush1.msra.mxu0 0.0
    %1248 = vmatprep.subr.mxu0 0.0
    %1249 = vmatpush1.msra.mxu0 0.0
    %1250 = vmatprep.subr.mxu0 0.0
    %1251 = vmatpush1.msra.mxu0 0.0
    %1252 = vmatprep.subr.mxu0 0.0
    %1253 = vmatpush1.msra.mxu0 0.0
    %1254 = vmatprep.subr.mxu0 0.0
    %1255 = vmatpush1.msra.mxu0 0.0
    %1256 = vmatprep.subr.mxu0 0.0
    %1257 = vmatpush1.msra.mxu0 0.0
    %1258 = vmatprep.subr.mxu0 0.0
    %1259 = vmatpush1.msra.mxu0 0.0
    %1260 = vmatprep.subr.mxu0 0.0
    %1261 = vmatpush1.msra.mxu0 0.0
    %1262 = vmatprep.subr.mxu0 0.0
    %1263 = vmatpush1.msra.mxu0 0.0
    %1264 = vmatprep.subr.mxu0 0.0
    %1265 = vmatpush1.msra.mxu0 0.0
    %1266 = vmatprep.subr.mxu0 0.0
    %1267 = vmatpush1.msra.mxu0 0.0
    %1268 = vmatprep.subr.mxu0 0.0
    %1269 = vmatpush1.msra.mxu0 0.0
    %1270 = vmatprep.subr.mxu0 0.0
    %1271 = vmatpush1.msra.mxu0 0.0
    %1272 = vmatprep.subr.mxu0 0.0
    %1273 = vmatpush1.msra.mxu0 0.0
    %1274 = vmatprep.subr.mxu0 0.0
    %1275 = vmatpush1.msra.mxu0 0.0
    %1276 = vmatprep.subr.mxu0 0.0
    %1277 = vmatpush1.msra.mxu0 0.0
    %1278 = vmatprep.subr.mxu0 0.0
    %1279 = vmatpush1.msra.mxu0 0.0
    %1280 = vmatprep.subr.mxu0 0.0
    %1281 = vmatpush1.msra.mxu0 0.0
    %1282 = vmatprep.subr.mxu0 0.0
    %1283 = vmatpush1.msra.mxu0 0.0
    %1284 = vmatprep.subr.mxu0 0.0
    %1285 = vmatpush1.msra.mxu0 0.0
    %1286 = vmatprep.subr.mxu0 0.0
    %1287 = vmatpush1.msra.mxu0 0.0
    %1288 = vmatprep.subr.mxu0 0.0
    %1289 = vmatpush1.msra.mxu0 0.0
    %1290 = vmatprep.subr.mxu0 0.0
    %1291 = vmatpush1.msra.mxu0 0.0
    %1292 = vmatprep.subr.mxu0 0.0
    %1293 = vmatpush1.msra.mxu0 0.0
    %1294 = vmatprep.subr.mxu0 0.0
    %1295 = vmatpush1.msra.mxu0 0.0
    %1296 = vmatprep.subr.mxu0 0.0
    %1297 = vmatpush1.msra.mxu0 0.0
    %1298 = vmatprep.subr.mxu0 0.0
    %1299 = vmatpush1.msra.mxu0 0.0
    %1300 = vmatprep.subr.mxu0 0.0
    %1301 = vmatpush1.msra.mxu0 0.0
    %1302 = vmatprep.subr.mxu0 0.0
    %1303 = vmatpush1.msra.mxu0 0.0
    %1304 = vmatprep.subr.mxu0 0.0
    %1305 = vmatpush1.msra.mxu0 0.0
    %1306 = vmatprep.mubr.f32.mxu0 0.0
    %1307 = vmatmul.mubr.f32.gmra.mrb[0].mxu0 %v1240
    %v1308 = vpop.f32.mrb[0].mxu0
    %v1309 = vadd.f32 0.0, %v1308
    %v1310 = vpop.f32.mrb[0].mxu0
    %1311 = vdwg.mxu0
    %v1313 = vrot.slane %v1309, 6
    %v1315 = vadd.f32 %v1122, %v1313
    %v1316 = vxor.u32 %v1315, 2147483648
    %v1317 = vmul.f32 %v1316, 1.442695
    %v1318 = vpow.pop %v1317
    %v1319 = vadd.f32 %v1318, 1.0
    %v1320 = vrcp.pop %v1319
    %v1321 = vmul.f32 1.0, %v1320
    %v1322 = vtanh.pop %v1315
    %v1324 = vrot.slane %v1228, 6
    %v1326 = vmul.f32 %v1321, %v1324
    %1328 = vrot.lane.b32.xlu0 %v1322, 96
    %v1329 = vpop.permute.xlu0 %1328
    %v1331 = vmul.f32 %v1321, %v1329
    %1333 = vrot.lane.b32.xlu0 %v1331, 16
    %v1334 = vpop.permute.xlu0 %1333
    %v1336 = vadd.f32 %v1326, %v1334
    %v1337 = vtanh.pop %v1336
    %1339 = vrot.lane.b32.xlu0 %v1337, 32
    %v1340 = vpop.permute.xlu0 %1339
    %v1342 = vmul.f32 %v1321, %v1340
    %1344 = vrot.lane.b32.xlu0 %v1342, 80
    %v1345 = vpop.permute.xlu0 %1344
    %1347 = vst.msk [vmem:[#allocation2] sm:$0xc] %vm368, %v1345
    %v1348 = vrot.slane %v1342, 2
    %1349 = vrot.lane.b32.xlu0 %v1348, 80
    %v1350 = vpop.permute.xlu0 %1349
    %v1351 = vsel %vm69, %v1350, 0
    %1353 = vmatprep.subr.mxu0 0.0
    %1354 = vmatpush1.msra.mxu0 %v1131
    %1355 = vmatprep.subr.mxu0 0.0
    %1356 = vmatpush1.msra.mxu0 %v1132
    %1357 = vmatprep.subr.mxu0 0.0
    %1358 = vmatpush1.msra.mxu0 0.0
    %1359 = vmatprep.subr.mxu0 0.0
    %1360 = vmatpush1.msra.mxu0 0.0
    %1361 = vmatprep.subr.mxu0 0.0
    %1362 = vmatpush1.msra.mxu0 0.0
    %1363 = vmatprep.subr.mxu0 0.0
    %1364 = vmatpush1.msra.mxu0 0.0
    %1365 = vmatprep.subr.mxu0 0.0
    %1366 = vmatpush1.msra.mxu0 0.0
    %1367 = vmatprep.subr.mxu0 0.0
    %1368 = vmatpush1.msra.mxu0 0.0
    %1369 = vmatprep.subr.mxu0 0.0
    %1370 = vmatpush1.msra.mxu0 0.0
    %1371 = vmatprep.subr.mxu0 0.0
    %1372 = vmatpush1.msra.mxu0 0.0
    %1373 = vmatprep.subr.mxu0 0.0
    %1374 = vmatpush1.msra.mxu0 0.0
    %1375 = vmatprep.subr.mxu0 0.0
    %1376 = vmatpush1.msra.mxu0 0.0
    %1377 = vmatprep.subr.mxu0 0.0
    %1378 = vmatpush1.msra.mxu0 0.0
    %1379 = vmatprep.subr.mxu0 0.0
    %1380 = vmatpush1.msra.mxu0 0.0
    %1381 = vmatprep.subr.mxu0 0.0
    %1382 = vmatpush1.msra.mxu0 0.0
    %1383 = vmatprep.subr.mxu0 0.0
    %1384 = vmatpush1.msra.mxu0 0.0
    %1385 = vmatprep.subr.mxu0 0.0
    %1386 = vmatpush1.msra.mxu0 0.0
    %1387 = vmatprep.subr.mxu0 0.0
    %1388 = vmatpush1.msra.mxu0 0.0
    %1389 = vmatprep.subr.mxu0 0.0
    %1390 = vmatpush1.msra.mxu0 0.0
    %1391 = vmatprep.subr.mxu0 0.0
    %1392 = vmatpush1.msra.mxu0 0.0
    %1393 = vmatprep.subr.mxu0 0.0
    %1394 = vmatpush1.msra.mxu0 0.0
    %1395 = vmatprep.subr.mxu0 0.0
    %1396 = vmatpush1.msra.mxu0 0.0
    %1397 = vmatprep.subr.mxu0 0.0
    %1398 = vmatpush1.msra.mxu0 0.0
    %1399 = vmatprep.subr.mxu0 0.0
    %1400 = vmatpush1.msra.mxu0 0.0
    %1401 = vmatprep.subr.mxu0 0.0
    %1402 = vmatpush1.msra.mxu0 0.0
    %1403 = vmatprep.subr.mxu0 0.0
    %1404 = vmatpush1.msra.mxu0 0.0
    %1405 = vmatprep.subr.mxu0 0.0
    %1406 = vmatpush1.msra.mxu0 0.0
    %1407 = vmatprep.subr.mxu0 0.0
    %1408 = vmatpush1.msra.mxu0 0.0
    %1409 = vmatprep.subr.mxu0 0.0
    %1410 = vmatpush1.msra.mxu0 0.0
    %1411 = vmatprep.subr.mxu0 0.0
    %1412 = vmatpush1.msra.mxu0 0.0
    %1413 = vmatprep.subr.mxu0 0.0
    %1414 = vmatpush1.msra.mxu0 0.0
    %1415 = vmatprep.subr.mxu0 0.0
    %1416 = vmatpush1.msra.mxu0 0.0
    %1417 = vmatprep.mubr.f32.mxu0 0.0
    %1418 = vmatmul.mubr.f32.gmra.mrb[0].mxu0 %v1351
    %v1419 = vpop.f32.mrb[0].mxu0
    %v1420 = vadd.f32 0.0, %v1419
    %v1421 = vpop.f32.mrb[0].mxu0
    %1422 = vdwg.mxu0
    %v1424 = vrot.slane %v1420, 4
    %v1426 = vadd.f32 %v1122, %v1424
    %v1427 = vxor.u32 %v1426, 2147483648
    %v1428 = vmul.f32 %v1427, 1.442695
    %v1429 = vpow.pop %v1428
    %v1430 = vadd.f32 %v1429, 1.0
    %v1431 = vrcp.pop %v1430
    %v1432 = vmul.f32 1.0, %v1431
    %v1433 = vtanh.pop %v1426
    %v1435 = vrot.slane %v1336, 6
    %v1437 = vmul.f32 %v1432, %v1435
    %1439 = vrot.lane.b32.xlu0 %v1433, 96
    %v1440 = vpop.permute.xlu0 %1439
    %v1442 = vmul.f32 %v1432, %v1440
    %1444 = vrot.lane.b32.xlu0 %v1442, 16
    %v1445 = vpop.permute.xlu0 %1444
    %v1447 = vadd.f32 %v1437, %v1445
    %v1448 = vtanh.pop %v1447
    %1450 = vrot.lane.b32.xlu0 %v1448, 32
    %v1451 = vpop.permute.xlu0 %1450
    %v1453 = vmul.f32 %v1432, %v1451
    %1455 = vrot.lane.b32.xlu0 %v1453, 80
    %v1456 = vpop.permute.xlu0 %1455
    %1458 = vst.msk [vmem:[#allocation2] sm:$0x30] %vm480, %v1456
    %v1459 = vrot.slane %v1453, 4
    %1460 = vrot.lane.b32.xlu0 %v1459, 80
    %v1461 = vpop.permute.xlu0 %1460
    %v1462 = vsel %vm69, %v1461, 0
    %1464 = vmatprep.subr.mxu0 0.0
    %1465 = vmatpush1.msra.mxu0 %v1131
    %1466 = vmatprep.subr.mxu0 0.0
    %1467 = vmatpush1.msra.mxu0 %v1132
    %1468 = vmatprep.subr.mxu0 0.0
    %1469 = vmatpush1.msra.mxu0 0.0
    %1470 = vmatprep.subr.mxu0 0.0
    %1471 = vmatpush1.msra.mxu0 0.0
    %1472 = vmatprep.subr.mxu0 0.0
    %1473 = vmatpush1.msra.mxu0 0.0
    %1474 = vmatprep.subr.mxu0 0.0
    %1475 = vmatpush1.msra.mxu0 0.0
    %1476 = vmatprep.subr.mxu0 0.0
    %1477 = vmatpush1.msra.mxu0 0.0
    %1478 = vmatprep.subr.mxu0 0.0
    %1479 = vmatpush1.msra.mxu0 0.0
    %1480 = vmatprep.subr.mxu0 0.0
    %1481 = vmatpush1.msra.mxu0 0.0
    %1482 = vmatprep.subr.mxu0 0.0
    %1483 = vmatpush1.msra.mxu0 0.0
    %1484 = vmatprep.subr.mxu0 0.0
    %1485 = vmatpush1.msra.mxu0 0.0
    %1486 = vmatprep.subr.mxu0 0.0
    %1487 = vmatpush1.msra.mxu0 0.0
    %1488 = vmatprep.subr.mxu0 0.0
    %1489 = vmatpush1.msra.mxu0 0.0
    %1490 = vmatprep.subr.mxu0 0.0
    %1491 = vmatpush1.msra.mxu0 0.0
    %1492 = vmatprep.subr.mxu0 0.0
    %1493 = vmatpush1.msra.mxu0 0.0
    %1494 = vmatprep.subr.mxu0 0.0
    %1495 = vmatpush1.msra.mxu0 0.0
    %1496 = vmatprep.subr.mxu0 0.0
    %1497 = vmatpush1.msra.mxu0 0.0
    %1498 = vmatprep.subr.mxu0 0.0
    %1499 = vmatpush1.msra.mxu0 0.0
    %1500 = vmatprep.subr.mxu0 0.0
    %1501 = vmatpush1.msra.mxu0 0.0
    %1502 = vmatprep.subr.mxu0 0.0
    %1503 = vmatpush1.msra.mxu0 0.0
    %1504 = vmatprep.subr.mxu0 0.0
    %1505 = vmatpush1.msra.mxu0 0.0
    %1506 = vmatprep.subr.mxu0 0.0
    %1507 = vmatpush1.msra.mxu0 0.0
    %1508 = vmatprep.subr.mxu0 0.0
    %1509 = vmatpush1.msra.mxu0 0.0
    %1510 = vmatprep.subr.mxu0 0.0
    %1511 = vmatpush1.msra.mxu0 0.0
    %1512 = vmatprep.subr.mxu0 0.0
    %1513 = vmatpush1.msra.mxu0 0.0
    %1514 = vmatprep.subr.mxu0 0.0
    %1515 = vmatpush1.msra.mxu0 0.0
    %1516 = vmatprep.subr.mxu0 0.0
    %1517 = vmatpush1.msra.mxu0 0.0
    %1518 = vmatprep.subr.mxu0 0.0
    %1519 = vmatpush1.msra.mxu0 0.0
    %1520 = vmatprep.subr.mxu0 0.0
    %1521 = vmatpush1.msra.mxu0 0.0
    %1522 = vmatprep.subr.mxu0 0.0
    %1523 = vmatpush1.msra.mxu0 0.0
    %1524 = vmatprep.subr.mxu0 0.0
    %1525 = vmatpush1.msra.mxu0 0.0
    %1526 = vmatprep.subr.mxu0 0.0
    %1527 = vmatpush1.msra.mxu0 0.0
    %1528 = vmatprep.mubr.f32.mxu0 0.0
    %1529 = vmatmul.mubr.f32.gmra.mrb[0].mxu0 %v1462
    %v1530 = vpop.f32.mrb[0].mxu0
    %v1531 = vadd.f32 0.0, %v1530
    %v1532 = vpop.f32.mrb[0].mxu0
    %1533 = vdwg.mxu0
    %v1535 = vrot.slane %v1531, 2
    %v1537 = vadd.f32 %v1122, %v1535
    %v1538 = vxor.u32 %v1537, 2147483648
    %v1539 = vmul.f32 %v1538, 1.442695
    %v1540 = vpow.pop %v1539
    %v1541 = vadd.f32 %v1540, 1.0
    %v1542 = vrcp.pop %v1541
    %v1543 = vmul.f32 1.0, %v1542
    %v1544 = vtanh.pop %v1537
    %v1546 = vrot.slane %v1447, 6
    %v1548 = vmul.f32 %v1543, %v1546
    %1550 = vrot.lane.b32.xlu0 %v1544, 96
    %v1551 = vpop.permute.xlu0 %1550
    %v1553 = vmul.f32 %v1543, %v1551
    %1555 = vrot.lane.b32.xlu0 %v1553, 16
    %v1556 = vpop.permute.xlu0 %1555
    %v1558 = vadd.f32 %v1548, %v1556
    %v1559 = vtanh.pop %v1558
    %1561 = vrot.lane.b32.xlu0 %v1559, 32
    %v1562 = vpop.permute.xlu0 %1561
    %v1564 = vmul.f32 %v1543, %v1562
    %1566 = vrot.lane.b32.xlu0 %v1564, 80
    %v1567 = vpop.permute.xlu0 %1566
    %1569 = vst.msk [vmem:[#allocation2] sm:$0xc0] %vm592, %v1567
    %v1570 = vrot.slane %v1564, 6
    %1571 = vrot.lane.b32.xlu0 %v1570, 80
    %v1572 = vpop.permute.xlu0 %1571
    %v1573 = vsel %vm69, %v1572, 0
    %1575 = vmatprep.subr.mxu0 0.0
    %1576 = vmatpush1.msra.mxu0 %v1131
    %1577 = vmatprep.subr.mxu0 0.0
    %1578 = vmatpush1.msra.mxu0 %v1132
    %1579 = vmatprep.subr.mxu0 0.0
    %1580 = vmatpush1.msra.mxu0 0.0
    %1581 = vmatprep.subr.mxu0 0.0
    %1582 = vmatpush1.msra.mxu0 0.0
    %1583 = vmatprep.subr.mxu0 0.0
    %1584 = vmatpush1.msra.mxu0 0.0
    %1585 = vmatprep.subr.mxu0 0.0
    %1586 = vmatpush1.msra.mxu0 0.0
    %1587 = vmatprep.subr.mxu0 0.0
    %1588 = vmatpush1.msra.mxu0 0.0
    %1589 = vmatprep.subr.mxu0 0.0
    %1590 = vmatpush1.msra.mxu0 0.0
    %1591 = vmatprep.subr.mxu0 0.0
    %1592 = vmatpush1.msra.mxu0 0.0
    %1593 = vmatprep.subr.mxu0 0.0
    %1594 = vmatpush1.msra.mxu0 0.0
    %1595 = vmatprep.subr.mxu0 0.0
    %1596 = vmatpush1.msra.mxu0 0.0
    %1597 = vmatprep.subr.mxu0 0.0
    %1598 = vmatpush1.msra.mxu0 0.0
    %1599 = vmatprep.subr.mxu0 0.0
    %1600 = vmatpush1.msra.mxu0 0.0
    %1601 = vmatprep.subr.mxu0 0.0
    %1602 = vmatpush1.msra.mxu0 0.0
    %1603 = vmatprep.subr.mxu0 0.0
    %1604 = vmatpush1.msra.mxu0 0.0
    %1605 = vmatprep.subr.mxu0 0.0
    %1606 = vmatpush1.msra.mxu0 0.0
    %1607 = vmatprep.subr.mxu0 0.0
    %1608 = vmatpush1.msra.mxu0 0.0
    %1609 = vmatprep.subr.mxu0 0.0
    %1610 = vmatpush1.msra.mxu0 0.0
    %1611 = vmatprep.subr.mxu0 0.0
    %1612 = vmatpush1.msra.mxu0 0.0
    %1613 = vmatprep.subr.mxu0 0.0
    %1614 = vmatpush1.msra.mxu0 0.0
    %1615 = vmatprep.subr.mxu0 0.0
    %1616 = vmatpush1.msra.mxu0 0.0
    %1617 = vmatprep.subr.mxu0 0.0
    %1618 = vmatpush1.msra.mxu0 0.0
    %1619 = vmatprep.subr.mxu0 0.0
    %1620 = vmatpush1.msra.mxu0 0.0
    %1621 = vmatprep.subr.mxu0 0.0
    %1622 = vmatpush1.msra.mxu0 0.0
    %1623 = vmatprep.subr.mxu0 0.0
    %1624 = vmatpush1.msra.mxu0 0.0
    %1625 = vmatprep.subr.mxu0 0.0
    %1626 = vmatpush1.msra.mxu0 0.0
    %1627 = vmatprep.subr.mxu0 0.0
    %1628 = vmatpush1.msra.mxu0 0.0
    %1629 = vmatprep.subr.mxu0 0.0
    %1630 = vmatpush1.msra.mxu0 0.0
    %1631 = vmatprep.subr.mxu0 0.0
    %1632 = vmatpush1.msra.mxu0 0.0
    %1633 = vmatprep.subr.mxu0 0.0
    %1634 = vmatpush1.msra.mxu0 0.0
    %1635 = vmatprep.subr.mxu0 0.0
    %1636 = vmatpush1.msra.mxu0 0.0
    %1637 = vmatprep.subr.mxu0 0.0
    %1638 = vmatpush1.msra.mxu0 0.0
    %1639 = vmatprep.mubr.f32.mxu0 0.0
    %1640 = vmatmul.mubr.f32.gmra.mrb[0].mxu0 %v1573
    %v1641 = vpop.f32.mrb[0].mxu0
    %v1642 = vadd.f32 0.0, %v1641
    %v1643 = vpop.f32.mrb[0].mxu0
    %1644 = vdwg.mxu0
    %v1645 = vadd.f32 %v1127, %v1642
    %v1646 = vxor.u32 %v1645, 2147483648
    %v1647 = vmul.f32 %v1646, 1.442695
    %v1648 = vpow.pop %v1647
    %v1649 = vadd.f32 %v1648, 1.0
    %v1650 = vrcp.pop %v1649
    %v1651 = vmul.f32 1.0, %v1650
    %v1652 = vtanh.pop %v1645
    %v1654 = vrot.slane %v1558, 6
    %v1656 = vmul.f32 %v1651, %v1654
    %1658 = vrot.lane.b32.xlu0 %v1652, 96
    %v1659 = vpop.permute.xlu0 %1658
    %v1661 = vmul.f32 %v1651, %v1659
    %1663 = vrot.lane.b32.xlu0 %v1661, 16
    %v1664 = vpop.permute.xlu0 %1663
    %v1666 = vadd.f32 %v1656, %v1664
    %v1667 = vtanh.pop %v1666
    %1669 = vrot.lane.b32.xlu0 %v1667, 32
    %v1670 = vpop.permute.xlu0 %1669
    %v1672 = vmul.f32 %v1651, %v1670
    %1674 = vrot.lane.b32.xlu0 %v1672, 80
    %v1675 = vpop.permute.xlu0 %1674
    %1677 = vst.msk [vmem:[#allocation2 + $0x8] sm:$0x3] %vm259, %v1675
    %v1678 = vsel %vm69, %v1675, 0
    %1680 = vmatprep.subr.mxu0 0.0
    %1681 = vmatpush1.msra.mxu0 %v1131
    %1682 = vmatprep.subr.mxu0 0.0
    %1683 = vmatpush1.msra.mxu0 %v1132
    %1684 = vmatprep.subr.mxu0 0.0
    %1685 = vmatpush1.msra.mxu0 0.0
    %1686 = vmatprep.subr.mxu0 0.0
    %1687 = vmatpush1.msra.mxu0 0.0
    %1688 = vmatprep.subr.mxu0 0.0
    %1689 = vmatpush1.msra.mxu0 0.0
    %1690 = vmatprep.subr.mxu0 0.0
    %1691 = vmatpush1.msra.mxu0 0.0
    %1692 = vmatprep.subr.mxu0 0.0
    %1693 = vmatpush1.msra.mxu0 0.0
    %1694 = vmatprep.subr.mxu0 0.0
    %1695 = vmatpush1.msra.mxu0 0.0
    %1696 = vmatprep.subr.mxu0 0.0
    %1697 = vmatpush1.msra.mxu0 0.0
    %1698 = vmatprep.subr.mxu0 0.0
    %1699 = vmatpush1.msra.mxu0 0.0
    %1700 = vmatprep.subr.mxu0 0.0
    %1701 = vmatpush1.msra.mxu0 0.0
    %1702 = vmatprep.subr.mxu0 0.0
    %1703 = vmatpush1.msra.mxu0 0.0
    %1704 = vmatprep.subr.mxu0 0.0
    %1705 = vmatpush1.msra.mxu0 0.0
    %1706 = vmatprep.subr.mxu0 0.0
    %1707 = vmatpush1.msra.mxu0 0.0
    %1708 = vmatprep.subr.mxu0 0.0
    %1709 = vmatpush1.msra.mxu0 0.0
    %1710 = vmatprep.subr.mxu0 0.0
    %1711 = vmatpush1.msra.mxu0 0.0
    %1712 = vmatprep.subr.mxu0 0.0
    %1713 = vmatpush1.msra.mxu0 0.0
    %1714 = vmatprep.subr.mxu0 0.0
    %1715 = vmatpush1.msra.mxu0 0.0
    %1716 = vmatprep.subr.mxu0 0.0
    %1717 = vmatpush1.msra.mxu0 0.0
    %1718 = vmatprep.subr.mxu0 0.0
    %1719 = vmatpush1.msra.mxu0 0.0
    %1720 = vmatprep.subr.mxu0 0.0
    %1721 = vmatpush1.msra.mxu0 0.0
    %1722 = vmatprep.subr.mxu0 0.0
    %1723 = vmatpush1.msra.mxu0 0.0
    %1724 = vmatprep.subr.mxu0 0.0
    %1725 = vmatpush1.msra.mxu0 0.0
    %1726 = vmatprep.subr.mxu0 0.0
    %1727 = vmatpush1.msra.mxu0 0.0
    %1728 = vmatprep.subr.mxu0 0.0
    %1729 = vmatpush1.msra.mxu0 0.0
    %1730 = vmatprep.subr.mxu0 0.0
    %1731 = vmatpush1.msra.mxu0 0.0
    %1732 = vmatprep.subr.mxu0 0.0
    %1733 = vmatpush1.msra.mxu0 0.0
    %1734 = vmatprep.subr.mxu0 0.0
    %1735 = vmatpush1.msra.mxu0 0.0
    %1736 = vmatprep.subr.mxu0 0.0
    %1737 = vmatpush1.msra.mxu0 0.0
    %1738 = vmatprep.subr.mxu0 0.0
    %1739 = vmatpush1.msra.mxu0 0.0
    %1740 = vmatprep.subr.mxu0 0.0
    %1741 = vmatpush1.msra.mxu0 0.0
    %1742 = vmatprep.subr.mxu0 0.0
    %1743 = vmatpush1.msra.mxu0 0.0
    %1744 = vmatprep.mubr.f32.mxu0 0.0
    %1745 = vmatmul.mubr.f32.gmra.mrb[0].mxu0 %v1678
    %v1746 = vpop.f32.mrb[0].mxu0
    %v1747 = vadd.f32 0.0, %v1746
    %v1748 = vpop.f32.mrb[0].mxu0
    %1749 = vdwg.mxu0
    %v1751 = vrot.slane %v1747, 6
    %v1753 = vadd.f32 %v1127, %v1751
    %v1754 = vxor.u32 %v1753, 2147483648
    %v1755 = vmul.f32 %v1754, 1.442695
    %v1756 = vpow.pop %v1755
    %v1757 = vadd.f32 %v1756, 1.0
    %v1758 = vrcp.pop %v1757
    %v1759 = vmul.f32 1.0, %v1758
    %v1760 = vtanh.pop %v1753
    %v1762 = vrot.slane %v1666, 6
    %v1764 = vmul.f32 %v1759, %v1762
    %1766 = vrot.lane.b32.xlu0 %v1760, 96
    %v1767 = vpop.permute.xlu0 %1766
    %v1769 = vmul.f32 %v1759, %v1767
    %1771 = vrot.lane.b32.xlu0 %v1769, 16
    %v1772 = vpop.permute.xlu0 %1771
    %v1774 = vadd.f32 %v1764, %v1772
    %v1775 = vtanh.pop %v1774
    %1777 = vrot.lane.b32.xlu0 %v1775, 32
    %v1778 = vpop.permute.xlu0 %1777
    %v1780 = vmul.f32 %v1759, %v1778
    %1782 = vrot.lane.b32.xlu0 %v1780, 80
    %v1783 = vpop.permute.xlu0 %1782
    %1785 = vst.msk [vmem:[#allocation2 + $0x8] sm:$0xc] %vm368, %v1783
    %v1786 = vrot.slane %v1780, 2
    %1787 = vrot.lane.b32.xlu0 %v1786, 80
    %v1788 = vpop.permute.xlu0 %1787
    %v1789 = vsel %vm69, %v1788, 0
    %1791 = vmatprep.subr.mxu0 0.0
    %1792 = vmatpush1.msra.mxu0 %v1131
    %1793 = vmatprep.subr.mxu0 0.0
    %1794 = vmatpush1.msra.mxu0 %v1132
    %1795 = vmatprep.subr.mxu0 0.0
    %1796 = vmatpush1.msra.mxu0 0.0
    %1797 = vmatprep.subr.mxu0 0.0
    %1798 = vmatpush1.msra.mxu0 0.0
    %1799 = vmatprep.subr.mxu0 0.0
    %1800 = vmatpush1.msra.mxu0 0.0
    %1801 = vmatprep.subr.mxu0 0.0
    %1802 = vmatpush1.msra.mxu0 0.0
    %1803 = vmatprep.subr.mxu0 0.0
    %1804 = vmatpush1.msra.mxu0 0.0
    %1805 = vmatprep.subr.mxu0 0.0
    %1806 = vmatpush1.msra.mxu0 0.0
    %1807 = vmatprep.subr.mxu0 0.0
    %1808 = vmatpush1.msra.mxu0 0.0
    %1809 = vmatprep.subr.mxu0 0.0
    %1810 = vmatpush1.msra.mxu0 0.0
    %1811 = vmatprep.subr.mxu0 0.0
    %1812 = vmatpush1.msra.mxu0 0.0
    %1813 = vmatprep.subr.mxu0 0.0
    %1814 = vmatpush1.msra.mxu0 0.0
    %1815 = vmatprep.subr.mxu0 0.0
    %1816 = vmatpush1.msra.mxu0 0.0
    %1817 = vmatprep.subr.mxu0 0.0
    %1818 = vmatpush1.msra.mxu0 0.0
    %1819 = vmatprep.subr.mxu0 0.0
    %1820 = vmatpush1.msra.mxu0 0.0
    %1821 = vmatprep.subr.mxu0 0.0
    %1822 = vmatpush1.msra.mxu0 0.0
    %1823 = vmatprep.subr.mxu0 0.0
    %1824 = vmatpush1.msra.mxu0 0.0
    %1825 = vmatprep.subr.mxu0 0.0
    %1826 = vmatpush1.msra.mxu0 0.0
    %1827 = vmatprep.subr.mxu0 0.0
    %1828 = vmatpush1.msra.mxu0 0.0
    %1829 = vmatprep.subr.mxu0 0.0
    %1830 = vmatpush1.msra.mxu0 0.0
    %1831 = vmatprep.subr.mxu0 0.0
    %1832 = vmatpush1.msra.mxu0 0.0
    %1833 = vmatprep.subr.mxu0 0.0
    %1834 = vmatpush1.msra.mxu0 0.0
    %1835 = vmatprep.subr.mxu0 0.0
    %1836 = vmatpush1.msra.mxu0 0.0
    %1837 = vmatprep.subr.mxu0 0.0
    %1838 = vmatpush1.msra.mxu0 0.0
    %1839 = vmatprep.subr.mxu0 0.0
    %1840 = vmatpush1.msra.mxu0 0.0
    %1841 = vmatprep.subr.mxu0 0.0
    %1842 = vmatpush1.msra.mxu0 0.0
    %1843 = vmatprep.subr.mxu0 0.0
    %1844 = vmatpush1.msra.mxu0 0.0
    %1845 = vmatprep.subr.mxu0 0.0
    %1846 = vmatpush1.msra.mxu0 0.0
    %1847 = vmatprep.subr.mxu0 0.0
    %1848 = vmatpush1.msra.mxu0 0.0
    %1849 = vmatprep.subr.mxu0 0.0
    %1850 = vmatpush1.msra.mxu0 0.0
    %1851 = vmatprep.subr.mxu0 0.0
    %1852 = vmatpush1.msra.mxu0 0.0
    %1853 = vmatprep.subr.mxu0 0.0
    %1854 = vmatpush1.msra.mxu0 0.0
    %1855 = vmatprep.mubr.f32.mxu0 0.0
    %1856 = vmatmul.mubr.f32.gmra.mrb[0].mxu0 %v1789
    %v1857 = vpop.f32.mrb[0].mxu0
    %v1858 = vadd.f32 0.0, %v1857
    %v1859 = vpop.f32.mrb[0].mxu0
    %1860 = vdwg.mxu0
    %v1862 = vrot.slane %v1858, 4
    %v1864 = vadd.f32 %v1127, %v1862
    %v1865 = vxor.u32 %v1864, 2147483648
    %v1866 = vmul.f32 %v1865, 1.442695
    %v1867 = vpow.pop %v1866
    %v1868 = vadd.f32 %v1867, 1.0
    %v1869 = vrcp.pop %v1868
    %v1870 = vmul.f32 1.0, %v1869
    %v1871 = vtanh.pop %v1864
    %v1873 = vrot.slane %v1774, 6
    %v1875 = vmul.f32 %v1870, %v1873
    %1877 = vrot.lane.b32.xlu0 %v1871, 96
    %v1878 = vpop.permute.xlu0 %1877
    %v1880 = vmul.f32 %v1870, %v1878
    %1882 = vrot.lane.b32.xlu0 %v1880, 16
    %v1883 = vpop.permute.xlu0 %1882
    %v1885 = vadd.f32 %v1875, %v1883
    %v1886 = vtanh.pop %v1885
    %1888 = vrot.lane.b32.xlu0 %v1886, 32
    %v1889 = vpop.permute.xlu0 %1888
    %v1891 = vmul.f32 %v1870, %v1889
    %1893 = vrot.lane.b32.xlu0 %v1891, 80
    %v1894 = vpop.permute.xlu0 %1893
    %1896 = vst.msk [vmem:[#allocation2 + $0x8] sm:$0x30] %vm480, %v1894
    %v1897 = vrot.slane %v1891, 4
    %1898 = vrot.lane.b32.xlu0 %v1897, 80
    %v1899 = vpop.permute.xlu0 %1898
    %v1900 = vsel %vm69, %v1899, 0
    %1902 = vmatprep.subr.mxu0 0.0
    %1903 = vmatpush1.msra.mxu0 %v1131
    %1904 = vmatprep.subr.mxu0 0.0
    %1905 = vmatpush1.msra.mxu0 %v1132
    %1906 = vmatprep.subr.mxu0 0.0
    %1907 = vmatpush1.msra.mxu0 0.0
    %1908 = vmatprep.subr.mxu0 0.0
    %1909 = vmatpush1.msra.mxu0 0.0
    %1910 = vmatprep.subr.mxu0 0.0
    %1911 = vmatpush1.msra.mxu0 0.0
    %1912 = vmatprep.subr.mxu0 0.0
    %1913 = vmatpush1.msra.mxu0 0.0
    %1914 = vmatprep.subr.mxu0 0.0
    %1915 = vmatpush1.msra.mxu0 0.0
    %1916 = vmatprep.subr.mxu0 0.0
    %1917 = vmatpush1.msra.mxu0 0.0
    %1918 = vmatprep.subr.mxu0 0.0
    %1919 = vmatpush1.msra.mxu0 0.0
    %1920 = vmatprep.subr.mxu0 0.0
    %1921 = vmatpush1.msra.mxu0 0.0
    %1922 = vmatprep.subr.mxu0 0.0
    %1923 = vmatpush1.msra.mxu0 0.0
    %1924 = vmatprep.subr.mxu0 0.0
    %1925 = vmatpush1.msra.mxu0 0.0
    %1926 = vmatprep.subr.mxu0 0.0
    %1927 = vmatpush1.msra.mxu0 0.0
    %1928 = vmatprep.subr.mxu0 0.0
    %1929 = vmatpush1.msra.mxu0 0.0
    %1930 = vmatprep.subr.mxu0 0.0
    %1931 = vmatpush1.msra.mxu0 0.0
    %1932 = vmatprep.subr.mxu0 0.0
    %1933 = vmatpush1.msra.mxu0 0.0
    %1934 = vmatprep.subr.mxu0 0.0
    %1935 = vmatpush1.msra.mxu0 0.0
    %1936 = vmatprep.subr.mxu0 0.0
    %1937 = vmatpush1.msra.mxu0 0.0
    %1938 = vmatprep.subr.mxu0 0.0
    %1939 = vmatpush1.msra.mxu0 0.0
    %1940 = vmatprep.subr.mxu0 0.0
    %1941 = vmatpush1.msra.mxu0 0.0
    %1942 = vmatprep.subr.mxu0 0.0
    %1943 = vmatpush1.msra.mxu0 0.0
    %1944 = vmatprep.subr.mxu0 0.0
    %1945 = vmatpush1.msra.mxu0 0.0
    %1946 = vmatprep.subr.mxu0 0.0
    %1947 = vmatpush1.msra.mxu0 0.0
    %1948 = vmatprep.subr.mxu0 0.0
    %1949 = vmatpush1.msra.mxu0 0.0
    %1950 = vmatprep.subr.mxu0 0.0
    %1951 = vmatpush1.msra.mxu0 0.0
    %1952 = vmatprep.subr.mxu0 0.0
    %1953 = vmatpush1.msra.mxu0 0.0
    %1954 = vmatprep.subr.mxu0 0.0
    %1955 = vmatpush1.msra.mxu0 0.0
    %1956 = vmatprep.subr.mxu0 0.0
    %1957 = vmatpush1.msra.mxu0 0.0
    %1958 = vmatprep.subr.mxu0 0.0
    %1959 = vmatpush1.msra.mxu0 0.0
    %1960 = vmatprep.subr.mxu0 0.0
    %1961 = vmatpush1.msra.mxu0 0.0
    %1962 = vmatprep.subr.mxu0 0.0
    %1963 = vmatpush1.msra.mxu0 0.0
    %1964 = vmatprep.subr.mxu0 0.0
    %1965 = vmatpush1.msra.mxu0 0.0
    %1966 = vmatprep.mubr.f32.mxu0 0.0
    %1967 = vmatmul.mubr.f32.gmra.mrb[0].mxu0 %v1900
    %v1968 = vpop.f32.mrb[0].mxu0
    %v1969 = vadd.f32 0.0, %v1968
    %v1970 = vpop.f32.mrb[0].mxu0
    %1971 = vdwg.mxu0
    %v1973 = vrot.slane %v1969, 2
    %v1975 = vadd.f32 %v1127, %v1973
    %v1976 = vxor.u32 %v1975, 2147483648
    %v1977 = vmul.f32 %v1976, 1.442695
    %v1978 = vpow.pop %v1977
    %v1979 = vadd.f32 %v1978, 1.0
    %v1980 = vrcp.pop %v1979
    %v1981 = vmul.f32 1.0, %v1980
    %v1982 = vtanh.pop %v1975
    %v1984 = vrot.slane %v1885, 6
    %v1986 = vmul.f32 %v1981, %v1984
    %1988 = vrot.lane.b32.xlu0 %v1982, 96
    %v1989 = vpop.permute.xlu0 %1988
    %v1991 = vmul.f32 %v1981, %v1989
    %1993 = vrot.lane.b32.xlu0 %v1991, 16
    %v1994 = vpop.permute.xlu0 %1993
    %v1996 = vadd.f32 %v1986, %v1994
    %v1997 = vtanh.pop %v1996
    %1999 = vrot.lane.b32.xlu0 %v1997, 32
    %v2000 = vpop.permute.xlu0 %1999
    %v2002 = vmul.f32 %v1981, %v2000
    %2004 = vrot.lane.b32.xlu0 %v2002, 80
    %v2005 = vpop.permute.xlu0 %2004
    %2007 = vst.msk [vmem:[#allocation2 + $0x8] sm:$0xc0] %vm592, %v2005
    %v2008 = vld [vmem:[#allocation2] sm:$0xff]
    %v2009 = vld [vmem:[#allocation2 + $0x8] sm:$0xff]
    %s2010 = scalar_lea.vmem [#allocation3], 32
    %v2011 = vld [vmem:[%s2010] sm:$0xff]
    %v2012 = vld [vmem:[%s2010 + $0x8] sm:$0xff]
    %s2013 = scalar_lea.vmem %s5, 2
    %v2014 = vld [vmem:[%s2013] sm:$0x1]
    %v2016 = vlaneseq
    %v2017 = vshrl.u32 %v2016, 7
    %v2018 = vsub.s32 0, %v2017
    %v2019 = vrot.slane %v2014, %v2018
    %v2022 = vsel %vm69, %v2008, 0
    %v2025 = vsel %vm69, %v2009, 0
    %2027 = vmatprep.subr.mxu0 0.0
    %2028 = vmatpush1.msra.mxu0 %v2011
    %2029 = vmatprep.subr.mxu0 0.0
    %2030 = vmatpush1.msra.mxu0 %v2012
    %2031 = vmatprep.subr.mxu0 0.0
    %2032 = vmatpush1.msra.mxu0 0.0
    %2033 = vmatprep.subr.mxu0 0.0
    %2034 = vmatpush1.msra.mxu0 0.0
    %2035 = vmatprep.subr.mxu0 0.0
    %2036 = vmatpush1.msra.mxu0 0.0
    %2037 = vmatprep.subr.mxu0 0.0
    %2038 = vmatpush1.msra.mxu0 0.0
    %2039 = vmatprep.subr.mxu0 0.0
    %2040 = vmatpush1.msra.mxu0 0.0
    %2041 = vmatprep.subr.mxu0 0.0
    %2042 = vmatpush1.msra.mxu0 0.0
    %2043 = vmatprep.subr.mxu0 0.0
    %2044 = vmatpush1.msra.mxu0 0.0
    %2045 = vmatprep.subr.mxu0 0.0
    %2046 = vmatpush1.msra.mxu0 0.0
    %2047 = vmatprep.subr.mxu0 0.0
    %2048 = vmatpush1.msra.mxu0 0.0
    %2049 = vmatprep.subr.mxu0 0.0
    %2050 = vmatpush1.msra.mxu0 0.0
    %2051 = vmatprep.subr.mxu0 0.0
    %2052 = vmatpush1.msra.mxu0 0.0
    %2053 = vmatprep.subr.mxu0 0.0
    %2054 = vmatpush1.msra.mxu0 0.0
    %2055 = vmatprep.subr.mxu0 0.0
    %2056 = vmatpush1.msra.mxu0 0.0
    %2057 = vmatprep.subr.mxu0 0.0
    %2058 = vmatpush1.msra.mxu0 0.0
    %2059 = vmatprep.subr.mxu0 0.0
    %2060 = vmatpush1.msra.mxu0 0.0
    %2061 = vmatprep.subr.mxu0 0.0
    %2062 = vmatpush1.msra.mxu0 0.0
    %2063 = vmatprep.subr.mxu0 0.0
    %2064 = vmatpush1.msra.mxu0 0.0
    %2065 = vmatprep.subr.mxu0 0.0
    %2066 = vmatpush1.msra.mxu0 0.0
    %2067 = vmatprep.subr.mxu0 0.0
    %2068 = vmatpush1.msra.mxu0 0.0
    %2069 = vmatprep.subr.mxu0 0.0
    %2070 = vmatpush1.msra.mxu0 0.0
    %2071 = vmatprep.subr.mxu0 0.0
    %2072 = vmatpush1.msra.mxu0 0.0
    %2073 = vmatprep.subr.mxu0 0.0
    %2074 = vmatpush1.msra.mxu0 0.0
    %2075 = vmatprep.subr.mxu0 0.0
    %2076 = vmatpush1.msra.mxu0 0.0
    %2077 = vmatprep.subr.mxu0 0.0
    %2078 = vmatpush1.msra.mxu0 0.0
    %2079 = vmatprep.subr.mxu0 0.0
    %2080 = vmatpush1.msra.mxu0 0.0
    %2081 = vmatprep.subr.mxu0 0.0
    %2082 = vmatpush1.msra.mxu0 0.0
    %2083 = vmatprep.subr.mxu0 0.0
    %2084 = vmatpush1.msra.mxu0 0.0
    %2085 = vmatprep.subr.mxu0 0.0
    %2086 = vmatpush1.msra.mxu0 0.0
    %2087 = vmatprep.subr.mxu0 0.0
    %2088 = vmatpush1.msra.mxu0 0.0
    %2089 = vmatprep.subr.mxu0 0.0
    %2090 = vmatpush1.msra.mxu0 0.0
    %2091 = vmatprep.mubr.f32.mxu0 0.0
    %2092 = vmatmul.mubr.f32.gmra.mrb[0].mxu0 %v2022
    %v2093 = vpop.f32.mrb[0].mxu0
    %v2094 = vadd.f32 %v2019, %v2093
    %v2095 = vpop.f32.mrb[0].mxu0
    %2096 = vmatprep.mubr.f32.mxu0 0.0
    %2097 = vmatmul.mubr.f32.gmra.mrb[0].mxu0 %v2025
    %v2098 = vpop.f32.mrb[0].mxu0
    %v2099 = vadd.f32 %v2019, %v2098
    %v2100 = vpop.f32.mrb[0].mxu0
    %2101 = vdwg.mxu0
    %s2102 = scalar_lea.vmem [#allocation6], 32
    %v2103 = vld [vmem:[%s2102] sm:$0xff]
    %v2104 = vld [vmem:[%s2102 + $0x8] sm:$0xff]
    %v2105 = vrot.slane %v1026, 6
    %2106 = vrot.lane.b32.xlu0 %v2105, 80
    %v2107 = vpop.permute.xlu0 %2106
    %v2108 = vsel %vm69, %v2107, 0
    %2110 = vmatprep.subr.mxu0 0.0
    %2111 = vmatpush1.msra.mxu0 %v2103
    %2112 = vmatprep.subr.mxu0 0.0
    %2113 = vmatpush1.msra.mxu0 %v2104
    %2114 = vmatprep.subr.mxu0 0.0
    %2115 = vmatpush1.msra.mxu0 0.0
    %2116 = vmatprep.subr.mxu0 0.0
    %2117 = vmatpush1.msra.mxu0 0.0
    %2118 = vmatprep.subr.mxu0 0.0
    %2119 = vmatpush1.msra.mxu0 0.0
    %2120 = vmatprep.subr.mxu0 0.0
    %2121 = vmatpush1.msra.mxu0 0.0
    %2122 = vmatprep.subr.mxu0 0.0
    %2123 = vmatpush1.msra.mxu0 0.0
    %2124 = vmatprep.subr.mxu0 0.0
    %2125 = vmatpush1.msra.mxu0 0.0
    %2126 = vmatprep.subr.mxu0 0.0
    %2127 = vmatpush1.msra.mxu0 0.0
    %2128 = vmatprep.subr.mxu0 0.0
    %2129 = vmatpush1.msra.mxu0 0.0
    %2130 = vmatprep.subr.mxu0 0.0
    %2131 = vmatpush1.msra.mxu0 0.0
    %2132 = vmatprep.subr.mxu0 0.0
    %2133 = vmatpush1.msra.mxu0 0.0
    %2134 = vmatprep.subr.mxu0 0.0
    %2135 = vmatpush1.msra.mxu0 0.0
    %2136 = vmatprep.subr.mxu0 0.0
    %2137 = vmatpush1.msra.mxu0 0.0
    %2138 = vmatprep.subr.mxu0 0.0
    %2139 = vmatpush1.msra.mxu0 0.0
    %2140 = vmatprep.subr.mxu0 0.0
    %2141 = vmatpush1.msra.mxu0 0.0
    %2142 = vmatprep.subr.mxu0 0.0
    %2143 = vmatpush1.msra.mxu0 0.0
    %2144 = vmatprep.subr.mxu0 0.0
    %2145 = vmatpush1.msra.mxu0 0.0
    %2146 = vmatprep.subr.mxu0 0.0
    %2147 = vmatpush1.msra.mxu0 0.0
    %2148 = vmatprep.subr.mxu0 0.0
    %2149 = vmatpush1.msra.mxu0 0.0
    %2150 = vmatprep.subr.mxu0 0.0
    %2151 = vmatpush1.msra.mxu0 0.0
    %2152 = vmatprep.subr.mxu0 0.0
    %2153 = vmatpush1.msra.mxu0 0.0
    %2154 = vmatprep.subr.mxu0 0.0
    %2155 = vmatpush1.msra.mxu0 0.0
    %2156 = vmatprep.subr.mxu0 0.0
    %2157 = vmatpush1.msra.mxu0 0.0
    %2158 = vmatprep.subr.mxu0 0.0
    %2159 = vmatpush1.msra.mxu0 0.0
    %2160 = vmatprep.subr.mxu0 0.0
    %2161 = vmatpush1.msra.mxu0 0.0
    %2162 = vmatprep.subr.mxu0 0.0
    %2163 = vmatpush1.msra.mxu0 0.0
    %2164 = vmatprep.subr.mxu0 0.0
    %2165 = vmatpush1.msra.mxu0 0.0
    %2166 = vmatprep.subr.mxu0 0.0
    %2167 = vmatpush1.msra.mxu0 0.0
    %2168 = vmatprep.subr.mxu0 0.0
    %2169 = vmatpush1.msra.mxu0 0.0
    %2170 = vmatprep.subr.mxu0 0.0
    %2171 = vmatpush1.msra.mxu0 0.0
    %2172 = vmatprep.subr.mxu0 0.0
    %2173 = vmatpush1.msra.mxu0 0.0
    %2174 = vmatprep.mubr.f32.mxu0 0.0
    %2175 = vmatmul.mubr.f32.gmra.mrb[0].mxu0 %v2108
    %v2176 = vpop.f32.mrb[0].mxu0
    %v2177 = vadd.f32 0.0, %v2176
    %v2178 = vpop.f32.mrb[0].mxu0
    %2179 = vdwg.mxu0
    %v2180 = vadd.f32 %v2094, %v2177
    %v2181 = vxor.u32 %v2180, 2147483648
    %v2182 = vmul.f32 %v2181, 1.442695
    %v2183 = vpow.pop %v2182
    %v2184 = vadd.f32 %v2183, 1.0
    %v2185 = vrcp.pop %v2184
    %v2186 = vmul.f32 1.0, %v2185
    %v2187 = vtanh.pop %v2180
    %v2189 = vrot.slane %v1020, 6
    %v2191 = vmul.f32 %v2186, %v2189
    %2193 = vrot.lane.b32.xlu0 %v2187, 96
    %v2194 = vpop.permute.xlu0 %2193
    %v2196 = vmul.f32 %v2186, %v2194
    %2198 = vrot.lane.b32.xlu0 %v2196, 16
    %v2199 = vpop.permute.xlu0 %2198
    %v2201 = vadd.f32 %v2191, %v2199
    %v2202 = vtanh.pop %v2201
    %2204 = vrot.lane.b32.xlu0 %v2202, 32
    %v2205 = vpop.permute.xlu0 %2204
    %v2207 = vmul.f32 %v2186, %v2205
    %2209 = vrot.lane.b32.xlu0 %v2207, 80
    %v2210 = vpop.permute.xlu0 %2209
    %2212 = vst.msk [vmem:[#allocation2] sm:$0x3] %vm259, %v2210
    %v2213 = vsel %vm69, %v2210, 0
    %2215 = vmatprep.subr.mxu0 0.0
    %2216 = vmatpush1.msra.mxu0 %v2103
    %2217 = vmatprep.subr.mxu0 0.0
    %2218 = vmatpush1.msra.mxu0 %v2104
    %2219 = vmatprep.subr.mxu0 0.0
    %2220 = vmatpush1.msra.mxu0 0.0
    %2221 = vmatprep.subr.mxu0 0.0
    %2222 = vmatpush1.msra.mxu0 0.0
    %2223 = vmatprep.subr.mxu0 0.0
    %2224 = vmatpush1.msra.mxu0 0.0
    %2225 = vmatprep.subr.mxu0 0.0
    %2226 = vmatpush1.msra.mxu0 0.0
    %2227 = vmatprep.subr.mxu0 0.0
    %2228 = vmatpush1.msra.mxu0 0.0
    %2229 = vmatprep.subr.mxu0 0.0
    %2230 = vmatpush1.msra.mxu0 0.0
    %2231 = vmatprep.subr.mxu0 0.0
    %2232 = vmatpush1.msra.mxu0 0.0
    %2233 = vmatprep.subr.mxu0 0.0
    %2234 = vmatpush1.msra.mxu0 0.0
    %2235 = vmatprep.subr.mxu0 0.0
    %2236 = vmatpush1.msra.mxu0 0.0
    %2237 = vmatprep.subr.mxu0 0.0
    %2238 = vmatpush1.msra.mxu0 0.0
    %2239 = vmatprep.subr.mxu0 0.0
    %2240 = vmatpush1.msra.mxu0 0.0
    %2241 = vmatprep.subr.mxu0 0.0
    %2242 = vmatpush1.msra.mxu0 0.0
    %2243 = vmatprep.subr.mxu0 0.0
    %2244 = vmatpush1.msra.mxu0 0.0
    %2245 = vmatprep.subr.mxu0 0.0
    %2246 = vmatpush1.msra.mxu0 0.0
    %2247 = vmatprep.subr.mxu0 0.0
    %2248 = vmatpush1.msra.mxu0 0.0
    %2249 = vmatprep.subr.mxu0 0.0
    %2250 = vmatpush1.msra.mxu0 0.0
    %2251 = vmatprep.subr.mxu0 0.0
    %2252 = vmatpush1.msra.mxu0 0.0
    %2253 = vmatprep.subr.mxu0 0.0
    %2254 = vmatpush1.msra.mxu0 0.0
    %2255 = vmatprep.subr.mxu0 0.0
    %2256 = vmatpush1.msra.mxu0 0.0
    %2257 = vmatprep.subr.mxu0 0.0
    %2258 = vmatpush1.msra.mxu0 0.0
    %2259 = vmatprep.subr.mxu0 0.0
    %2260 = vmatpush1.msra.mxu0 0.0
    %2261 = vmatprep.subr.mxu0 0.0
    %2262 = vmatpush1.msra.mxu0 0.0
    %2263 = vmatprep.subr.mxu0 0.0
    %2264 = vmatpush1.msra.mxu0 0.0
    %2265 = vmatprep.subr.mxu0 0.0
    %2266 = vmatpush1.msra.mxu0 0.0
    %2267 = vmatprep.subr.mxu0 0.0
    %2268 = vmatpush1.msra.mxu0 0.0
    %2269 = vmatprep.subr.mxu0 0.0
    %2270 = vmatpush1.msra.mxu0 0.0
    %2271 = vmatprep.subr.mxu0 0.0
    %2272 = vmatpush1.msra.mxu0 0.0
    %2273 = vmatprep.subr.mxu0 0.0
    %2274 = vmatpush1.msra.mxu0 0.0
    %2275 = vmatprep.subr.mxu0 0.0
    %2276 = vmatpush1.msra.mxu0 0.0
    %2277 = vmatprep.subr.mxu0 0.0
    %2278 = vmatpush1.msra.mxu0 0.0
    %2279 = vmatprep.mubr.f32.mxu0 0.0
    %2280 = vmatmul.mubr.f32.gmra.mrb[0].mxu0 %v2213
    %v2281 = vpop.f32.mrb[0].mxu0
    %v2282 = vadd.f32 0.0, %v2281
    %v2283 = vpop.f32.mrb[0].mxu0
    %2284 = vdwg.mxu0
    %v2286 = vrot.slane %v2282, 6
    %v2288 = vadd.f32 %v2094, %v2286
    %v2289 = vxor.u32 %v2288, 2147483648
    %v2290 = vmul.f32 %v2289, 1.442695
    %v2291 = vpow.pop %v2290
    %v2292 = vadd.f32 %v2291, 1.0
    %v2293 = vrcp.pop %v2292
    %v2294 = vmul.f32 1.0, %v2293
    %v2295 = vtanh.pop %v2288
    %v2297 = vrot.slane %v2201, 6
    %v2299 = vmul.f32 %v2294, %v2297
    %2301 = vrot.lane.b32.xlu0 %v2295, 96
    %v2302 = vpop.permute.xlu0 %2301
    %v2304 = vmul.f32 %v2294, %v2302
    %2306 = vrot.lane.b32.xlu0 %v2304, 16
    %v2307 = vpop.permute.xlu0 %2306
    %v2309 = vadd.f32 %v2299, %v2307
    %v2310 = vtanh.pop %v2309
    %2312 = vrot.lane.b32.xlu0 %v2310, 32
    %v2313 = vpop.permute.xlu0 %2312
    %v2315 = vmul.f32 %v2294, %v2313
    %2317 = vrot.lane.b32.xlu0 %v2315, 80
    %v2318 = vpop.permute.xlu0 %2317
    %2320 = vst.msk [vmem:[#allocation2] sm:$0xc] %vm368, %v2318
    %v2321 = vrot.slane %v2315, 2
    %2322 = vrot.lane.b32.xlu0 %v2321, 80
    %v2323 = vpop.permute.xlu0 %2322
    %v2324 = vsel %vm69, %v2323, 0
    %2326 = vmatprep.subr.mxu0 0.0
    %2327 = vmatpush1.msra.mxu0 %v2103
    %2328 = vmatprep.subr.mxu0 0.0
    %2329 = vmatpush1.msra.mxu0 %v2104
    %2330 = vmatprep.subr.mxu0 0.0
    %2331 = vmatpush1.msra.mxu0 0.0
    %2332 = vmatprep.subr.mxu0 0.0
    %2333 = vmatpush1.msra.mxu0 0.0
    %2334 = vmatprep.subr.mxu0 0.0
    %2335 = vmatpush1.msra.mxu0 0.0
    %2336 = vmatprep.subr.mxu0 0.0
    %2337 = vmatpush1.msra.mxu0 0.0
    %2338 = vmatprep.subr.mxu0 0.0
    %2339 = vmatpush1.msra.mxu0 0.0
    %2340 = vmatprep.subr.mxu0 0.0
    %2341 = vmatpush1.msra.mxu0 0.0
    %2342 = vmatprep.subr.mxu0 0.0
    %2343 = vmatpush1.msra.mxu0 0.0
    %2344 = vmatprep.subr.mxu0 0.0
    %2345 = vmatpush1.msra.mxu0 0.0
    %2346 = vmatprep.subr.mxu0 0.0
    %2347 = vmatpush1.msra.mxu0 0.0
    %2348 = vmatprep.subr.mxu0 0.0
    %2349 = vmatpush1.msra.mxu0 0.0
    %2350 = vmatprep.subr.mxu0 0.0
    %2351 = vmatpush1.msra.mxu0 0.0
    %2352 = vmatprep.subr.mxu0 0.0
    %2353 = vmatpush1.msra.mxu0 0.0
    %2354 = vmatprep.subr.mxu0 0.0
    %2355 = vmatpush1.msra.mxu0 0.0
    %2356 = vmatprep.subr.mxu0 0.0
    %2357 = vmatpush1.msra.mxu0 0.0
    %2358 = vmatprep.subr.mxu0 0.0
    %2359 = vmatpush1.msra.mxu0 0.0
    %2360 = vmatprep.subr.mxu0 0.0
    %2361 = vmatpush1.msra.mxu0 0.0
    %2362 = vmatprep.subr.mxu0 0.0
    %2363 = vmatpush1.msra.mxu0 0.0
    %2364 = vmatprep.subr.mxu0 0.0
    %2365 = vmatpush1.msra.mxu0 0.0
    %2366 = vmatprep.subr.mxu0 0.0
    %2367 = vmatpush1.msra.mxu0 0.0
    %2368 = vmatprep.subr.mxu0 0.0
    %2369 = vmatpush1.msra.mxu0 0.0
    %2370 = vmatprep.subr.mxu0 0.0
    %2371 = vmatpush1.msra.mxu0 0.0
    %2372 = vmatprep.subr.mxu0 0.0
    %2373 = vmatpush1.msra.mxu0 0.0
    %2374 = vmatprep.subr.mxu0 0.0
    %2375 = vmatpush1.msra.mxu0 0.0
    %2376 = vmatprep.subr.mxu0 0.0
    %2377 = vmatpush1.msra.mxu0 0.0
    %2378 = vmatprep.subr.mxu0 0.0
    %2379 = vmatpush1.msra.mxu0 0.0
    %2380 = vmatprep.subr.mxu0 0.0
    %2381 = vmatpush1.msra.mxu0 0.0
    %2382 = vmatprep.subr.mxu0 0.0
    %2383 = vmatpush1.msra.mxu0 0.0
    %2384 = vmatprep.subr.mxu0 0.0
    %2385 = vmatpush1.msra.mxu0 0.0
    %2386 = vmatprep.subr.mxu0 0.0
    %2387 = vmatpush1.msra.mxu0 0.0
    %2388 = vmatprep.subr.mxu0 0.0
    %2389 = vmatpush1.msra.mxu0 0.0
    %2390 = vmatprep.mubr.f32.mxu0 0.0
    %2391 = vmatmul.mubr.f32.gmra.mrb[0].mxu0 %v2324
    %v2392 = vpop.f32.mrb[0].mxu0
    %v2393 = vadd.f32 0.0, %v2392
    %v2394 = vpop.f32.mrb[0].mxu0
    %2395 = vdwg.mxu0
    %v2397 = vrot.slane %v2393, 4
    %v2399 = vadd.f32 %v2094, %v2397
    %v2400 = vxor.u32 %v2399, 2147483648
    %v2401 = vmul.f32 %v2400, 1.442695
    %v2402 = vpow.pop %v2401
    %v2403 = vadd.f32 %v2402, 1.0
    %v2404 = vrcp.pop %v2403
    %v2405 = vmul.f32 1.0, %v2404
    %v2406 = vtanh.pop %v2399
    %v2408 = vrot.slane %v2309, 6
    %v2410 = vmul.f32 %v2405, %v2408
    %2412 = vrot.lane.b32.xlu0 %v2406, 96
    %v2413 = vpop.permute.xlu0 %2412
    %v2415 = vmul.f32 %v2405, %v2413
    %2417 = vrot.lane.b32.xlu0 %v2415, 16
    %v2418 = vpop.permute.xlu0 %2417
    %v2420 = vadd.f32 %v2410, %v2418
    %v2421 = vtanh.pop %v2420
    %2423 = vrot.lane.b32.xlu0 %v2421, 32
    %v2424 = vpop.permute.xlu0 %2423
    %v2426 = vmul.f32 %v2405, %v2424
    %2428 = vrot.lane.b32.xlu0 %v2426, 80
    %v2429 = vpop.permute.xlu0 %2428
    %2431 = vst.msk [vmem:[#allocation2] sm:$0x30] %vm480, %v2429
    %v2432 = vrot.slane %v2426, 4
    %2433 = vrot.lane.b32.xlu0 %v2432, 80
    %v2434 = vpop.permute.xlu0 %2433
    %v2435 = vsel %vm69, %v2434, 0
    %2437 = vmatprep.subr.mxu0 0.0
    %2438 = vmatpush1.msra.mxu0 %v2103
    %2439 = vmatprep.subr.mxu0 0.0
    %2440 = vmatpush1.msra.mxu0 %v2104
    %2441 = vmatprep.subr.mxu0 0.0
    %2442 = vmatpush1.msra.mxu0 0.0
    %2443 = vmatprep.subr.mxu0 0.0
    %2444 = vmatpush1.msra.mxu0 0.0
    %2445 = vmatprep.subr.mxu0 0.0
    %2446 = vmatpush1.msra.mxu0 0.0
    %2447 = vmatprep.subr.mxu0 0.0
    %2448 = vmatpush1.msra.mxu0 0.0
    %2449 = vmatprep.subr.mxu0 0.0
    %2450 = vmatpush1.msra.mxu0 0.0
    %2451 = vmatprep.subr.mxu0 0.0
    %2452 = vmatpush1.msra.mxu0 0.0
    %2453 = vmatprep.subr.mxu0 0.0
    %2454 = vmatpush1.msra.mxu0 0.0
    %2455 = vmatprep.subr.mxu0 0.0
    %2456 = vmatpush1.msra.mxu0 0.0
    %2457 = vmatprep.subr.mxu0 0.0
    %2458 = vmatpush1.msra.mxu0 0.0
    %2459 = vmatprep.subr.mxu0 0.0
    %2460 = vmatpush1.msra.mxu0 0.0
    %2461 = vmatprep.subr.mxu0 0.0
    %2462 = vmatpush1.msra.mxu0 0.0
    %2463 = vmatprep.subr.mxu0 0.0
    %2464 = vmatpush1.msra.mxu0 0.0
    %2465 = vmatprep.subr.mxu0 0.0
    %2466 = vmatpush1.msra.mxu0 0.0
    %2467 = vmatprep.subr.mxu0 0.0
    %2468 = vmatpush1.msra.mxu0 0.0
    %2469 = vmatprep.subr.mxu0 0.0
    %2470 = vmatpush1.msra.mxu0 0.0
    %2471 = vmatprep.subr.mxu0 0.0
    %2472 = vmatpush1.msra.mxu0 0.0
    %2473 = vmatprep.subr.mxu0 0.0
    %2474 = vmatpush1.msra.mxu0 0.0
    %2475 = vmatprep.subr.mxu0 0.0
    %2476 = vmatpush1.msra.mxu0 0.0
    %2477 = vmatprep.subr.mxu0 0.0
    %2478 = vmatpush1.msra.mxu0 0.0
    %2479 = vmatprep.subr.mxu0 0.0
    %2480 = vmatpush1.msra.mxu0 0.0
    %2481 = vmatprep.subr.mxu0 0.0
    %2482 = vmatpush1.msra.mxu0 0.0
    %2483 = vmatprep.subr.mxu0 0.0
    %2484 = vmatpush1.msra.mxu0 0.0
    %2485 = vmatprep.subr.mxu0 0.0
    %2486 = vmatpush1.msra.mxu0 0.0
    %2487 = vmatprep.subr.mxu0 0.0
    %2488 = vmatpush1.msra.mxu0 0.0
    %2489 = vmatprep.subr.mxu0 0.0
    %2490 = vmatpush1.msra.mxu0 0.0
    %2491 = vmatprep.subr.mxu0 0.0
    %2492 = vmatpush1.msra.mxu0 0.0
    %2493 = vmatprep.subr.mxu0 0.0
    %2494 = vmatpush1.msra.mxu0 0.0
    %2495 = vmatprep.subr.mxu0 0.0
    %2496 = vmatpush1.msra.mxu0 0.0
    %2497 = vmatprep.subr.mxu0 0.0
    %2498 = vmatpush1.msra.mxu0 0.0
    %2499 = vmatprep.subr.mxu0 0.0
    %2500 = vmatpush1.msra.mxu0 0.0
    %2501 = vmatprep.mubr.f32.mxu0 0.0
    %2502 = vmatmul.mubr.f32.gmra.mrb[0].mxu0 %v2435
    %v2503 = vpop.f32.mrb[0].mxu0
    %v2504 = vadd.f32 0.0, %v2503
    %v2505 = vpop.f32.mrb[0].mxu0
    %2506 = vdwg.mxu0
    %v2508 = vrot.slane %v2504, 2
    %v2510 = vadd.f32 %v2094, %v2508
    %v2511 = vxor.u32 %v2510, 2147483648
    %v2512 = vmul.f32 %v2511, 1.442695
    %v2513 = vpow.pop %v2512
    %v2514 = vadd.f32 %v2513, 1.0
    %v2515 = vrcp.pop %v2514
    %v2516 = vmul.f32 1.0, %v2515
    %v2517 = vtanh.pop %v2510
    %v2519 = vrot.slane %v2420, 6
    %v2521 = vmul.f32 %v2516, %v2519
    %2523 = vrot.lane.b32.xlu0 %v2517, 96
    %v2524 = vpop.permute.xlu0 %2523
    %v2526 = vmul.f32 %v2516, %v2524
    %2528 = vrot.lane.b32.xlu0 %v2526, 16
    %v2529 = vpop.permute.xlu0 %2528
    %v2531 = vadd.f32 %v2521, %v2529
    %v2532 = vtanh.pop %v2531
    %2534 = vrot.lane.b32.xlu0 %v2532, 32
    %v2535 = vpop.permute.xlu0 %2534
    %v2537 = vmul.f32 %v2516, %v2535
    %2539 = vrot.lane.b32.xlu0 %v2537, 80
    %v2540 = vpop.permute.xlu0 %2539
    %2542 = vst.msk [vmem:[#allocation2] sm:$0xc0] %vm592, %v2540
    %v2543 = vrot.slane %v2537, 6
    %2544 = vrot.lane.b32.xlu0 %v2543, 80
    %v2545 = vpop.permute.xlu0 %2544
    %v2546 = vsel %vm69, %v2545, 0
    %2548 = vmatprep.subr.mxu0 0.0
    %2549 = vmatpush1.msra.mxu0 %v2103
    %2550 = vmatprep.subr.mxu0 0.0
    %2551 = vmatpush1.msra.mxu0 %v2104
    %2552 = vmatprep.subr.mxu0 0.0
    %2553 = vmatpush1.msra.mxu0 0.0
    %2554 = vmatprep.subr.mxu0 0.0
    %2555 = vmatpush1.msra.mxu0 0.0
    %2556 = vmatprep.subr.mxu0 0.0
    %2557 = vmatpush1.msra.mxu0 0.0
    %2558 = vmatprep.subr.mxu0 0.0
    %2559 = vmatpush1.msra.mxu0 0.0
    %2560 = vmatprep.subr.mxu0 0.0
    %2561 = vmatpush1.msra.mxu0 0.0
    %2562 = vmatprep.subr.mxu0 0.0
    %2563 = vmatpush1.msra.mxu0 0.0
    %2564 = vmatprep.subr.mxu0 0.0
    %2565 = vmatpush1.msra.mxu0 0.0
    %2566 = vmatprep.subr.mxu0 0.0
    %2567 = vmatpush1.msra.mxu0 0.0
    %2568 = vmatprep.subr.mxu0 0.0
    %2569 = vmatpush1.msra.mxu0 0.0
    %2570 = vmatprep.subr.mxu0 0.0
    %2571 = vmatpush1.msra.mxu0 0.0
    %2572 = vmatprep.subr.mxu0 0.0
    %2573 = vmatpush1.msra.mxu0 0.0
    %2574 = vmatprep.subr.mxu0 0.0
    %2575 = vmatpush1.msra.mxu0 0.0
    %2576 = vmatprep.subr.mxu0 0.0
    %2577 = vmatpush1.msra.mxu0 0.0
    %2578 = vmatprep.subr.mxu0 0.0
    %2579 = vmatpush1.msra.mxu0 0.0
    %2580 = vmatprep.subr.mxu0 0.0
    %2581 = vmatpush1.msra.mxu0 0.0
    %2582 = vmatprep.subr.mxu0 0.0
    %2583 = vmatpush1.msra.mxu0 0.0
    %2584 = vmatprep.subr.mxu0 0.0
    %2585 = vmatpush1.msra.mxu0 0.0
    %2586 = vmatprep.subr.mxu0 0.0
    %2587 = vmatpush1.msra.mxu0 0.0
    %2588 = vmatprep.subr.mxu0 0.0
    %2589 = vmatpush1.msra.mxu0 0.0
    %2590 = vmatprep.subr.mxu0 0.0
    %2591 = vmatpush1.msra.mxu0 0.0
    %2592 = vmatprep.subr.mxu0 0.0
    %2593 = vmatpush1.msra.mxu0 0.0
    %2594 = vmatprep.subr.mxu0 0.0
    %2595 = vmatpush1.msra.mxu0 0.0
    %2596 = vmatprep.subr.mxu0 0.0
    %2597 = vmatpush1.msra.mxu0 0.0
    %2598 = vmatprep.subr.mxu0 0.0
    %2599 = vmatpush1.msra.mxu0 0.0
    %2600 = vmatprep.subr.mxu0 0.0
    %2601 = vmatpush1.msra.mxu0 0.0
    %2602 = vmatprep.subr.mxu0 0.0
    %2603 = vmatpush1.msra.mxu0 0.0
    %2604 = vmatprep.subr.mxu0 0.0
    %2605 = vmatpush1.msra.mxu0 0.0
    %2606 = vmatprep.subr.mxu0 0.0
    %2607 = vmatpush1.msra.mxu0 0.0
    %2608 = vmatprep.subr.mxu0 0.0
    %2609 = vmatpush1.msra.mxu0 0.0
    %2610 = vmatprep.subr.mxu0 0.0
    %2611 = vmatpush1.msra.mxu0 0.0
    %2612 = vmatprep.mubr.f32.mxu0 0.0
    %2613 = vmatmul.mubr.f32.gmra.mrb[0].mxu0 %v2546
    %v2614 = vpop.f32.mrb[0].mxu0
    %v2615 = vadd.f32 0.0, %v2614
    %v2616 = vpop.f32.mrb[0].mxu0
    %2617 = vdwg.mxu0
    %v2618 = vadd.f32 %v2099, %v2615
    %v2619 = vxor.u32 %v2618, 2147483648
    %v2620 = vmul.f32 %v2619, 1.442695
    %v2621 = vpow.pop %v2620
    %v2622 = vadd.f32 %v2621, 1.0
    %v2623 = vrcp.pop %v2622
    %v2624 = vmul.f32 1.0, %v2623
    %v2625 = vtanh.pop %v2618
    %v2627 = vrot.slane %v2531, 6
    %v2629 = vmul.f32 %v2624, %v2627
    %2631 = vrot.lane.b32.xlu0 %v2625, 96
    %v2632 = vpop.permute.xlu0 %2631
    %v2634 = vmul.f32 %v2624, %v2632
    %2636 = vrot.lane.b32.xlu0 %v2634, 16
    %v2637 = vpop.permute.xlu0 %2636
    %v2639 = vadd.f32 %v2629, %v2637
    %v2640 = vtanh.pop %v2639
    %2642 = vrot.lane.b32.xlu0 %v2640, 32
    %v2643 = vpop.permute.xlu0 %2642
    %v2645 = vmul.f32 %v2624, %v2643
    %2647 = vrot.lane.b32.xlu0 %v2645, 80
    %v2648 = vpop.permute.xlu0 %2647
    %2650 = vst.msk [vmem:[#allocation2 + $0x8] sm:$0x3] %vm259, %v2648
    %v2651 = vsel %vm69, %v2648, 0
    %2653 = vmatprep.subr.mxu0 0.0
    %2654 = vmatpush1.msra.mxu0 %v2103
    %2655 = vmatprep.subr.mxu0 0.0
    %2656 = vmatpush1.msra.mxu0 %v2104
    %2657 = vmatprep.subr.mxu0 0.0
    %2658 = vmatpush1.msra.mxu0 0.0
    %2659 = vmatprep.subr.mxu0 0.0
    %2660 = vmatpush1.msra.mxu0 0.0
    %2661 = vmatprep.subr.mxu0 0.0
    %2662 = vmatpush1.msra.mxu0 0.0
    %2663 = vmatprep.subr.mxu0 0.0
    %2664 = vmatpush1.msra.mxu0 0.0
    %2665 = vmatprep.subr.mxu0 0.0
    %2666 = vmatpush1.msra.mxu0 0.0
    %2667 = vmatprep.subr.mxu0 0.0
    %2668 = vmatpush1.msra.mxu0 0.0
    %2669 = vmatprep.subr.mxu0 0.0
    %2670 = vmatpush1.msra.mxu0 0.0
    %2671 = vmatprep.subr.mxu0 0.0
    %2672 = vmatpush1.msra.mxu0 0.0
    %2673 = vmatprep.subr.mxu0 0.0
    %2674 = vmatpush1.msra.mxu0 0.0
    %2675 = vmatprep.subr.mxu0 0.0
    %2676 = vmatpush1.msra.mxu0 0.0
    %2677 = vmatprep.subr.mxu0 0.0
    %2678 = vmatpush1.msra.mxu0 0.0
    %2679 = vmatprep.subr.mxu0 0.0
    %2680 = vmatpush1.msra.mxu0 0.0
    %2681 = vmatprep.subr.mxu0 0.0
    %2682 = vmatpush1.msra.mxu0 0.0
    %2683 = vmatprep.subr.mxu0 0.0
    %2684 = vmatpush1.msra.mxu0 0.0
    %2685 = vmatprep.subr.mxu0 0.0
    %2686 = vmatpush1.msra.mxu0 0.0
    %2687 = vmatprep.subr.mxu0 0.0
    %2688 = vmatpush1.msra.mxu0 0.0
    %2689 = vmatprep.subr.mxu0 0.0
    %2690 = vmatpush1.msra.mxu0 0.0
    %2691 = vmatprep.subr.mxu0 0.0
    %2692 = vmatpush1.msra.mxu0 0.0
    %2693 = vmatprep.subr.mxu0 0.0
    %2694 = vmatpush1.msra.mxu0 0.0
    %2695 = vmatprep.subr.mxu0 0.0
    %2696 = vmatpush1.msra.mxu0 0.0
    %2697 = vmatprep.subr.mxu0 0.0
    %2698 = vmatpush1.msra.mxu0 0.0
    %2699 = vmatprep.subr.mxu0 0.0
    %2700 = vmatpush1.msra.mxu0 0.0
    %2701 = vmatprep.subr.mxu0 0.0
    %2702 = vmatpush1.msra.mxu0 0.0
    %2703 = vmatprep.subr.mxu0 0.0
    %2704 = vmatpush1.msra.mxu0 0.0
    %2705 = vmatprep.subr.mxu0 0.0
    %2706 = vmatpush1.msra.mxu0 0.0
    %2707 = vmatprep.subr.mxu0 0.0
    %2708 = vmatpush1.msra.mxu0 0.0
    %2709 = vmatprep.subr.mxu0 0.0
    %2710 = vmatpush1.msra.mxu0 0.0
    %2711 = vmatprep.subr.mxu0 0.0
    %2712 = vmatpush1.msra.mxu0 0.0
    %2713 = vmatprep.subr.mxu0 0.0
    %2714 = vmatpush1.msra.mxu0 0.0
    %2715 = vmatprep.subr.mxu0 0.0
    %2716 = vmatpush1.msra.mxu0 0.0
    %2717 = vmatprep.mubr.f32.mxu0 0.0
    %2718 = vmatmul.mubr.f32.gmra.mrb[0].mxu0 %v2651
    %v2719 = vpop.f32.mrb[0].mxu0
    %v2720 = vadd.f32 0.0, %v2719
    %v2721 = vpop.f32.mrb[0].mxu0
    %2722 = vdwg.mxu0
    %v2724 = vrot.slane %v2720, 6
    %v2726 = vadd.f32 %v2099, %v2724
    %v2727 = vxor.u32 %v2726, 2147483648
    %v2728 = vmul.f32 %v2727, 1.442695
    %v2729 = vpow.pop %v2728
    %v2730 = vadd.f32 %v2729, 1.0
    %v2731 = vrcp.pop %v2730
    %v2732 = vmul.f32 1.0, %v2731
    %v2733 = vtanh.pop %v2726
    %v2735 = vrot.slane %v2639, 6
    %v2737 = vmul.f32 %v2732, %v2735
    %2739 = vrot.lane.b32.xlu0 %v2733, 96
    %v2740 = vpop.permute.xlu0 %2739
    %v2742 = vmul.f32 %v2732, %v2740
    %2744 = vrot.lane.b32.xlu0 %v2742, 16
    %v2745 = vpop.permute.xlu0 %2744
    %v2747 = vadd.f32 %v2737, %v2745
    %v2748 = vtanh.pop %v2747
    %2750 = vrot.lane.b32.xlu0 %v2748, 32
    %v2751 = vpop.permute.xlu0 %2750
    %v2753 = vmul.f32 %v2732, %v2751
    %2755 = vrot.lane.b32.xlu0 %v2753, 80
    %v2756 = vpop.permute.xlu0 %2755
    %2758 = vst.msk [vmem:[#allocation2 + $0x8] sm:$0xc] %vm368, %v2756
    %v2759 = vrot.slane %v2753, 2
    %2760 = vrot.lane.b32.xlu0 %v2759, 80
    %v2761 = vpop.permute.xlu0 %2760
    %v2762 = vsel %vm69, %v2761, 0
    %2764 = vmatprep.subr.mxu0 0.0
    %2765 = vmatpush1.msra.mxu0 %v2103
    %2766 = vmatprep.subr.mxu0 0.0
    %2767 = vmatpush1.msra.mxu0 %v2104
    %2768 = vmatprep.subr.mxu0 0.0
    %2769 = vmatpush1.msra.mxu0 0.0
    %2770 = vmatprep.subr.mxu0 0.0
    %2771 = vmatpush1.msra.mxu0 0.0
    %2772 = vmatprep.subr.mxu0 0.0
    %2773 = vmatpush1.msra.mxu0 0.0
    %2774 = vmatprep.subr.mxu0 0.0
    %2775 = vmatpush1.msra.mxu0 0.0
    %2776 = vmatprep.subr.mxu0 0.0
    %2777 = vmatpush1.msra.mxu0 0.0
    %2778 = vmatprep.subr.mxu0 0.0
    %2779 = vmatpush1.msra.mxu0 0.0
    %2780 = vmatprep.subr.mxu0 0.0
    %2781 = vmatpush1.msra.mxu0 0.0
    %2782 = vmatprep.subr.mxu0 0.0
    %2783 = vmatpush1.msra.mxu0 0.0
    %2784 = vmatprep.subr.mxu0 0.0
    %2785 = vmatpush1.msra.mxu0 0.0
    %2786 = vmatprep.subr.mxu0 0.0
    %2787 = vmatpush1.msra.mxu0 0.0
    %2788 = vmatprep.subr.mxu0 0.0
    %2789 = vmatpush1.msra.mxu0 0.0
    %2790 = vmatprep.subr.mxu0 0.0
    %2791 = vmatpush1.msra.mxu0 0.0
    %2792 = vmatprep.subr.mxu0 0.0
    %2793 = vmatpush1.msra.mxu0 0.0
    %2794 = vmatprep.subr.mxu0 0.0
    %2795 = vmatpush1.msra.mxu0 0.0
    %2796 = vmatprep.subr.mxu0 0.0
    %2797 = vmatpush1.msra.mxu0 0.0
    %2798 = vmatprep.subr.mxu0 0.0
    %2799 = vmatpush1.msra.mxu0 0.0
    %2800 = vmatprep.subr.mxu0 0.0
    %2801 = vmatpush1.msra.mxu0 0.0
    %2802 = vmatprep.subr.mxu0 0.0
    %2803 = vmatpush1.msra.mxu0 0.0
    %2804 = vmatprep.subr.mxu0 0.0
    %2805 = vmatpush1.msra.mxu0 0.0
    %2806 = vmatprep.subr.mxu0 0.0
    %2807 = vmatpush1.msra.mxu0 0.0
    %2808 = vmatprep.subr.mxu0 0.0
    %2809 = vmatpush1.msra.mxu0 0.0
    %2810 = vmatprep.subr.mxu0 0.0
    %2811 = vmatpush1.msra.mxu0 0.0
    %2812 = vmatprep.subr.mxu0 0.0
    %2813 = vmatpush1.msra.mxu0 0.0
    %2814 = vmatprep.subr.mxu0 0.0
    %2815 = vmatpush1.msra.mxu0 0.0
    %2816 = vmatprep.subr.mxu0 0.0
    %2817 = vmatpush1.msra.mxu0 0.0
    %2818 = vmatprep.subr.mxu0 0.0
    %2819 = vmatpush1.msra.mxu0 0.0
    %2820 = vmatprep.subr.mxu0 0.0
    %2821 = vmatpush1.msra.mxu0 0.0
    %2822 = vmatprep.subr.mxu0 0.0
    %2823 = vmatpush1.msra.mxu0 0.0
    %2824 = vmatprep.subr.mxu0 0.0
    %2825 = vmatpush1.msra.mxu0 0.0
    %2826 = vmatprep.subr.mxu0 0.0
    %2827 = vmatpush1.msra.mxu0 0.0
    %2828 = vmatprep.mubr.f32.mxu0 0.0
    %2829 = vmatmul.mubr.f32.gmra.mrb[0].mxu0 %v2762
    %v2830 = vpop.f32.mrb[0].mxu0
    %v2831 = vadd.f32 0.0, %v2830
    %v2832 = vpop.f32.mrb[0].mxu0
    %2833 = vdwg.mxu0
    %v2835 = vrot.slane %v2831, 4
    %v2837 = vadd.f32 %v2099, %v2835
    %v2838 = vxor.u32 %v2837, 2147483648
    %v2839 = vmul.f32 %v2838, 1.442695
    %v2840 = vpow.pop %v2839
    %v2841 = vadd.f32 %v2840, 1.0
    %v2842 = vrcp.pop %v2841
    %v2843 = vmul.f32 1.0, %v2842
    %v2844 = vtanh.pop %v2837
    %v2846 = vrot.slane %v2747, 6
    %v2848 = vmul.f32 %v2843, %v2846
    %2850 = vrot.lane.b32.xlu0 %v2844, 96
    %v2851 = vpop.permute.xlu0 %2850
    %v2853 = vmul.f32 %v2843, %v2851
    %2855 = vrot.lane.b32.xlu0 %v2853, 16
    %v2856 = vpop.permute.xlu0 %2855
    %v2858 = vadd.f32 %v2848, %v2856
    %v2859 = vtanh.pop %v2858
    %2861 = vrot.lane.b32.xlu0 %v2859, 32
    %v2862 = vpop.permute.xlu0 %2861
    %v2864 = vmul.f32 %v2843, %v2862
    %2866 = vrot.lane.b32.xlu0 %v2864, 80
    %v2867 = vpop.permute.xlu0 %2866
    %2869 = vst.msk [vmem:[#allocation2 + $0x8] sm:$0x30] %vm480, %v2867
    %v2870 = vrot.slane %v2864, 4
    %2871 = vrot.lane.b32.xlu0 %v2870, 80
    %v2872 = vpop.permute.xlu0 %2871
    %v2873 = vsel %vm69, %v2872, 0
    %2875 = vmatprep.subr.mxu0 0.0
    %2876 = vmatpush1.msra.mxu0 %v2103
    %2877 = vmatprep.subr.mxu0 0.0
    %2878 = vmatpush1.msra.mxu0 %v2104
    %2879 = vmatprep.subr.mxu0 0.0
    %2880 = vmatpush1.msra.mxu0 0.0
    %2881 = vmatprep.subr.mxu0 0.0
    %2882 = vmatpush1.msra.mxu0 0.0
    %2883 = vmatprep.subr.mxu0 0.0
    %2884 = vmatpush1.msra.mxu0 0.0
    %2885 = vmatprep.subr.mxu0 0.0
    %2886 = vmatpush1.msra.mxu0 0.0
    %2887 = vmatprep.subr.mxu0 0.0
    %2888 = vmatpush1.msra.mxu0 0.0
    %2889 = vmatprep.subr.mxu0 0.0
    %2890 = vmatpush1.msra.mxu0 0.0
    %2891 = vmatprep.subr.mxu0 0.0
    %2892 = vmatpush1.msra.mxu0 0.0
    %2893 = vmatprep.subr.mxu0 0.0
    %2894 = vmatpush1.msra.mxu0 0.0
    %2895 = vmatprep.subr.mxu0 0.0
    %2896 = vmatpush1.msra.mxu0 0.0
    %2897 = vmatprep.subr.mxu0 0.0
    %2898 = vmatpush1.msra.mxu0 0.0
    %2899 = vmatprep.subr.mxu0 0.0
    %2900 = vmatpush1.msra.mxu0 0.0
    %2901 = vmatprep.subr.mxu0 0.0
    %2902 = vmatpush1.msra.mxu0 0.0
    %2903 = vmatprep.subr.mxu0 0.0
    %2904 = vmatpush1.msra.mxu0 0.0
    %2905 = vmatprep.subr.mxu0 0.0
    %2906 = vmatpush1.msra.mxu0 0.0
    %2907 = vmatprep.subr.mxu0 0.0
    %2908 = vmatpush1.msra.mxu0 0.0
    %2909 = vmatprep.subr.mxu0 0.0
    %2910 = vmatpush1.msra.mxu0 0.0
    %2911 = vmatprep.subr.mxu0 0.0
    %2912 = vmatpush1.msra.mxu0 0.0
    %2913 = vmatprep.subr.mxu0 0.0
    %2914 = vmatpush1.msra.mxu0 0.0
    %2915 = vmatprep.subr.mxu0 0.0
    %2916 = vmatpush1.msra.mxu0 0.0
    %2917 = vmatprep.subr.mxu0 0.0
    %2918 = vmatpush1.msra.mxu0 0.0
    %2919 = vmatprep.subr.mxu0 0.0
    %2920 = vmatpush1.msra.mxu0 0.0
    %2921 = vmatprep.subr.mxu0 0.0
    %2922 = vmatpush1.msra.mxu0 0.0
    %2923 = vmatprep.subr.mxu0 0.0
    %2924 = vmatpush1.msra.mxu0 0.0
    %2925 = vmatprep.subr.mxu0 0.0
    %2926 = vmatpush1.msra.mxu0 0.0
    %2927 = vmatprep.subr.mxu0 0.0
    %2928 = vmatpush1.msra.mxu0 0.0
    %2929 = vmatprep.subr.mxu0 0.0
    %2930 = vmatpush1.msra.mxu0 0.0
    %2931 = vmatprep.subr.mxu0 0.0
    %2932 = vmatpush1.msra.mxu0 0.0
    %2933 = vmatprep.subr.mxu0 0.0
    %2934 = vmatpush1.msra.mxu0 0.0
    %2935 = vmatprep.subr.mxu0 0.0
    %2936 = vmatpush1.msra.mxu0 0.0
    %2937 = vmatprep.subr.mxu0 0.0
    %2938 = vmatpush1.msra.mxu0 0.0
    %2939 = vmatprep.mubr.f32.mxu0 0.0
    %2940 = vmatmul.mubr.f32.gmra.mrb[0].mxu0 %v2873
    %v2941 = vpop.f32.mrb[0].mxu0
    %v2942 = vadd.f32 0.0, %v2941
    %v2943 = vpop.f32.mrb[0].mxu0
    %2944 = vdwg.mxu0
    %v2946 = vrot.slane %v2942, 2
    %v2948 = vadd.f32 %v2099, %v2946
    %v2949 = vxor.u32 %v2948, 2147483648
    %v2950 = vmul.f32 %v2949, 1.442695
    %v2951 = vpow.pop %v2950
    %v2952 = vadd.f32 %v2951, 1.0
    %v2953 = vrcp.pop %v2952
    %v2954 = vmul.f32 1.0, %v2953
    %v2955 = vtanh.pop %v2948
    %v2957 = vrot.slane %v2858, 6
    %v2959 = vmul.f32 %v2954, %v2957
    %2961 = vrot.lane.b32.xlu0 %v2955, 96
    %v2962 = vpop.permute.xlu0 %2961
    %v2964 = vmul.f32 %v2954, %v2962
    %2966 = vrot.lane.b32.xlu0 %v2964, 16
    %v2967 = vpop.permute.xlu0 %2966
    %v2969 = vadd.f32 %v2959, %v2967
    %v2970 = vtanh.pop %v2969
    %2972 = vrot.lane.b32.xlu0 %v2970, 32
    %v2973 = vpop.permute.xlu0 %2972
    %v2975 = vmul.f32 %v2954, %v2973
    %2977 = vrot.lane.b32.xlu0 %v2975, 80
    %v2978 = vpop.permute.xlu0 %2977
    %2980 = vst.msk [vmem:[#allocation2 + $0x8] sm:$0xc0] %vm592, %v2978
    %v2981 = vld [vmem:[#allocation2] sm:$0xff]
    %v2982 = vld [vmem:[#allocation2 + $0x8] sm:$0xff]
    %s2983 = scalar_lea.vmem [#allocation3], 48
    %v2984 = vld [vmem:[%s2983] sm:$0xff]
    %v2985 = vld [vmem:[%s2983 + $0x8] sm:$0xff]
    %s2986 = scalar_lea.vmem %s5, 3
    %v2987 = vld [vmem:[%s2986] sm:$0x1]
    %v2989 = vlaneseq
    %v2990 = vshrl.u32 %v2989, 7
    %v2991 = vsub.s32 0, %v2990
    %v2992 = vrot.slane %v2987, %v2991
    %v2995 = vsel %vm69, %v2981, 0
    %v2998 = vsel %vm69, %v2982, 0
    %3000 = vmatprep.subr.mxu0 0.0
    %3001 = vmatpush1.msra.mxu0 %v2984
    %3002 = vmatprep.subr.mxu0 0.0
    %3003 = vmatpush1.msra.mxu0 %v2985
    %3004 = vmatprep.subr.mxu0 0.0
    %3005 = vmatpush1.msra.mxu0 0.0
    %3006 = vmatprep.subr.mxu0 0.0
    %3007 = vmatpush1.msra.mxu0 0.0
    %3008 = vmatprep.subr.mxu0 0.0
    %3009 = vmatpush1.msra.mxu0 0.0
    %3010 = vmatprep.subr.mxu0 0.0
    %3011 = vmatpush1.msra.mxu0 0.0
    %3012 = vmatprep.subr.mxu0 0.0
    %3013 = vmatpush1.msra.mxu0 0.0
    %3014 = vmatprep.subr.mxu0 0.0
    %3015 = vmatpush1.msra.mxu0 0.0
    %3016 = vmatprep.subr.mxu0 0.0
    %3017 = vmatpush1.msra.mxu0 0.0
    %3018 = vmatprep.subr.mxu0 0.0
    %3019 = vmatpush1.msra.mxu0 0.0
    %3020 = vmatprep.subr.mxu0 0.0
    %3021 = vmatpush1.msra.mxu0 0.0
    %3022 = vmatprep.subr.mxu0 0.0
    %3023 = vmatpush1.msra.mxu0 0.0
    %3024 = vmatprep.subr.mxu0 0.0
    %3025 = vmatpush1.msra.mxu0 0.0
    %3026 = vmatprep.subr.mxu0 0.0
    %3027 = vmatpush1.msra.mxu0 0.0
    %3028 = vmatprep.subr.mxu0 0.0
    %3029 = vmatpush1.msra.mxu0 0.0
    %3030 = vmatprep.subr.mxu0 0.0
    %3031 = vmatpush1.msra.mxu0 0.0
    %3032 = vmatprep.subr.mxu0 0.0
    %3033 = vmatpush1.msra.mxu0 0.0
    %3034 = vmatprep.subr.mxu0 0.0
    %3035 = vmatpush1.msra.mxu0 0.0
    %3036 = vmatprep.subr.mxu0 0.0
    %3037 = vmatpush1.msra.mxu0 0.0
    %3038 = vmatprep.subr.mxu0 0.0
    %3039 = vmatpush1.msra.mxu0 0.0
    %3040 = vmatprep.subr.mxu0 0.0
    %3041 = vmatpush1.msra.mxu0 0.0
    %3042 = vmatprep.subr.mxu0 0.0
    %3043 = vmatpush1.msra.mxu0 0.0
    %3044 = vmatprep.subr.mxu0 0.0
    %3045 = vmatpush1.msra.mxu0 0.0
    %3046 = vmatprep.subr.mxu0 0.0
    %3047 = vmatpush1.msra.mxu0 0.0
    %3048 = vmatprep.subr.mxu0 0.0
    %3049 = vmatpush1.msra.mxu0 0.0
    %3050 = vmatprep.subr.mxu0 0.0
    %3051 = vmatpush1.msra.mxu0 0.0
    %3052 = vmatprep.subr.mxu0 0.0
    %3053 = vmatpush1.msra.mxu0 0.0
    %3054 = vmatprep.subr.mxu0 0.0
    %3055 = vmatpush1.msra.mxu0 0.0
    %3056 = vmatprep.subr.mxu0 0.0
    %3057 = vmatpush1.msra.mxu0 0.0
    %3058 = vmatprep.subr.mxu0 0.0
    %3059 = vmatpush1.msra.mxu0 0.0
    %3060 = vmatprep.subr.mxu0 0.0
    %3061 = vmatpush1.msra.mxu0 0.0
    %3062 = vmatprep.subr.mxu0 0.0
    %3063 = vmatpush1.msra.mxu0 0.0
    %3064 = vmatprep.mubr.f32.mxu0 0.0
    %3065 = vmatmul.mubr.f32.gmra.mrb[0].mxu0 %v2995
    %v3066 = vpop.f32.mrb[0].mxu0
    %v3067 = vadd.f32 %v2992, %v3066
    %v3068 = vpop.f32.mrb[0].mxu0
    %3069 = vmatprep.mubr.f32.mxu0 0.0
    %3070 = vmatmul.mubr.f32.gmra.mrb[0].mxu0 %v2998
    %v3071 = vpop.f32.mrb[0].mxu0
    %v3072 = vadd.f32 %v2992, %v3071
    %v3073 = vpop.f32.mrb[0].mxu0
    %3074 = vdwg.mxu0
    %s3075 = scalar_lea.vmem [#allocation6], 48
    %v3076 = vld [vmem:[%s3075] sm:$0xff]
    %v3077 = vld [vmem:[%s3075 + $0x8] sm:$0xff]
    %v3078 = vrot.slane %v2002, 6
    %3079 = vrot.lane.b32.xlu0 %v3078, 80
    %v3080 = vpop.permute.xlu0 %3079
    %v3081 = vsel %vm69, %v3080, 0
    %3083 = vmatprep.subr.mxu0 0.0
    %3084 = vmatpush1.msra.mxu0 %v3076
    %3085 = vmatprep.subr.mxu0 0.0
    %3086 = vmatpush1.msra.mxu0 %v3077
    %3087 = vmatprep.subr.mxu0 0.0
    %3088 = vmatpush1.msra.mxu0 0.0
    %3089 = vmatprep.subr.mxu0 0.0
    %3090 = vmatpush1.msra.mxu0 0.0
    %3091 = vmatprep.subr.mxu0 0.0
    %3092 = vmatpush1.msra.mxu0 0.0
    %3093 = vmatprep.subr.mxu0 0.0
    %3094 = vmatpush1.msra.mxu0 0.0
    %3095 = vmatprep.subr.mxu0 0.0
    %3096 = vmatpush1.msra.mxu0 0.0
    %3097 = vmatprep.subr.mxu0 0.0
    %3098 = vmatpush1.msra.mxu0 0.0
    %3099 = vmatprep.subr.mxu0 0.0
    %3100 = vmatpush1.msra.mxu0 0.0
    %3101 = vmatprep.subr.mxu0 0.0
    %3102 = vmatpush1.msra.mxu0 0.0
    %3103 = vmatprep.subr.mxu0 0.0
    %3104 = vmatpush1.msra.mxu0 0.0
    %3105 = vmatprep.subr.mxu0 0.0
    %3106 = vmatpush1.msra.mxu0 0.0
    %3107 = vmatprep.subr.mxu0 0.0
    %3108 = vmatpush1.msra.mxu0 0.0
    %3109 = vmatprep.subr.mxu0 0.0
    %3110 = vmatpush1.msra.mxu0 0.0
    %3111 = vmatprep.subr.mxu0 0.0
    %3112 = vmatpush1.msra.mxu0 0.0
    %3113 = vmatprep.subr.mxu0 0.0
    %3114 = vmatpush1.msra.mxu0 0.0
    %3115 = vmatprep.subr.mxu0 0.0
    %3116 = vmatpush1.msra.mxu0 0.0
    %3117 = vmatprep.subr.mxu0 0.0
    %3118 = vmatpush1.msra.mxu0 0.0
    %3119 = vmatprep.subr.mxu0 0.0
    %3120 = vmatpush1.msra.mxu0 0.0
    %3121 = vmatprep.subr.mxu0 0.0
    %3122 = vmatpush1.msra.mxu0 0.0
    %3123 = vmatprep.subr.mxu0 0.0
    %3124 = vmatpush1.msra.mxu0 0.0
    %3125 = vmatprep.subr.mxu0 0.0
    %3126 = vmatpush1.msra.mxu0 0.0
    %3127 = vmatprep.subr.mxu0 0.0
    %3128 = vmatpush1.msra.mxu0 0.0
    %3129 = vmatprep.subr.mxu0 0.0
    %3130 = vmatpush1.msra.mxu0 0.0
    %3131 = vmatprep.subr.mxu0 0.0
    %3132 = vmatpush1.msra.mxu0 0.0
    %3133 = vmatprep.subr.mxu0 0.0
    %3134 = vmatpush1.msra.mxu0 0.0
    %3135 = vmatprep.subr.mxu0 0.0
    %3136 = vmatpush1.msra.mxu0 0.0
    %3137 = vmatprep.subr.mxu0 0.0
    %3138 = vmatpush1.msra.mxu0 0.0
    %3139 = vmatprep.subr.mxu0 0.0
    %3140 = vmatpush1.msra.mxu0 0.0
    %3141 = vmatprep.subr.mxu0 0.0
    %3142 = vmatpush1.msra.mxu0 0.0
    %3143 = vmatprep.subr.mxu0 0.0
    %3144 = vmatpush1.msra.mxu0 0.0
    %3145 = vmatprep.subr.mxu0 0.0
    %3146 = vmatpush1.msra.mxu0 0.0
    %3147 = vmatprep.mubr.f32.mxu0 0.0
    %3148 = vmatmul.mubr.f32.gmra.mrb[0].mxu0 %v3081
    %v3149 = vpop.f32.mrb[0].mxu0
    %v3150 = vadd.f32 0.0, %v3149
    %v3151 = vpop.f32.mrb[0].mxu0
    %3152 = vdwg.mxu0
    %v3153 = vadd.f32 %v3067, %v3150
    %v3154 = vxor.u32 %v3153, 2147483648
    %v3155 = vmul.f32 %v3154, 1.442695
    %v3156 = vpow.pop %v3155
    %v3157 = vadd.f32 %v3156, 1.0
    %v3158 = vrcp.pop %v3157
    %v3159 = vmul.f32 1.0, %v3158
    %v3160 = vtanh.pop %v3153
    %v3162 = vrot.slane %v1996, 6
    %v3164 = vmul.f32 %v3159, %v3162
    %3166 = vrot.lane.b32.xlu0 %v3160, 96
    %v3167 = vpop.permute.xlu0 %3166
    %v3169 = vmul.f32 %v3159, %v3167
    %3171 = vrot.lane.b32.xlu0 %v3169, 16
    %v3172 = vpop.permute.xlu0 %3171
    %v3174 = vadd.f32 %v3164, %v3172
    %v3175 = vtanh.pop %v3174
    %3177 = vrot.lane.b32.xlu0 %v3175, 32
    %v3178 = vpop.permute.xlu0 %3177
    %v3180 = vmul.f32 %v3159, %v3178
    %3182 = vrot.lane.b32.xlu0 %v3180, 80
    %v3183 = vpop.permute.xlu0 %3182
    %3185 = vst.msk [vmem:[%s6] sm:$0x3] %vm259, %v3183
    %v3186 = vsel %vm69, %v3183, 0
    %3188 = vmatprep.subr.mxu0 0.0
    %3189 = vmatpush1.msra.mxu0 %v3076
    %3190 = vmatprep.subr.mxu0 0.0
    %3191 = vmatpush1.msra.mxu0 %v3077
    %3192 = vmatprep.subr.mxu0 0.0
    %3193 = vmatpush1.msra.mxu0 0.0
    %3194 = vmatprep.subr.mxu0 0.0
    %3195 = vmatpush1.msra.mxu0 0.0
    %3196 = vmatprep.subr.mxu0 0.0
    %3197 = vmatpush1.msra.mxu0 0.0
    %3198 = vmatprep.subr.mxu0 0.0
    %3199 = vmatpush1.msra.mxu0 0.0
    %3200 = vmatprep.subr.mxu0 0.0
    %3201 = vmatpush1.msra.mxu0 0.0
    %3202 = vmatprep.subr.mxu0 0.0
    %3203 = vmatpush1.msra.mxu0 0.0
    %3204 = vmatprep.subr.mxu0 0.0
    %3205 = vmatpush1.msra.mxu0 0.0
    %3206 = vmatprep.subr.mxu0 0.0
    %3207 = vmatpush1.msra.mxu0 0.0
    %3208 = vmatprep.subr.mxu0 0.0
    %3209 = vmatpush1.msra.mxu0 0.0
    %3210 = vmatprep.subr.mxu0 0.0
    %3211 = vmatpush1.msra.mxu0 0.0
    %3212 = vmatprep.subr.mxu0 0.0
    %3213 = vmatpush1.msra.mxu0 0.0
    %3214 = vmatprep.subr.mxu0 0.0
    %3215 = vmatpush1.msra.mxu0 0.0
    %3216 = vmatprep.subr.mxu0 0.0
    %3217 = vmatpush1.msra.mxu0 0.0
    %3218 = vmatprep.subr.mxu0 0.0
    %3219 = vmatpush1.msra.mxu0 0.0
    %3220 = vmatprep.subr.mxu0 0.0
    %3221 = vmatpush1.msra.mxu0 0.0
    %3222 = vmatprep.subr.mxu0 0.0
    %3223 = vmatpush1.msra.mxu0 0.0
    %3224 = vmatprep.subr.mxu0 0.0
    %3225 = vmatpush1.msra.mxu0 0.0
    %3226 = vmatprep.subr.mxu0 0.0
    %3227 = vmatpush1.msra.mxu0 0.0
    %3228 = vmatprep.subr.mxu0 0.0
    %3229 = vmatpush1.msra.mxu0 0.0
    %3230 = vmatprep.subr.mxu0 0.0
    %3231 = vmatpush1.msra.mxu0 0.0
    %3232 = vmatprep.subr.mxu0 0.0
    %3233 = vmatpush1.msra.mxu0 0.0
    %3234 = vmatprep.subr.mxu0 0.0
    %3235 = vmatpush1.msra.mxu0 0.0
    %3236 = vmatprep.subr.mxu0 0.0
    %3237 = vmatpush1.msra.mxu0 0.0
    %3238 = vmatprep.subr.mxu0 0.0
    %3239 = vmatpush1.msra.mxu0 0.0
    %3240 = vmatprep.subr.mxu0 0.0
    %3241 = vmatpush1.msra.mxu0 0.0
    %3242 = vmatprep.subr.mxu0 0.0
    %3243 = vmatpush1.msra.mxu0 0.0
    %3244 = vmatprep.subr.mxu0 0.0
    %3245 = vmatpush1.msra.mxu0 0.0
    %3246 = vmatprep.subr.mxu0 0.0
    %3247 = vmatpush1.msra.mxu0 0.0
    %3248 = vmatprep.subr.mxu0 0.0
    %3249 = vmatpush1.msra.mxu0 0.0
    %3250 = vmatprep.subr.mxu0 0.0
    %3251 = vmatpush1.msra.mxu0 0.0
    %3252 = vmatprep.mubr.f32.mxu0 0.0
    %3253 = vmatmul.mubr.f32.gmra.mrb[0].mxu0 %v3186
    %v3254 = vpop.f32.mrb[0].mxu0
    %v3255 = vadd.f32 0.0, %v3254
    %v3256 = vpop.f32.mrb[0].mxu0
    %3257 = vdwg.mxu0
    %v3259 = vrot.slane %v3255, 6
    %v3261 = vadd.f32 %v3067, %v3259
    %v3262 = vxor.u32 %v3261, 2147483648
    %v3263 = vmul.f32 %v3262, 1.442695
    %v3264 = vpow.pop %v3263
    %v3265 = vadd.f32 %v3264, 1.0
    %v3266 = vrcp.pop %v3265
    %v3267 = vmul.f32 1.0, %v3266
    %v3268 = vtanh.pop %v3261
    %v3270 = vrot.slane %v3174, 6
    %v3272 = vmul.f32 %v3267, %v3270
    %3274 = vrot.lane.b32.xlu0 %v3268, 96
    %v3275 = vpop.permute.xlu0 %3274
    %v3277 = vmul.f32 %v3267, %v3275
    %3279 = vrot.lane.b32.xlu0 %v3277, 16
    %v3280 = vpop.permute.xlu0 %3279
    %v3282 = vadd.f32 %v3272, %v3280
    %v3283 = vtanh.pop %v3282
    %3285 = vrot.lane.b32.xlu0 %v3283, 32
    %v3286 = vpop.permute.xlu0 %3285
    %v3288 = vmul.f32 %v3267, %v3286
    %3290 = vrot.lane.b32.xlu0 %v3288, 80
    %v3291 = vpop.permute.xlu0 %3290
    %3293 = vst.msk [vmem:[%s6] sm:$0xc] %vm368, %v3291
    %v3294 = vrot.slane %v3288, 2
    %3295 = vrot.lane.b32.xlu0 %v3294, 80
    %v3296 = vpop.permute.xlu0 %3295
    %v3297 = vsel %vm69, %v3296, 0
    %3299 = vmatprep.subr.mxu0 0.0
    %3300 = vmatpush1.msra.mxu0 %v3076
    %3301 = vmatprep.subr.mxu0 0.0
    %3302 = vmatpush1.msra.mxu0 %v3077
    %3303 = vmatprep.subr.mxu0 0.0
    %3304 = vmatpush1.msra.mxu0 0.0
    %3305 = vmatprep.subr.mxu0 0.0
    %3306 = vmatpush1.msra.mxu0 0.0
    %3307 = vmatprep.subr.mxu0 0.0
    %3308 = vmatpush1.msra.mxu0 0.0
    %3309 = vmatprep.subr.mxu0 0.0
    %3310 = vmatpush1.msra.mxu0 0.0
    %3311 = vmatprep.subr.mxu0 0.0
    %3312 = vmatpush1.msra.mxu0 0.0
    %3313 = vmatprep.subr.mxu0 0.0
    %3314 = vmatpush1.msra.mxu0 0.0
    %3315 = vmatprep.subr.mxu0 0.0
    %3316 = vmatpush1.msra.mxu0 0.0
    %3317 = vmatprep.subr.mxu0 0.0
    %3318 = vmatpush1.msra.mxu0 0.0
    %3319 = vmatprep.subr.mxu0 0.0
    %3320 = vmatpush1.msra.mxu0 0.0
    %3321 = vmatprep.subr.mxu0 0.0
    %3322 = vmatpush1.msra.mxu0 0.0
    %3323 = vmatprep.subr.mxu0 0.0
    %3324 = vmatpush1.msra.mxu0 0.0
    %3325 = vmatprep.subr.mxu0 0.0
    %3326 = vmatpush1.msra.mxu0 0.0
    %3327 = vmatprep.subr.mxu0 0.0
    %3328 = vmatpush1.msra.mxu0 0.0
    %3329 = vmatprep.subr.mxu0 0.0
    %3330 = vmatpush1.msra.mxu0 0.0
    %3331 = vmatprep.subr.mxu0 0.0
    %3332 = vmatpush1.msra.mxu0 0.0
    %3333 = vmatprep.subr.mxu0 0.0
    %3334 = vmatpush1.msra.mxu0 0.0
    %3335 = vmatprep.subr.mxu0 0.0
    %3336 = vmatpush1.msra.mxu0 0.0
    %3337 = vmatprep.subr.mxu0 0.0
    %3338 = vmatpush1.msra.mxu0 0.0
    %3339 = vmatprep.subr.mxu0 0.0
    %3340 = vmatpush1.msra.mxu0 0.0
    %3341 = vmatprep.subr.mxu0 0.0
    %3342 = vmatpush1.msra.mxu0 0.0
    %3343 = vmatprep.subr.mxu0 0.0
    %3344 = vmatpush1.msra.mxu0 0.0
    %3345 = vmatprep.subr.mxu0 0.0
    %3346 = vmatpush1.msra.mxu0 0.0
    %3347 = vmatprep.subr.mxu0 0.0
    %3348 = vmatpush1.msra.mxu0 0.0
    %3349 = vmatprep.subr.mxu0 0.0
    %3350 = vmatpush1.msra.mxu0 0.0
    %3351 = vmatprep.subr.mxu0 0.0
    %3352 = vmatpush1.msra.mxu0 0.0
    %3353 = vmatprep.subr.mxu0 0.0
    %3354 = vmatpush1.msra.mxu0 0.0
    %3355 = vmatprep.subr.mxu0 0.0
    %3356 = vmatpush1.msra.mxu0 0.0
    %3357 = vmatprep.subr.mxu0 0.0
    %3358 = vmatpush1.msra.mxu0 0.0
    %3359 = vmatprep.subr.mxu0 0.0
    %3360 = vmatpush1.msra.mxu0 0.0
    %3361 = vmatprep.subr.mxu0 0.0
    %3362 = vmatpush1.msra.mxu0 0.0
    %3363 = vmatprep.mubr.f32.mxu0 0.0
    %3364 = vmatmul.mubr.f32.gmra.mrb[0].mxu0 %v3297
    %v3365 = vpop.f32.mrb[0].mxu0
    %v3366 = vadd.f32 0.0, %v3365
    %v3367 = vpop.f32.mrb[0].mxu0
    %3368 = vdwg.mxu0
    %v3370 = vrot.slane %v3366, 4
    %v3372 = vadd.f32 %v3067, %v3370
    %v3373 = vxor.u32 %v3372, 2147483648
    %v3374 = vmul.f32 %v3373, 1.442695
    %v3375 = vpow.pop %v3374
    %v3376 = vadd.f32 %v3375, 1.0
    %v3377 = vrcp.pop %v3376
    %v3378 = vmul.f32 1.0, %v3377
    %v3379 = vtanh.pop %v3372
    %v3381 = vrot.slane %v3282, 6
    %v3383 = vmul.f32 %v3378, %v3381
    %3385 = vrot.lane.b32.xlu0 %v3379, 96
    %v3386 = vpop.permute.xlu0 %3385
    %v3388 = vmul.f32 %v3378, %v3386
    %3390 = vrot.lane.b32.xlu0 %v3388, 16
    %v3391 = vpop.permute.xlu0 %3390
    %v3393 = vadd.f32 %v3383, %v3391
    %v3394 = vtanh.pop %v3393
    %3396 = vrot.lane.b32.xlu0 %v3394, 32
    %v3397 = vpop.permute.xlu0 %3396
    %v3399 = vmul.f32 %v3378, %v3397
    %3401 = vrot.lane.b32.xlu0 %v3399, 80
    %v3402 = vpop.permute.xlu0 %3401
    %3404 = vst.msk [vmem:[%s6] sm:$0x30] %vm480, %v3402
    %v3405 = vrot.slane %v3399, 4
    %3406 = vrot.lane.b32.xlu0 %v3405, 80
    %v3407 = vpop.permute.xlu0 %3406
    %v3408 = vsel %vm69, %v3407, 0
    %3410 = vmatprep.subr.mxu0 0.0
    %3411 = vmatpush1.msra.mxu0 %v3076
    %3412 = vmatprep.subr.mxu0 0.0
    %3413 = vmatpush1.msra.mxu0 %v3077
    %3414 = vmatprep.subr.mxu0 0.0
    %3415 = vmatpush1.msra.mxu0 0.0
    %3416 = vmatprep.subr.mxu0 0.0
    %3417 = vmatpush1.msra.mxu0 0.0
    %3418 = vmatprep.subr.mxu0 0.0
    %3419 = vmatpush1.msra.mxu0 0.0
    %3420 = vmatprep.subr.mxu0 0.0
    %3421 = vmatpush1.msra.mxu0 0.0
    %3422 = vmatprep.subr.mxu0 0.0
    %3423 = vmatpush1.msra.mxu0 0.0
    %3424 = vmatprep.subr.mxu0 0.0
    %3425 = vmatpush1.msra.mxu0 0.0
    %3426 = vmatprep.subr.mxu0 0.0
    %3427 = vmatpush1.msra.mxu0 0.0
    %3428 = vmatprep.subr.mxu0 0.0
    %3429 = vmatpush1.msra.mxu0 0.0
    %3430 = vmatprep.subr.mxu0 0.0
    %3431 = vmatpush1.msra.mxu0 0.0
    %3432 = vmatprep.subr.mxu0 0.0
    %3433 = vmatpush1.msra.mxu0 0.0
    %3434 = vmatprep.subr.mxu0 0.0
    %3435 = vmatpush1.msra.mxu0 0.0
    %3436 = vmatprep.subr.mxu0 0.0
    %3437 = vmatpush1.msra.mxu0 0.0
    %3438 = vmatprep.subr.mxu0 0.0
    %3439 = vmatpush1.msra.mxu0 0.0
    %3440 = vmatprep.subr.mxu0 0.0
    %3441 = vmatpush1.msra.mxu0 0.0
    %3442 = vmatprep.subr.mxu0 0.0
    %3443 = vmatpush1.msra.mxu0 0.0
    %3444 = vmatprep.subr.mxu0 0.0
    %3445 = vmatpush1.msra.mxu0 0.0
    %3446 = vmatprep.subr.mxu0 0.0
    %3447 = vmatpush1.msra.mxu0 0.0
    %3448 = vmatprep.subr.mxu0 0.0
    %3449 = vmatpush1.msra.mxu0 0.0
    %3450 = vmatprep.subr.mxu0 0.0
    %3451 = vmatpush1.msra.mxu0 0.0
    %3452 = vmatprep.subr.mxu0 0.0
    %3453 = vmatpush1.msra.mxu0 0.0
    %3454 = vmatprep.subr.mxu0 0.0
    %3455 = vmatpush1.msra.mxu0 0.0
    %3456 = vmatprep.subr.mxu0 0.0
    %3457 = vmatpush1.msra.mxu0 0.0
    %3458 = vmatprep.subr.mxu0 0.0
    %3459 = vmatpush1.msra.mxu0 0.0
    %3460 = vmatprep.subr.mxu0 0.0
    %3461 = vmatpush1.msra.mxu0 0.0
    %3462 = vmatprep.subr.mxu0 0.0
    %3463 = vmatpush1.msra.mxu0 0.0
    %3464 = vmatprep.subr.mxu0 0.0
    %3465 = vmatpush1.msra.mxu0 0.0
    %3466 = vmatprep.subr.mxu0 0.0
    %3467 = vmatpush1.msra.mxu0 0.0
    %3468 = vmatprep.subr.mxu0 0.0
    %3469 = vmatpush1.msra.mxu0 0.0
    %3470 = vmatprep.subr.mxu0 0.0
    %3471 = vmatpush1.msra.mxu0 0.0
    %3472 = vmatprep.subr.mxu0 0.0
    %3473 = vmatpush1.msra.mxu0 0.0
    %3474 = vmatprep.mubr.f32.mxu0 0.0
    %3475 = vmatmul.mubr.f32.gmra.mrb[0].mxu0 %v3408
    %v3476 = vpop.f32.mrb[0].mxu0
    %v3477 = vadd.f32 0.0, %v3476
    %v3478 = vpop.f32.mrb[0].mxu0
    %3479 = vdwg.mxu0
    %v3481 = vrot.slane %v3477, 2
    %v3483 = vadd.f32 %v3067, %v3481
    %v3484 = vxor.u32 %v3483, 2147483648
    %v3485 = vmul.f32 %v3484, 1.442695
    %v3486 = vpow.pop %v3485
    %v3487 = vadd.f32 %v3486, 1.0
    %v3488 = vrcp.pop %v3487
    %v3489 = vmul.f32 1.0, %v3488
    %v3490 = vtanh.pop %v3483
    %v3492 = vrot.slane %v3393, 6
    %v3494 = vmul.f32 %v3489, %v3492
    %3496 = vrot.lane.b32.xlu0 %v3490, 96
    %v3497 = vpop.permute.xlu0 %3496
    %v3499 = vmul.f32 %v3489, %v3497
    %3501 = vrot.lane.b32.xlu0 %v3499, 16
    %v3502 = vpop.permute.xlu0 %3501
    %v3504 = vadd.f32 %v3494, %v3502
    %v3505 = vtanh.pop %v3504
    %3507 = vrot.lane.b32.xlu0 %v3505, 32
    %v3508 = vpop.permute.xlu0 %3507
    %v3510 = vmul.f32 %v3489, %v3508
    %3512 = vrot.lane.b32.xlu0 %v3510, 80
    %v3513 = vpop.permute.xlu0 %3512
    %3515 = vst.msk [vmem:[%s6] sm:$0xc0] %vm592, %v3513
    %v3516 = vrot.slane %v3510, 6
    %3517 = vrot.lane.b32.xlu0 %v3516, 80
    %v3518 = vpop.permute.xlu0 %3517
    %v3519 = vsel %vm69, %v3518, 0
    %3521 = vmatprep.subr.mxu0 0.0
    %3522 = vmatpush1.msra.mxu0 %v3076
    %3523 = vmatprep.subr.mxu0 0.0
    %3524 = vmatpush1.msra.mxu0 %v3077
    %3525 = vmatprep.subr.mxu0 0.0
    %3526 = vmatpush1.msra.mxu0 0.0
    %3527 = vmatprep.subr.mxu0 0.0
    %3528 = vmatpush1.msra.mxu0 0.0
    %3529 = vmatprep.subr.mxu0 0.0
    %3530 = vmatpush1.msra.mxu0 0.0
    %3531 = vmatprep.subr.mxu0 0.0
    %3532 = vmatpush1.msra.mxu0 0.0
    %3533 = vmatprep.subr.mxu0 0.0
    %3534 = vmatpush1.msra.mxu0 0.0
    %3535 = vmatprep.subr.mxu0 0.0
    %3536 = vmatpush1.msra.mxu0 0.0
    %3537 = vmatprep.subr.mxu0 0.0
    %3538 = vmatpush1.msra.mxu0 0.0
    %3539 = vmatprep.subr.mxu0 0.0
    %3540 = vmatpush1.msra.mxu0 0.0
    %3541 = vmatprep.subr.mxu0 0.0
    %3542 = vmatpush1.msra.mxu0 0.0
    %3543 = vmatprep.subr.mxu0 0.0
    %3544 = vmatpush1.msra.mxu0 0.0
    %3545 = vmatprep.subr.mxu0 0.0
    %3546 = vmatpush1.msra.mxu0 0.0
    %3547 = vmatprep.subr.mxu0 0.0
    %3548 = vmatpush1.msra.mxu0 0.0
    %3549 = vmatprep.subr.mxu0 0.0
    %3550 = vmatpush1.msra.mxu0 0.0
    %3551 = vmatprep.subr.mxu0 0.0
    %3552 = vmatpush1.msra.mxu0 0.0
    %3553 = vmatprep.subr.mxu0 0.0
    %3554 = vmatpush1.msra.mxu0 0.0
    %3555 = vmatprep.subr.mxu0 0.0
    %3556 = vmatpush1.msra.mxu0 0.0
    %3557 = vmatprep.subr.mxu0 0.0
    %3558 = vmatpush1.msra.mxu0 0.0
    %3559 = vmatprep.subr.mxu0 0.0
    %3560 = vmatpush1.msra.mxu0 0.0
    %3561 = vmatprep.subr.mxu0 0.0
    %3562 = vmatpush1.msra.mxu0 0.0
    %3563 = vmatprep.subr.mxu0 0.0
    %3564 = vmatpush1.msra.mxu0 0.0
    %3565 = vmatprep.subr.mxu0 0.0
    %3566 = vmatpush1.msra.mxu0 0.0
    %3567 = vmatprep.subr.mxu0 0.0
    %3568 = vmatpush1.msra.mxu0 0.0
    %3569 = vmatprep.subr.mxu0 0.0
    %3570 = vmatpush1.msra.mxu0 0.0
    %3571 = vmatprep.subr.mxu0 0.0
    %3572 = vmatpush1.msra.mxu0 0.0
    %3573 = vmatprep.subr.mxu0 0.0
    %3574 = vmatpush1.msra.mxu0 0.0
    %3575 = vmatprep.subr.mxu0 0.0
    %3576 = vmatpush1.msra.mxu0 0.0
    %3577 = vmatprep.subr.mxu0 0.0
    %3578 = vmatpush1.msra.mxu0 0.0
    %3579 = vmatprep.subr.mxu0 0.0
    %3580 = vmatpush1.msra.mxu0 0.0
    %3581 = vmatprep.subr.mxu0 0.0
    %3582 = vmatpush1.msra.mxu0 0.0
    %3583 = vmatprep.subr.mxu0 0.0
    %3584 = vmatpush1.msra.mxu0 0.0
    %3585 = vmatprep.mubr.f32.mxu0 0.0
    %3586 = vmatmul.mubr.f32.gmra.mrb[0].mxu0 %v3519
    %v3587 = vpop.f32.mrb[0].mxu0
    %v3588 = vadd.f32 0.0, %v3587
    %v3589 = vpop.f32.mrb[0].mxu0
    %3590 = vdwg.mxu0
    %v3591 = vadd.f32 %v3072, %v3588
    %v3592 = vxor.u32 %v3591, 2147483648
    %v3593 = vmul.f32 %v3592, 1.442695
    %v3594 = vpow.pop %v3593
    %v3595 = vadd.f32 %v3594, 1.0
    %v3596 = vrcp.pop %v3595
    %v3597 = vmul.f32 1.0, %v3596
    %v3598 = vtanh.pop %v3591
    %v3600 = vrot.slane %v3504, 6
    %v3602 = vmul.f32 %v3597, %v3600
    %3604 = vrot.lane.b32.xlu0 %v3598, 96
    %v3605 = vpop.permute.xlu0 %3604
    %v3607 = vmul.f32 %v3597, %v3605
    %3609 = vrot.lane.b32.xlu0 %v3607, 16
    %v3610 = vpop.permute.xlu0 %3609
    %v3612 = vadd.f32 %v3602, %v3610
    %v3613 = vtanh.pop %v3612
    %3615 = vrot.lane.b32.xlu0 %v3613, 32
    %v3616 = vpop.permute.xlu0 %3615
    %v3618 = vmul.f32 %v3597, %v3616
    %3620 = vrot.lane.b32.xlu0 %v3618, 80
    %v3621 = vpop.permute.xlu0 %3620
    %3623 = vst.msk [vmem:[%s6 + $0x8] sm:$0x3] %vm259, %v3621
    %v3624 = vsel %vm69, %v3621, 0
    %3626 = vmatprep.subr.mxu0 0.0
    %3627 = vmatpush1.msra.mxu0 %v3076
    %3628 = vmatprep.subr.mxu0 0.0
    %3629 = vmatpush1.msra.mxu0 %v3077
    %3630 = vmatprep.subr.mxu0 0.0
    %3631 = vmatpush1.msra.mxu0 0.0
    %3632 = vmatprep.subr.mxu0 0.0
    %3633 = vmatpush1.msra.mxu0 0.0
    %3634 = vmatprep.subr.mxu0 0.0
    %3635 = vmatpush1.msra.mxu0 0.0
    %3636 = vmatprep.subr.mxu0 0.0
    %3637 = vmatpush1.msra.mxu0 0.0
    %3638 = vmatprep.subr.mxu0 0.0
    %3639 = vmatpush1.msra.mxu0 0.0
    %3640 = vmatprep.subr.mxu0 0.0
    %3641 = vmatpush1.msra.mxu0 0.0
    %3642 = vmatprep.subr.mxu0 0.0
    %3643 = vmatpush1.msra.mxu0 0.0
    %3644 = vmatprep.subr.mxu0 0.0
    %3645 = vmatpush1.msra.mxu0 0.0
    %3646 = vmatprep.subr.mxu0 0.0
    %3647 = vmatpush1.msra.mxu0 0.0
    %3648 = vmatprep.subr.mxu0 0.0
    %3649 = vmatpush1.msra.mxu0 0.0
    %3650 = vmatprep.subr.mxu0 0.0
    %3651 = vmatpush1.msra.mxu0 0.0
    %3652 = vmatprep.subr.mxu0 0.0
    %3653 = vmatpush1.msra.mxu0 0.0
    %3654 = vmatprep.subr.mxu0 0.0
    %3655 = vmatpush1.msra.mxu0 0.0
    %3656 = vmatprep.subr.mxu0 0.0
    %3657 = vmatpush1.msra.mxu0 0.0
    %3658 = vmatprep.subr.mxu0 0.0
    %3659 = vmatpush1.msra.mxu0 0.0
    %3660 = vmatprep.subr.mxu0 0.0
    %3661 = vmatpush1.msra.mxu0 0.0
    %3662 = vmatprep.subr.mxu0 0.0
    %3663 = vmatpush1.msra.mxu0 0.0
    %3664 = vmatprep.subr.mxu0 0.0
    %3665 = vmatpush1.msra.mxu0 0.0
    %3666 = vmatprep.subr.mxu0 0.0
    %3667 = vmatpush1.msra.mxu0 0.0
    %3668 = vmatprep.subr.mxu0 0.0
    %3669 = vmatpush1.msra.mxu0 0.0
    %3670 = vmatprep.subr.mxu0 0.0
    %3671 = vmatpush1.msra.mxu0 0.0
    %3672 = vmatprep.subr.mxu0 0.0
    %3673 = vmatpush1.msra.mxu0 0.0
    %3674 = vmatprep.subr.mxu0 0.0
    %3675 = vmatpush1.msra.mxu0 0.0
    %3676 = vmatprep.subr.mxu0 0.0
    %3677 = vmatpush1.msra.mxu0 0.0
    %3678 = vmatprep.subr.mxu0 0.0
    %3679 = vmatpush1.msra.mxu0 0.0
    %3680 = vmatprep.subr.mxu0 0.0
    %3681 = vmatpush1.msra.mxu0 0.0
    %3682 = vmatprep.subr.mxu0 0.0
    %3683 = vmatpush1.msra.mxu0 0.0
    %3684 = vmatprep.subr.mxu0 0.0
    %3685 = vmatpush1.msra.mxu0 0.0
    %3686 = vmatprep.subr.mxu0 0.0
    %3687 = vmatpush1.msra.mxu0 0.0
    %3688 = vmatprep.subr.mxu0 0.0
    %3689 = vmatpush1.msra.mxu0 0.0
    %3690 = vmatprep.mubr.f32.mxu0 0.0
    %3691 = vmatmul.mubr.f32.gmra.mrb[0].mxu0 %v3624
    %v3692 = vpop.f32.mrb[0].mxu0
    %v3693 = vadd.f32 0.0, %v3692
    %v3694 = vpop.f32.mrb[0].mxu0
    %3695 = vdwg.mxu0
    %v3697 = vrot.slane %v3693, 6
    %v3699 = vadd.f32 %v3072, %v3697
    %v3700 = vxor.u32 %v3699, 2147483648
    %v3701 = vmul.f32 %v3700, 1.442695
    %v3702 = vpow.pop %v3701
    %v3703 = vadd.f32 %v3702, 1.0
    %v3704 = vrcp.pop %v3703
    %v3705 = vmul.f32 1.0, %v3704
    %v3706 = vtanh.pop %v3699
    %v3708 = vrot.slane %v3612, 6
    %v3710 = vmul.f32 %v3705, %v3708
    %3712 = vrot.lane.b32.xlu0 %v3706, 96
    %v3713 = vpop.permute.xlu0 %3712
    %v3715 = vmul.f32 %v3705, %v3713
    %3717 = vrot.lane.b32.xlu0 %v3715, 16
    %v3718 = vpop.permute.xlu0 %3717
    %v3720 = vadd.f32 %v3710, %v3718
    %v3721 = vtanh.pop %v3720
    %3723 = vrot.lane.b32.xlu0 %v3721, 32
    %v3724 = vpop.permute.xlu0 %3723
    %v3726 = vmul.f32 %v3705, %v3724
    %3728 = vrot.lane.b32.xlu0 %v3726, 80
    %v3729 = vpop.permute.xlu0 %3728
    %3731 = vst.msk [vmem:[%s6 + $0x8] sm:$0xc] %vm368, %v3729
    %v3732 = vrot.slane %v3726, 2
    %3733 = vrot.lane.b32.xlu0 %v3732, 80
    %v3734 = vpop.permute.xlu0 %3733
    %v3735 = vsel %vm69, %v3734, 0
    %3737 = vmatprep.subr.mxu0 0.0
    %3738 = vmatpush1.msra.mxu0 %v3076
    %3739 = vmatprep.subr.mxu0 0.0
    %3740 = vmatpush1.msra.mxu0 %v3077
    %3741 = vmatprep.subr.mxu0 0.0
    %3742 = vmatpush1.msra.mxu0 0.0
    %3743 = vmatprep.subr.mxu0 0.0
    %3744 = vmatpush1.msra.mxu0 0.0
    %3745 = vmatprep.subr.mxu0 0.0
    %3746 = vmatpush1.msra.mxu0 0.0
    %3747 = vmatprep.subr.mxu0 0.0
    %3748 = vmatpush1.msra.mxu0 0.0
    %3749 = vmatprep.subr.mxu0 0.0
    %3750 = vmatpush1.msra.mxu0 0.0
    %3751 = vmatprep.subr.mxu0 0.0
    %3752 = vmatpush1.msra.mxu0 0.0
    %3753 = vmatprep.subr.mxu0 0.0
    %3754 = vmatpush1.msra.mxu0 0.0
    %3755 = vmatprep.subr.mxu0 0.0
    %3756 = vmatpush1.msra.mxu0 0.0
    %3757 = vmatprep.subr.mxu0 0.0
    %3758 = vmatpush1.msra.mxu0 0.0
    %3759 = vmatprep.subr.mxu0 0.0
    %3760 = vmatpush1.msra.mxu0 0.0
    %3761 = vmatprep.subr.mxu0 0.0
    %3762 = vmatpush1.msra.mxu0 0.0
    %3763 = vmatprep.subr.mxu0 0.0
    %3764 = vmatpush1.msra.mxu0 0.0
    %3765 = vmatprep.subr.mxu0 0.0
    %3766 = vmatpush1.msra.mxu0 0.0
    %3767 = vmatprep.subr.mxu0 0.0
    %3768 = vmatpush1.msra.mxu0 0.0
    %3769 = vmatprep.subr.mxu0 0.0
    %3770 = vmatpush1.msra.mxu0 0.0
    %3771 = vmatprep.subr.mxu0 0.0
    %3772 = vmatpush1.msra.mxu0 0.0
    %3773 = vmatprep.subr.mxu0 0.0
    %3774 = vmatpush1.msra.mxu0 0.0
    %3775 = vmatprep.subr.mxu0 0.0
    %3776 = vmatpush1.msra.mxu0 0.0
    %3777 = vmatprep.subr.mxu0 0.0
    %3778 = vmatpush1.msra.mxu0 0.0
    %3779 = vmatprep.subr.mxu0 0.0
    %3780 = vmatpush1.msra.mxu0 0.0
    %3781 = vmatprep.subr.mxu0 0.0
    %3782 = vmatpush1.msra.mxu0 0.0
    %3783 = vmatprep.subr.mxu0 0.0
    %3784 = vmatpush1.msra.mxu0 0.0
    %3785 = vmatprep.subr.mxu0 0.0
    %3786 = vmatpush1.msra.mxu0 0.0
    %3787 = vmatprep.subr.mxu0 0.0
    %3788 = vmatpush1.msra.mxu0 0.0
    %3789 = vmatprep.subr.mxu0 0.0
    %3790 = vmatpush1.msra.mxu0 0.0
    %3791 = vmatprep.subr.mxu0 0.0
    %3792 = vmatpush1.msra.mxu0 0.0
    %3793 = vmatprep.subr.mxu0 0.0
    %3794 = vmatpush1.msra.mxu0 0.0
    %3795 = vmatprep.subr.mxu0 0.0
    %3796 = vmatpush1.msra.mxu0 0.0
    %3797 = vmatprep.subr.mxu0 0.0
    %3798 = vmatpush1.msra.mxu0 0.0
    %3799 = vmatprep.subr.mxu0 0.0
    %3800 = vmatpush1.msra.mxu0 0.0
    %3801 = vmatprep.mubr.f32.mxu0 0.0
    %3802 = vmatmul.mubr.f32.gmra.mrb[0].mxu0 %v3735
    %v3803 = vpop.f32.mrb[0].mxu0
    %v3804 = vadd.f32 0.0, %v3803
    %v3805 = vpop.f32.mrb[0].mxu0
    %3806 = vdwg.mxu0
    %v3808 = vrot.slane %v3804, 4
    %v3810 = vadd.f32 %v3072, %v3808
    %v3811 = vxor.u32 %v3810, 2147483648
    %v3812 = vmul.f32 %v3811, 1.442695
    %v3813 = vpow.pop %v3812
    %v3814 = vadd.f32 %v3813, 1.0
    %v3815 = vrcp.pop %v3814
    %v3816 = vmul.f32 1.0, %v3815
    %v3817 = vtanh.pop %v3810
    %v3819 = vrot.slane %v3720, 6
    %v3821 = vmul.f32 %v3816, %v3819
    %3823 = vrot.lane.b32.xlu0 %v3817, 96
    %v3824 = vpop.permute.xlu0 %3823
    %v3826 = vmul.f32 %v3816, %v3824
    %3828 = vrot.lane.b32.xlu0 %v3826, 16
    %v3829 = vpop.permute.xlu0 %3828
    %v3831 = vadd.f32 %v3821, %v3829
    %v3832 = vtanh.pop %v3831
    %3834 = vrot.lane.b32.xlu0 %v3832, 32
    %v3835 = vpop.permute.xlu0 %3834
    %v3837 = vmul.f32 %v3816, %v3835
    %3839 = vrot.lane.b32.xlu0 %v3837, 80
    %v3840 = vpop.permute.xlu0 %3839
    %3842 = vst.msk [vmem:[%s6 + $0x8] sm:$0x30] %vm480, %v3840
    %v3843 = vrot.slane %v3837, 4
    %3844 = vrot.lane.b32.xlu0 %v3843, 80
    %v3845 = vpop.permute.xlu0 %3844
    %v3846 = vsel %vm69, %v3845, 0
    %3848 = vmatprep.subr.mxu0 0.0
    %3849 = vmatpush1.msra.mxu0 %v3076
    %3850 = vmatprep.subr.mxu0 0.0
    %3851 = vmatpush1.msra.mxu0 %v3077
    %3852 = vmatprep.subr.mxu0 0.0
    %3853 = vmatpush1.msra.mxu0 0.0
    %3854 = vmatprep.subr.mxu0 0.0
    %3855 = vmatpush1.msra.mxu0 0.0
    %3856 = vmatprep.subr.mxu0 0.0
    %3857 = vmatpush1.msra.mxu0 0.0
    %3858 = vmatprep.subr.mxu0 0.0
    %3859 = vmatpush1.msra.mxu0 0.0
    %3860 = vmatprep.subr.mxu0 0.0
    %3861 = vmatpush1.msra.mxu0 0.0
    %3862 = vmatprep.subr.mxu0 0.0
    %3863 = vmatpush1.msra.mxu0 0.0
    %3864 = vmatprep.subr.mxu0 0.0
    %3865 = vmatpush1.msra.mxu0 0.0
    %3866 = vmatprep.subr.mxu0 0.0
    %3867 = vmatpush1.msra.mxu0 0.0
    %3868 = vmatprep.subr.mxu0 0.0
    %3869 = vmatpush1.msra.mxu0 0.0
    %3870 = vmatprep.subr.mxu0 0.0
    %3871 = vmatpush1.msra.mxu0 0.0
    %3872 = vmatprep.subr.mxu0 0.0
    %3873 = vmatpush1.msra.mxu0 0.0
    %3874 = vmatprep.subr.mxu0 0.0
    %3875 = vmatpush1.msra.mxu0 0.0
    %3876 = vmatprep.subr.mxu0 0.0
    %3877 = vmatpush1.msra.mxu0 0.0
    %3878 = vmatprep.subr.mxu0 0.0
    %3879 = vmatpush1.msra.mxu0 0.0
    %3880 = vmatprep.subr.mxu0 0.0
    %3881 = vmatpush1.msra.mxu0 0.0
    %3882 = vmatprep.subr.mxu0 0.0
    %3883 = vmatpush1.msra.mxu0 0.0
    %3884 = vmatprep.subr.mxu0 0.0
    %3885 = vmatpush1.msra.mxu0 0.0
    %3886 = vmatprep.subr.mxu0 0.0
    %3887 = vmatpush1.msra.mxu0 0.0
    %3888 = vmatprep.subr.mxu0 0.0
    %3889 = vmatpush1.msra.mxu0 0.0
    %3890 = vmatprep.subr.mxu0 0.0
    %3891 = vmatpush1.msra.mxu0 0.0
    %3892 = vmatprep.subr.mxu0 0.0
    %3893 = vmatpush1.msra.mxu0 0.0
    %3894 = vmatprep.subr.mxu0 0.0
    %3895 = vmatpush1.msra.mxu0 0.0
    %3896 = vmatprep.subr.mxu0 0.0
    %3897 = vmatpush1.msra.mxu0 0.0
    %3898 = vmatprep.subr.mxu0 0.0
    %3899 = vmatpush1.msra.mxu0 0.0
    %3900 = vmatprep.subr.mxu0 0.0
    %3901 = vmatpush1.msra.mxu0 0.0
    %3902 = vmatprep.subr.mxu0 0.0
    %3903 = vmatpush1.msra.mxu0 0.0
    %3904 = vmatprep.subr.mxu0 0.0
    %3905 = vmatpush1.msra.mxu0 0.0
    %3906 = vmatprep.subr.mxu0 0.0
    %3907 = vmatpush1.msra.mxu0 0.0
    %3908 = vmatprep.subr.mxu0 0.0
    %3909 = vmatpush1.msra.mxu0 0.0
    %3910 = vmatprep.subr.mxu0 0.0
    %3911 = vmatpush1.msra.mxu0 0.0
    %3912 = vmatprep.mubr.f32.mxu0 0.0
    %3913 = vmatmul.mubr.f32.gmra.mrb[0].mxu0 %v3846
    %v3914 = vpop.f32.mrb[0].mxu0
    %v3915 = vadd.f32 0.0, %v3914
    %v3916 = vpop.f32.mrb[0].mxu0
    %3917 = vdwg.mxu0
    %v3919 = vrot.slane %v3915, 2
    %v3921 = vadd.f32 %v3072, %v3919
    %v3922 = vxor.u32 %v3921, 2147483648
    %v3923 = vmul.f32 %v3922, 1.442695
    %v3924 = vpow.pop %v3923
    %v3925 = vadd.f32 %v3924, 1.0
    %v3926 = vrcp.pop %v3925
    %v3927 = vmul.f32 1.0, %v3926
    %v3928 = vtanh.pop %v3921
    %v3930 = vrot.slane %v3831, 6
    %v3932 = vmul.f32 %v3927, %v3930
    %3934 = vrot.lane.b32.xlu0 %v3928, 96
    %v3935 = vpop.permute.xlu0 %3934
    %v3937 = vmul.f32 %v3927, %v3935
    %3939 = vrot.lane.b32.xlu0 %v3937, 16
    %v3940 = vpop.permute.xlu0 %3939
    %v3942 = vadd.f32 %v3932, %v3940
    %v3943 = vtanh.pop %v3942
    %3945 = vrot.lane.b32.xlu0 %v3943, 32
    %v3946 = vpop.permute.xlu0 %3945
    %v3948 = vmul.f32 %v3927, %v3946
    %3950 = vrot.lane.b32.xlu0 %v3948, 80
    %v3951 = vpop.permute.xlu0 %3950
    %3953 = vst.msk [vmem:[%s6 + $0x8] sm:$0xc0] %vm592, %v3951
    %3954 = vst.msk [vmem:[#allocation8 - $0x6] sm:$0xc0] %vm592, %v1029
    %3955 = vrot.lane.b32.xlu0 %v1020, 112
    %v3956 = vpop.permute.xlu0 %3955
    %3958 = vst.msk [vmem:[#allocation9 - $0x6] sm:$0xc0] %vm592, %v3956
    %s3959 = scalar_lea.vmem [#allocation8], 2
    %3960 = vst.msk [vmem:[%s3959 - $0x6] sm:$0xc0] %vm592, %v2005
    %3961 = vrot.lane.b32.xlu0 %v1996, 112
    %v3962 = vpop.permute.xlu0 %3961
    %s3964 = scalar_lea.vmem [#allocation9], 2
    %3965 = vst.msk [vmem:[%s3964 - $0x6] sm:$0xc0] %vm592, %v3962
    // Predicated region
    $region34: #{rvc_forward.1} parent=1 // pred_check
      _
    $region35: #{rvc_forward.1} parent=1 // pred_check_branch
      %3967 = sbr.rel (0) target = $region37
    $region36: #{rvc_forward.1} parent=1 // pred_region
      _
    $region37: #{rvc_forward.1} parent=1 // pred_fallthru
      _
    // Predicated region
    $region38: #{rvc_forward.1} parent=1 // pred_check
      _
    $region39: #{rvc_forward.1} parent=1 // pred_check_branch
      %3969 = sbr.rel (0) target = $region41
    $region40: #{rvc_forward.1} parent=1 // pred_region
      %s3971 = ssub.s32 64, 64
      %3972 = vsyncadd [#allocation5], %s3971
      %s3973 = sshll.u32 [#allocation8], 4
      %s3974 = int_to_ptr.vmem [resolvable:$true] %s3973
      %3979 = dma.vmem_to_hbm [thread:$0]  %s3974, 64, %s7, [#allocation5], 32, 32, 2
    $region41: #{rvc_forward.1} parent=1 // pred_fallthru
      _
    // Predicated region
    $region42: #{rvc_forward.1} parent=1 // pred_check
      _
    $region43: #{rvc_forward.1} parent=1 // pred_check_branch
      %3981 = sbr.rel (0) target = $region45
    $region44: #{rvc_forward.1} parent=1 // pred_region
      %s3983 = ssub.s32 64, 64
      %3984 = vsyncadd [#allocation10], %s3983
      %s3985 = sshll.u32 [#allocation9], 4
      %s3986 = int_to_ptr.vmem [resolvable:$true] %s3985
      %3991 = dma.vmem_to_hbm [thread:$0]  %s3986, 64, %s8, [#allocation10], 32, 32, 2
    $region45: #{rvc_forward.1} parent=1 // pred_fallthru
      _
    // Predicated region
    $region46: #{rvc_forward.1} parent=1 // pred_check
      _
    $region47: #{rvc_forward.1} parent=1 // pred_check_branch
      %3993 = sbr.rel (0) target = $region49
    $region48: #{rvc_forward.1} parent=1 // pred_region
      _
    $region49: #{rvc_forward.1} parent=1 // pred_fallthru
      _
    // Predicated region
    $region50: #{rvc_forward.1} parent=1 // pred_check
      _
    $region51: #{rvc_forward.1} parent=1 // pred_check_branch
      %3995 = sbr.rel (0) target = $region53
    $region52: #{rvc_forward.1} parent=1 // pred_region
      %3996 = dma.done [#allocation5], 64
    $region53: #{rvc_forward.1} parent=1 // pred_fallthru
      _
    // Predicated region
    $region54: #{rvc_forward.1} parent=1 // pred_check
      _
    $region55: #{rvc_forward.1} parent=1 // pred_check_branch
      %3998 = sbr.rel (0) target = $region57
    $region56: #{rvc_forward.1} parent=1 // pred_region
      %3999 = dma.done [#allocation10], 64
    $region57: #{rvc_forward.1} parent=1 // pred_fallthru
      _
    %4000 = vsyncpa [#allocation4], 1
    %4001 = vsyncpa [#allocation7], 1
    %4002 = vsyncpa [#allocation5], 1
    %4003 = vsyncpa [#allocation10], 1

</llo_original>
